<compile_context>
chip_gen: v6e
topology: v6e:2x2x1
jax: 0.10.0
libtpu: 0.0.40
codegen_flags: <defaults>
</compile_context>

<pallas_src>
import math

import jax
import jax.numpy as jnp
from jax.experimental import pallas as pl
from jax.experimental.pallas import tpu as pltpu

# ---- module hyper-parameters (match the torch module) ----
RANDOM_SIZE = 32
N_POINTS = 16
N_FEATURES = 4
BATCH_SIZE = 2
H1, H2, H3 = 1000, 600, 1000          # logical sizes hard-coded in the torch module
H4 = N_POINTS * N_FEATURES            # 64

# lane-friendly padded sizes (multiples of 128; output padded to 128 lanes too)
H1P, H2P, H3P, H4P = 1024, 640, 1024, 128

# layout of the packed "small params" array: [b1 | b2 | b3 | b4 | s2 | s3]
OFF_B1 = 0
OFF_B2 = OFF_B1 + H1P            # 1024
OFF_B3 = OFF_B2 + H2P            # 1664
OFF_B4 = OFF_B3 + H3P            # 2688
OFF_S2 = OFF_B4 + H4P            # 2816
OFF_S3 = OFF_S2 + H2P            # 3456
SMALL_W = OFF_S3 + H3P           # 4480  (35 * 128, lane aligned)


def _gen_linear_kernel(z_ref, w1_ref, w2_ref, w3_ref, w4_ref, small_ref, out_ref):
    """4-layer MLP; fc2/fc3 weights arrive as int8 + per-column scale."""
    # static, 128-aligned slices of the packed biases/scales (single DMA'd array)
    b1 = small_ref[:, OFF_B1:OFF_B1 + H1P]
    b2 = small_ref[:, OFF_B2:OFF_B2 + H2P]
    b3 = small_ref[:, OFF_B3:OFF_B3 + H3P]
    b4 = small_ref[:, OFF_B4:OFF_B4 + H4P]
    s2 = small_ref[:, OFF_S2:OFF_S2 + H2P]
    s3 = small_ref[:, OFF_S3:OFF_S3 + H3P]

    def dense(x_f32, w_ref):
        return jnp.dot(x_f32.astype(jnp.bfloat16), w_ref[...],
                       preferred_element_type=jnp.float32)

    def dense_q(x_f32, wq_ref, scale):
        # int8 weights were DMA'd from HBM (half the bytes of bf16); upcast to
        # bf16 in VMEM (lossless for int8) and fold the per-column scale into
        # the f32 epilogue after the MXU dot.
        w = wq_ref[...].astype(jnp.bfloat16)
        return jnp.dot(x_f32.astype(jnp.bfloat16), w,
                       preferred_element_type=jnp.float32) * scale

    h = jax.nn.sigmoid(dense(z_ref[...], w1_ref) + b1)
    h = jax.nn.sigmoid(dense_q(h, w2_ref, s2) + b2)
    h = jax.nn.sigmoid(dense_q(h, w3_ref, s3) + b3)
    out_ref[...] = (dense(h, w4_ref) + b4).astype(out_ref.dtype)


def _resident(a):
    """Constant index_map -> fetched once, VMEM-resident across the whole grid.

    Single-buffered (pl.Buffered(1)): the block never changes over grid steps,
    so double-buffering would only waste VMEM/bookkeeping.
    """
    idx = lambda i: (0,) * a.ndim
    try:
        return pl.BlockSpec(a.shape, idx, pipeline_mode=pl.Buffered(1))
    except TypeError:  # older jax without pipeline_mode on BlockSpec
        return pl.BlockSpec(a.shape, idx)


def gen_linear_forward(samples, params):
    """samples: (batch, 1, random_size) -> (batch, n_points, n_features)."""
    B = samples.shape[0]
    z = samples.reshape(B, RANDOM_SIZE).astype(jnp.float32)

    # adaptive batch tile: 8 rows (sublane aligned) at micro batch, up to 256
    # rows for large batches so the ~0.35us per-grid-step overhead amortizes.
    row_tile = min(256, ((B + 7) // 8) * 8)
    n_tiles = pl.cdiv(B, row_tile)
    Bp = n_tiles * row_tile
    if Bp != B:
        z = jnp.pad(z, ((0, Bp - B), (0, 0)))

    w1, w2, w3, w4 = params["w1"], params["w2"], params["w3"], params["w4"]
    small = params["small"]

    flops = 2 * Bp * (RANDOM_SIZE * H1P + H1P * H2P + H2P * H3P + H3P * H4P)
    transcendentals = Bp * (H1P + H2P + H3P)                       # sigmoids
    bytes_accessed = (sum(int(a.size) * a.dtype.itemsize
                          for a in (w1, w2, w3, w4, small))
                      + int(z.size) * 4 + Bp * H4P * 4)

    out_flat = pl.pallas_call(
        _gen_linear_kernel,
        out_shape=jax.ShapeDtypeStruct((Bp, H4P), jnp.float32),
        grid=(n_tiles,),
        in_specs=[
            pl.BlockSpec((row_tile, RANDOM_SIZE), lambda i: (i, 0)),
            _resident(w1), _resident(w2), _resident(w3), _resident(w4),
            _resident(small),
        ],
        out_specs=pl.BlockSpec((row_tile, H4P), lambda i: (i, 0)),
        compiler_params=pltpu.CompilerParams(
            # No-op at batch=2 (grid has a single step); shards batch tiles
            # across v7x's 2 TensorCores only once B gives multiple tiles.
            dimension_semantics=("parallel",),
            vmem_limit_bytes=32 << 20,   # fits v5e/v6e/v7x; resident data ~1.7 MiB
        ),
        cost_estimate=pl.CostEstimate(
            flops=flops,
            transcendentals=transcendentals,
            bytes_accessed=bytes_accessed,
        ),
    )(z, w1, w2, w3, w4, small)

    return out_flat[:B, :H4].reshape(B, N_POINTS, N_FEATURES)


# ---------------------------------------------------------------------------
# parameter construction (mimics nn.Linear's uniform(-1/sqrt(in), 1/sqrt(in)))
# ---------------------------------------------------------------------------
def _quantize_per_col(w):
    """Symmetric per-output-channel int8 quantization. Returns (int8 w, f32 scale)."""
    amax = jnp.max(jnp.abs(w), axis=0)
    scale = jnp.where(amax > 0, amax / 127.0, 1.0)
    w_q = jnp.clip(jnp.round(w / scale), -127, 127).astype(jnp.int8)
    return w_q, scale.astype(jnp.float32)


def init_params(key):
    logical = [(RANDOM_SIZE, H1), (H1, H2), (H2, H3), (H3, H4)]
    ws, bs = [], []
    for fan_in, fan_out in logical:
        key, kw, kb = jax.random.split(key, 3)
        bound = 1.0 / math.sqrt(fan_in)
        ws.append(jax.random.uniform(kw, (fan_in, fan_out), jnp.float32, -bound, bound))
        bs.append(jax.random.uniform(kb, (fan_out,), jnp.float32, -bound, bound))
    w1, w2, w3, w4 = ws
    b1, b2, b3, b4 = bs

    def pad2(w, pin, pout, dtype):
        return jnp.zeros((pin, pout), dtype).at[:w.shape[0], :w.shape[1]].set(w.astype(dtype))

    def pad1(v, p):
        return jnp.zeros((p,), jnp.float32).at[:v.shape[0]].set(v)

    # small layers stay bf16 (tiny); zero-padding is exact: padded hidden units
    # come out of sigmoid as 0.5 but hit all-zero weight rows of the next layer.
    w1p = pad2(w1, RANDOM_SIZE, H1P, jnp.bfloat16)
    w4p = pad2(w4, H3P, H4P, jnp.bfloat16)

    # dominant weights -> int8 + per-column scale (quantize logical, then zero-pad;
    # padded columns are all-zero int8 so their scale value is irrelevant).
    w2q, s2 = _quantize_per_col(w2)
    w3q, s3 = _quantize_per_col(w3)
    w2p = pad2(w2q, H1P, H2P, jnp.int8)
    w3p = pad2(w3q, H2P, H3P, jnp.int8)

    small = jnp.concatenate([pad1(b1, H1P), pad1(b2, H2P), pad1(b3, H3P),
                             pad1(b4, H4P), pad1(s2, H2P), pad1(s3, H3P)])[None, :]
    assert small.shape == (1, SMALL_W)

    return {"w1": w1p, "w2": w2p, "w3": w3p, "w4": w4p, "small": small}


def reference_forward(samples, params):
    """Pure-JAX reference using the identical bf16/int8 recipe as the kernel."""
    w1, w2, w3, w4 = params["w1"], params["w2"], params["w3"], params["w4"]
    sm = params["small"][0]
    b1 = sm[OFF_B1:OFF_B1 + H1P]
    b2 = sm[OFF_B2:OFF_B2 + H2P]
    b3 = sm[OFF_B3:OFF_B3 + H3P]
    b4 = sm[OFF_B4:OFF_B4 + H4P]
    s2 = sm[OFF_S2:OFF_S2 + H2P]
    s3 = sm[OFF_S3:OFF_S3 + H3P]

    x = samples.reshape(samples.shape[0], RANDOM_SIZE).astype(jnp.float32)

    def lin(x, w, b):
        return jnp.dot(x.astype(jnp.bfloat16), w, preferred_element_type=jnp.float32) + b

    def lin_q(x, wq, s, b):
        return jnp.dot(x.astype(jnp.bfloat16), wq.astype(jnp.bfloat16),
                       preferred_element_type=jnp.float32) * s + b

    x = jax.nn.sigmoid(lin(x, w1, b1))
    x = jax.nn.sigmoid(lin_q(x, w2, s2, b2))
    x = jax.nn.sigmoid(lin_q(x, w3, s3, b3))
    x = lin(x, w4, b4)
    return x[:, :H4].reshape(samples.shape[0], N_POINTS, N_FEATURES)


if __name__ == "__main__":
    key = jax.random.PRNGKey(0)
    key_p, key_z = jax.random.split(key)
    params = init_params(key_p)
    samples = jax.random.normal(key_z, (BATCH_SIZE, 1, RANDOM_SIZE), jnp.float32)

    out = jax.block_until_ready(gen_linear_forward(samples, params))
    ref = jax.block_until_ready(reference_forward(samples, params))

    assert out.shape == (BATCH_SIZE, N_POINTS, N_FEATURES)
    assert jnp.allclose(out, ref, atol=1e-2, rtol=1e-2), "mismatch vs reference"

    print("KERNEL_OK")
</pallas_src>

<mosaic_0001>
module attributes {stable_mosaic.version = 11 : i64} {
  func.func @_gen_linear_kernel(%arg0: i32, %arg1: memref<8x32xf32, #tpu.memory_space<vmem>>, %arg2: memref<32x1024xbf16, #tpu.memory_space<vmem>>, %arg3: memref<1024x640xi8, #tpu.memory_space<vmem>>, %arg4: memref<640x1024xi8, #tpu.memory_space<vmem>>, %arg5: memref<1024x128xbf16, #tpu.memory_space<vmem>>, %arg6: memref<1x4480xf32, #tpu.memory_space<vmem>>, %arg7: memref<8x128xf32, #tpu.memory_space<vmem>>) attributes {dimension_semantics = [#tpu.dimension_semantics<parallel>], iteration_bounds = array<i64: 1>, scalar_prefetch = 0 : i64, scratch_operands = 0 : i64, tpu.core_type = #tpu.core_type<tc>, window_params = [{transform_indices = @transform_0, window_bounds = array<i64: 8, 32>}, {pipeline_mode = #tpu.pipeline_mode<synchronous>, transform_indices = @transform_1, window_bounds = array<i64: 32, 1024>}, {pipeline_mode = #tpu.pipeline_mode<synchronous>, transform_indices = @transform_2, window_bounds = array<i64: 1024, 640>}, {pipeline_mode = #tpu.pipeline_mode<synchronous>, transform_indices = @transform_3, window_bounds = array<i64: 640, 1024>}, {pipeline_mode = #tpu.pipeline_mode<synchronous>, transform_indices = @transform_4, window_bounds = array<i64: 1024, 128>}, {pipeline_mode = #tpu.pipeline_mode<synchronous>, transform_indices = @transform_5, window_bounds = array<i64: 1, 4480>}, {transform_indices = @transform_6, window_bounds = array<i64: 8, 128>}]} {
    %c0 = arith.constant 0 : index
    %c0_0 = arith.constant 0 : index
    %0 = vector.load %arg6[%c0, %c0_0] : memref<1x4480xf32, #tpu.memory_space<vmem>>, vector<1x1024xf32>
    %c0_1 = arith.constant 0 : index
    %c1024 = arith.constant 1024 : index
    %1 = vector.load %arg6[%c0_1, %c1024] : memref<1x4480xf32, #tpu.memory_space<vmem>>, vector<1x640xf32>
    %c0_2 = arith.constant 0 : index
    %c1664 = arith.constant 1664 : index
    %2 = vector.load %arg6[%c0_2, %c1664] : memref<1x4480xf32, #tpu.memory_space<vmem>>, vector<1x1024xf32>
    %c0_3 = arith.constant 0 : index
    %c2688 = arith.constant 2688 : index
    %3 = vector.load %arg6[%c0_3, %c2688] : memref<1x4480xf32, #tpu.memory_space<vmem>>, vector<1x128xf32>
    %c0_4 = arith.constant 0 : index
    %c2816 = arith.constant 2816 : index
    %4 = vector.load %arg6[%c0_4, %c2816] : memref<1x4480xf32, #tpu.memory_space<vmem>>, vector<1x640xf32>
    %c0_5 = arith.constant 0 : index
    %c3456 = arith.constant 3456 : index
    %5 = vector.load %arg6[%c0_5, %c3456] : memref<1x4480xf32, #tpu.memory_space<vmem>>, vector<1x1024xf32>
    %c0_6 = arith.constant 0 : index
    %c0_7 = arith.constant 0 : index
    %6 = vector.load %arg1[%c0_6, %c0_7] : memref<8x32xf32, #tpu.memory_space<vmem>>, vector<8x32xf32>
    %7 = arith.truncf %6 : vector<8x32xf32> to vector<8x32xbf16>
    %c0_8 = arith.constant 0 : index
    %c0_9 = arith.constant 0 : index
    %8 = vector.load %arg2[%c0_8, %c0_9] : memref<32x1024xbf16, #tpu.memory_space<vmem>>, vector<32x1024xbf16>
    %cst = arith.constant dense<0.000000e+00> : vector<8x1024xf32>
    %9 = tpu.matmul %7, %8, %cst {dimension_numbers = #tpu.dot_dimension_numbers<[1], [0], [0], [1], [0, 0, 1, 1], [], []>} : vector<8x32xbf16>, vector<32x1024xbf16>, vector<8x1024xf32> -> vector<8x1024xf32>
    %10 = vector.broadcast %0 : vector<1x1024xf32> to vector<8x1024xf32>
    %11 = arith.addf %9, %10 : vector<8x1024xf32>
    %12 = arith.negf %11 : vector<8x1024xf32>
    %13 = math.exp %12 : vector<8x1024xf32>
    %cst_10 = arith.constant 1.000000e+00 : f32
    %14 = vector.broadcast %cst_10 : f32 to vector<8x1024xf32>
    %15 = arith.addf %14, %13 : vector<8x1024xf32>
    %16 = arith.divf %14, %15 : vector<8x1024xf32>
    %c0_11 = arith.constant 0 : index
    %c0_12 = arith.constant 0 : index
    %17 = vector.load %arg3[%c0_11, %c0_12] : memref<1024x640xi8, #tpu.memory_space<vmem>>, vector<1024x640xi8>
    %18 = arith.sitofp %17 : vector<1024x640xi8> to vector<1024x640xbf16>
    %19 = arith.truncf %16 : vector<8x1024xf32> to vector<8x1024xbf16>
    %cst_13 = arith.constant dense<0.000000e+00> : vector<8x640xf32>
    %20 = tpu.matmul %19, %18, %cst_13 {dimension_numbers = #tpu.dot_dimension_numbers<[1], [0], [0], [1], [0, 0, 1, 1], [], []>} : vector<8x1024xbf16>, vector<1024x640xbf16>, vector<8x640xf32> -> vector<8x640xf32>
    %21 = vector.broadcast %4 : vector<1x640xf32> to vector<8x640xf32>
    %22 = arith.mulf %20, %21 : vector<8x640xf32>
    %23 = vector.broadcast %1 : vector<1x640xf32> to vector<8x640xf32>
    %24 = arith.addf %22, %23 : vector<8x640xf32>
    %25 = arith.negf %24 : vector<8x640xf32>
    %26 = math.exp %25 : vector<8x640xf32>
    %cst_14 = arith.constant 1.000000e+00 : f32
    %27 = vector.broadcast %cst_14 : f32 to vector<8x640xf32>
    %28 = arith.addf %27, %26 : vector<8x640xf32>
    %29 = arith.divf %27, %28 : vector<8x640xf32>
    %c0_15 = arith.constant 0 : index
    %c0_16 = arith.constant 0 : index
    %30 = vector.load %arg4[%c0_15, %c0_16] : memref<640x1024xi8, #tpu.memory_space<vmem>>, vector<640x1024xi8>
    %31 = arith.sitofp %30 : vector<640x1024xi8> to vector<640x1024xbf16>
    %32 = arith.truncf %29 : vector<8x640xf32> to vector<8x640xbf16>
    %cst_17 = arith.constant dense<0.000000e+00> : vector<8x1024xf32>
    %33 = tpu.matmul %32, %31, %cst_17 {dimension_numbers = #tpu.dot_dimension_numbers<[1], [0], [0], [1], [0, 0, 1, 1], [], []>} : vector<8x640xbf16>, vector<640x1024xbf16>, vector<8x1024xf32> -> vector<8x1024xf32>
    %34 = vector.broadcast %5 : vector<1x1024xf32> to vector<8x1024xf32>
    %35 = arith.mulf %33, %34 : vector<8x1024xf32>
    %36 = vector.broadcast %2 : vector<1x1024xf32> to vector<8x1024xf32>
    %37 = arith.addf %35, %36 : vector<8x1024xf32>
    %38 = arith.negf %37 : vector<8x1024xf32>
    %39 = math.exp %38 : vector<8x1024xf32>
    %cst_18 = arith.constant 1.000000e+00 : f32
    %40 = vector.broadcast %cst_18 : f32 to vector<8x1024xf32>
    %41 = arith.addf %40, %39 : vector<8x1024xf32>
    %42 = arith.divf %40, %41 : vector<8x1024xf32>
    %43 = arith.truncf %42 : vector<8x1024xf32> to vector<8x1024xbf16>
    %c0_19 = arith.constant 0 : index
    %c0_20 = arith.constant 0 : index
    %44 = vector.load %arg5[%c0_19, %c0_20] : memref<1024x128xbf16, #tpu.memory_space<vmem>>, vector<1024x128xbf16>
    %cst_21 = arith.constant dense<0.000000e+00> : vector<8x128xf32>
    %45 = tpu.matmul %43, %44, %cst_21 {dimension_numbers = #tpu.dot_dimension_numbers<[1], [0], [0], [1], [0, 0, 1, 1], [], []>} : vector<8x1024xbf16>, vector<1024x128xbf16>, vector<8x128xf32> -> vector<8x128xf32>
    %46 = vector.broadcast %3 : vector<1x128xf32> to vector<8x128xf32>
    %47 = arith.addf %45, %46 : vector<8x128xf32>
    %c0_22 = arith.constant 0 : index
    %c0_23 = arith.constant 0 : index
    %48 = vector.load %arg7[%c0_22, %c0_23] : memref<8x128xf32, #tpu.memory_space<vmem>>, vector<8x128xf32>
    tpu.vector_store %arg7[%c0_22, %c0_23], %47 {strides = array<i32>} : memref<8x128xf32, #tpu.memory_space<vmem>>, vector<8x128xf32>,
    return
  }
  func.func @transform_0(%arg0: i32) -> (i32, i32) {
    %c0_i32 = arith.constant 0 : i32
    %c0_i32_0 = arith.constant 0 : i32
    return %arg0, %c0_i32 : i32, i32
  }
  func.func @transform_1(%arg0: i32) -> (i32, i32) {
    %c0_i32 = arith.constant 0 : i32
    %c0_i32_0 = arith.constant 0 : i32
    %c0_i32_1 = arith.constant 0 : i32
    return %c0_i32, %c0_i32_0 : i32, i32
  }
  func.func @transform_2(%arg0: i32) -> (i32, i32) {
    %c0_i32 = arith.constant 0 : i32
    %c0_i32_0 = arith.constant 0 : i32
    %c0_i32_1 = arith.constant 0 : i32
    return %c0_i32, %c0_i32_0 : i32, i32
  }
  func.func @transform_3(%arg0: i32) -> (i32, i32) {
    %c0_i32 = arith.constant 0 : i32
    %c0_i32_0 = arith.constant 0 : i32
    %c0_i32_1 = arith.constant 0 : i32
    return %c0_i32, %c0_i32_0 : i32, i32
  }
  func.func @transform_4(%arg0: i32) -> (i32, i32) {
    %c0_i32 = arith.constant 0 : i32
    %c0_i32_0 = arith.constant 0 : i32
    %c0_i32_1 = arith.constant 0 : i32
    return %c0_i32, %c0_i32_0 : i32, i32
  }
  func.func @transform_5(%arg0: i32) -> (i32, i32) {
    %c0_i32 = arith.constant 0 : i32
    %c0_i32_0 = arith.constant 0 : i32
    %c0_i32_1 = arith.constant 0 : i32
    return %c0_i32, %c0_i32_0 : i32, i32
  }
  func.func @transform_6(%arg0: i32) -> (i32, i32) {
    %c0_i32 = arith.constant 0 : i32
    %c0_i32_0 = arith.constant 0 : i32
    return %arg0, %c0_i32 : i32, i32
  }
}

</mosaic_0001>

<llo_original>
// kernel: tpu_custom_call.1
$region0: #{tpu_custom_call.1}
  #allocation0 [shape = 'u32[]', space=smem, size = 0x4, offset = 0x4, fixed_abs, tag = 'smem constant byte address 0x4 - core index']
  #allocation1 [shape = 'u32[144,128]{1,0:T(1,128)}', space=vmem, size = 0x12000, scoped, tag = 'internal scratch']
  %s0 = inlined_call_operand.hbm [shape: f32[8,32], index: 0, kind: input, shape index: {}]
  %s1 = inlined_call_operand.hbm [shape: bf16[32,1024], index: 1, kind: input, shape index: {}]
  %s2 = inlined_call_operand.hbm [shape: s8[1024,640], index: 2, kind: input, shape index: {}]
  %s3 = inlined_call_operand.hbm [shape: s8[640,1024], index: 3, kind: input, shape index: {}]
  %s4 = inlined_call_operand.hbm [shape: bf16[1024,128], index: 4, kind: input, shape index: {}]
  %s5 = inlined_call_operand.hbm [shape: f32[1,4480], index: 5, kind: input, shape index: {}]
  %s6 = inlined_call_operand.hbm [shape: f32[8,128], index: 6, kind: output, shape index: {}]
  %s7 = sld [smem:[#allocation0]]
  $region58: #{tpu_custom_call.1} parent=0
    _
  %s9 = ssub.s32 1, %s7
  %s10 = scalar_select 0, %s9, %s7
  $region1: #{tpu_custom_call.1} parent=0
    #allocation2 [shape = 'u8[4096]{0}', space=vmem, size = 0x1000, scoped, tag = 'input window, operand 0, single buffered']
    #allocation3 [shape = 's32[1]{0}', space=sflag, size = 0x4, scoped, tag = 'scoped memory for tpu_custom_call.1']
    #allocation4 [shape = 's32[1]{0}', space=sflag, size = 0x4, scoped, tag = 'scoped memory for tpu_custom_call.1']
    #allocation5 [shape = 'u8[65536]{0}', space=vmem, size = 0x10000, scoped, tag = 'input window, operand 1, single buffered']
    #allocation6 [shape = 's32[1]{0}', space=sflag, size = 0x4, scoped, tag = 'scoped memory for tpu_custom_call.1']
    #allocation7 [shape = 'u8[655360]{0}', space=vmem, size = 0xa0000, scoped, tag = 'input window, operand 2, single buffered']
    #allocation8 [shape = 'u8[655360]{0}', space=vmem, size = 0xa0000, scoped, tag = 'input window, operand 3, single buffered']
    #allocation9 [shape = 's32[1]{0}', space=sflag, size = 0x4, scoped, tag = 'scoped memory for tpu_custom_call.1']
    #allocation10 [shape = 'u8[262144]{0}', space=vmem, size = 0x40000, scoped, tag = 'input window, operand 4, single buffered']
    #allocation11 [shape = 'u8[17920]{0}', space=vmem, size = 0x4800, scoped, tag = 'input window, operand 5, single buffered']
    #allocation12 [shape = 's32[1]{0}', space=sflag, size = 0x4, scoped, tag = 'scoped memory for tpu_custom_call.1']
    #allocation13 [shape = 'u8[4096]{0}', space=vmem, size = 0x1000, scoped, tag = 'output window, operand 0, single buffered']
    %11 = vsyncpa [#allocation3], 0
    %12 = vsyncpa [#allocation6], 0
    %13 = vsyncpa [#allocation9], 0
    %14 = vsyncpa [#allocation12], 0
    %15 = vsyncpa [#allocation4], 0
    // Predicated region
    $region2: #{tpu_custom_call.1} parent=1 // pred_check
      _
    $region3: #{tpu_custom_call.1} parent=1 // pred_check_branch
      %17 = sbr.rel (0) target = $region5
    $region4: #{tpu_custom_call.1} parent=1 // pred_region
      %s19 = ssub.s32 128, 128
      %20 = vsyncadd [#allocation3], %s19
      %s22 = sshll.u32 [#allocation2], 4
      %s23 = int_to_ptr.vmem [resolvable:$true] %s22
      %25 = dma.hbm_to_vmem [thread:$0]  %s0, 128, %s23, [#allocation3]
    $region5: #{tpu_custom_call.1} parent=1 // pred_fallthru
      _
    // Predicated region
    $region6: #{tpu_custom_call.1} parent=1 // pred_check
      _
    $region7: #{tpu_custom_call.1} parent=1 // pred_check_branch
      %27 = sbr.rel (0) target = $region9
    $region8: #{tpu_custom_call.1} parent=1 // pred_region
      %s29 = ssub.s32 2048, 2048
      %30 = vsyncadd [#allocation6], %s29
      %s31 = sshll.u32 [#allocation5], 4
      %s32 = int_to_ptr.vmem [resolvable:$true] %s31
      %37 = dma.hbm_to_vmem [thread:$0]  %s1, 2048, %s32, [#allocation6], 512, 512, 32
    $region9: #{tpu_custom_call.1} parent=1 // pred_fallthru
      _
    // Predicated region
    $region10: #{tpu_custom_call.1} parent=1 // pred_check
      _
    $region11: #{tpu_custom_call.1} parent=1 // pred_check_branch
      %39 = sbr.rel (0) target = $region13
    $region12: #{tpu_custom_call.1} parent=1 // pred_region
      %s41 = ssub.s32 20480, 20480
      %42 = vsyncadd [#allocation6], %s41
      %s43 = sshll.u32 [#allocation7], 4
      %s44 = int_to_ptr.vmem [resolvable:$true] %s43
      %49 = dma.hbm_to_vmem [thread:$0]  %s2, 20480, %s44, [#allocation6], 640, 640, 40
    $region13: #{tpu_custom_call.1} parent=1 // pred_fallthru
      _
    // Predicated region
    $region14: #{tpu_custom_call.1} parent=1 // pred_check
      _
    $region15: #{tpu_custom_call.1} parent=1 // pred_check_branch
      %51 = sbr.rel (0) target = $region17
    $region16: #{tpu_custom_call.1} parent=1 // pred_region
      %s53 = ssub.s32 20480, 20480
      %54 = vsyncadd [#allocation9], %s53
      %s55 = sshll.u32 [#allocation8], 4
      %s56 = int_to_ptr.vmem [resolvable:$true] %s55
      %61 = dma.hbm_to_vmem [thread:$0]  %s3, 20480, %s56, [#allocation9], 1024, 1024, 64
    $region17: #{tpu_custom_call.1} parent=1 // pred_fallthru
      _
    // Predicated region
    $region18: #{tpu_custom_call.1} parent=1 // pred_check
      _
    $region19: #{tpu_custom_call.1} parent=1 // pred_check_branch
      %63 = sbr.rel (0) target = $region21
    $region20: #{tpu_custom_call.1} parent=1 // pred_region
      %s65 = ssub.s32 8192, 8192
      %66 = vsyncadd [#allocation9], %s65
      %s67 = sshll.u32 [#allocation10], 4
      %s68 = int_to_ptr.vmem [resolvable:$true] %s67
      %73 = dma.hbm_to_vmem [thread:$0]  %s4, 8192, %s68, [#allocation9], 64, 64, 4
    $region21: #{tpu_custom_call.1} parent=1 // pred_fallthru
      _
    // Predicated region
    $region22: #{tpu_custom_call.1} parent=1 // pred_check
      _
    $region23: #{tpu_custom_call.1} parent=1 // pred_check_branch
      %75 = sbr.rel (0) target = $region25
    $region24: #{tpu_custom_call.1} parent=1 // pred_region
      %s77 = ssub.s32 560, 560
      %78 = vsyncadd [#allocation12], %s77
      %s80 = sshll.u32 [#allocation11], 4
      %s81 = int_to_ptr.vmem [resolvable:$true] %s80
      %83 = dma.hbm_to_vmem [thread:$0]  %s5, 560, %s81, [#allocation12]
    $region25: #{tpu_custom_call.1} parent=1 // pred_fallthru
      _
    // Predicated region
    $region26: #{tpu_custom_call.1} parent=1 // pred_check
      _
    $region27: #{tpu_custom_call.1} parent=1 // pred_check_branch
      %85 = sbr.rel (0) target = $region29
    $region28: #{tpu_custom_call.1} parent=1 // pred_region
      %86 = dma.done [#allocation3], 128
    $region29: #{tpu_custom_call.1} parent=1 // pred_fallthru
      _
    // Predicated region
    $region30: #{tpu_custom_call.1} parent=1 // pred_check
      _
    $region31: #{tpu_custom_call.1} parent=1 // pred_check_branch
      %88 = sbr.rel (0) target = $region33
    $region32: #{tpu_custom_call.1} parent=1 // pred_region
      %89 = dma.done [#allocation6], 2048
    $region33: #{tpu_custom_call.1} parent=1 // pred_fallthru
      _
    // Predicated region
    $region34: #{tpu_custom_call.1} parent=1 // pred_check
      _
    $region35: #{tpu_custom_call.1} parent=1 // pred_check_branch
      %91 = sbr.rel (0) target = $region37
    $region36: #{tpu_custom_call.1} parent=1 // pred_region
      %92 = dma.done [#allocation6], 20480
    $region37: #{tpu_custom_call.1} parent=1 // pred_fallthru
      _
    // Predicated region
    $region38: #{tpu_custom_call.1} parent=1 // pred_check
      _
    $region39: #{tpu_custom_call.1} parent=1 // pred_check_branch
      %94 = sbr.rel (0) target = $region41
    $region40: #{tpu_custom_call.1} parent=1 // pred_region
      %95 = dma.done [#allocation9], 20480
    $region41: #{tpu_custom_call.1} parent=1 // pred_fallthru
      _
    // Predicated region
    $region42: #{tpu_custom_call.1} parent=1 // pred_check
      _
    $region43: #{tpu_custom_call.1} parent=1 // pred_check_branch
      %97 = sbr.rel (0) target = $region45
    $region44: #{tpu_custom_call.1} parent=1 // pred_region
      %98 = dma.done [#allocation9], 8192
    $region45: #{tpu_custom_call.1} parent=1 // pred_fallthru
      _
    // Predicated region
    $region46: #{tpu_custom_call.1} parent=1 // pred_check
      _
    $region47: #{tpu_custom_call.1} parent=1 // pred_check_branch
      %100 = sbr.rel (0) target = $region49
    $region48: #{tpu_custom_call.1} parent=1 // pred_region
      %101 = dma.done [#allocation12], 560
    $region49: #{tpu_custom_call.1} parent=1 // pred_fallthru
      _
    %v103 = vld [vmem:[#allocation11] sm:$0xff]
    %v104 = vld [vmem:[#allocation11 + $0x8] sm:$0x1f]
    %v105 = vld [vmem:[#allocation11 + $0xd] sm:$0xff]
    %v106 = vld [vmem:[#allocation11 + $0x15] sm:$0x1]
    %v107 = vld [vmem:[#allocation11 + $0x16] sm:$0x1f]
    %v108 = vld [vmem:[#allocation11 + $0x1b] sm:$0xff]
    %v109 = vld [vmem:[#allocation2] sm:$0xff]
    %v110 = vpack.c.bf16 %v109, %v109
    %v111 = vld [vmem:[#allocation5] sm:$0xff]
    %v112 = vld [vmem:[#allocation5 + $0x8] sm:$0xff]
    %v113 = vld [vmem:[#allocation5 + $0x10] sm:$0xff]
    %v114 = vld [vmem:[#allocation5 + $0x18] sm:$0xff]
    %v115 = vld [vmem:[#allocation5 + $0x20] sm:$0xff]
    %v116 = vld [vmem:[#allocation5 + $0x28] sm:$0xff]
    %v117 = vld [vmem:[#allocation5 + $0x30] sm:$0xff]
    %v118 = vld [vmem:[#allocation5 + $0x38] sm:$0xff]
    %v119 = vld [vmem:[#allocation5 + $0x40] sm:$0xff]
    %v120 = vld [vmem:[#allocation5 + $0x48] sm:$0xff]
    %v121 = vld [vmem:[#allocation5 + $0x50] sm:$0xff]
    %v122 = vld [vmem:[#allocation5 + $0x58] sm:$0xff]
    %v123 = vld [vmem:[#allocation5 + $0x60] sm:$0xff]
    %v124 = vld [vmem:[#allocation5 + $0x68] sm:$0xff]
    %v125 = vld [vmem:[#allocation5 + $0x70] sm:$0xff]
    %v126 = vld [vmem:[#allocation5 + $0x78] sm:$0xff]
    %v128 = vlaneseq
    %v129 = vshrl.u32 %v128, 7
    %v130 = vsub.s32 0, %v129
    %v131 = vrot.slane %v103, %v130
    %v132 = vlaneseq
    %v133 = vshrl.u32 %v132, 7
    %v134 = vsub.s32 1, %v133
    %v135 = vrot.slane %v103, %v134
    %v136 = vlaneseq
    %v137 = vshrl.u32 %v136, 7
    %v138 = vsub.s32 2, %v137
    %v139 = vrot.slane %v103, %v138
    %v140 = vlaneseq
    %v141 = vshrl.u32 %v140, 7
    %v142 = vsub.s32 3, %v141
    %v143 = vrot.slane %v103, %v142
    %v144 = vlaneseq
    %v145 = vshrl.u32 %v144, 7
    %v146 = vsub.s32 4, %v145
    %v147 = vrot.slane %v103, %v146
    %v148 = vlaneseq
    %v149 = vshrl.u32 %v148, 7
    %v150 = vsub.s32 5, %v149
    %v151 = vrot.slane %v103, %v150
    %v152 = vlaneseq
    %v153 = vshrl.u32 %v152, 7
    %v154 = vsub.s32 6, %v153
    %v155 = vrot.slane %v103, %v154
    %v156 = vlaneseq
    %v157 = vshrl.u32 %v156, 7
    %v158 = vsub.s32 7, %v157
    %v159 = vrot.slane %v103, %v158
    %v184 = vunpack.c.l.b16 %v111
    %v185 = vunpack.c.h.b16 %v111
    %v186 = vunpack.c.l.b16 %v112
    %v187 = vunpack.c.h.b16 %v112
    %v188 = vunpack.c.l.b16 %v113
    %v189 = vunpack.c.h.b16 %v113
    %v190 = vunpack.c.l.b16 %v114
    %v191 = vunpack.c.h.b16 %v114
    %v192 = vunpack.c.l.b16 %v115
    %v193 = vunpack.c.h.b16 %v115
    %v194 = vunpack.c.l.b16 %v116
    %v195 = vunpack.c.h.b16 %v116
    %v196 = vunpack.c.l.b16 %v117
    %v197 = vunpack.c.h.b16 %v117
    %v198 = vunpack.c.l.b16 %v118
    %v199 = vunpack.c.h.b16 %v118
    %v200 = vunpack.c.l.b16 %v119
    %v201 = vunpack.c.h.b16 %v119
    %v202 = vunpack.c.l.b16 %v120
    %v203 = vunpack.c.h.b16 %v120
    %v204 = vunpack.c.l.b16 %v121
    %v205 = vunpack.c.h.b16 %v121
    %v206 = vunpack.c.l.b16 %v122
    %v207 = vunpack.c.h.b16 %v122
    %v208 = vunpack.c.l.b16 %v123
    %v209 = vunpack.c.h.b16 %v123
    %v210 = vunpack.c.l.b16 %v124
    %v211 = vunpack.c.h.b16 %v124
    %v212 = vunpack.c.l.b16 %v125
    %v213 = vunpack.c.h.b16 %v125
    %v214 = vunpack.c.l.b16 %v126
    %v215 = vunpack.c.h.b16 %v126
    %v216 = vpack.c.b16 %v192, %v184
    %v217 = vpack.c.b16 %v193, %v185
    %v218 = vpack.c.b16 %v194, %v186
    %v219 = vpack.c.b16 %v195, %v187
    %v220 = vpack.c.b16 %v196, %v188
    %v221 = vpack.c.b16 %v197, %v189
    %v222 = vpack.c.b16 %v198, %v190
    %v223 = vpack.c.b16 %v199, %v191
    %v224 = vpack.c.b16 %v208, %v200
    %v225 = vpack.c.b16 %v209, %v201
    %v226 = vpack.c.b16 %v210, %v202
    %v227 = vpack.c.b16 %v211, %v203
    %v228 = vpack.c.b16 %v212, %v204
    %v229 = vpack.c.b16 %v213, %v205
    %v230 = vpack.c.b16 %v214, %v206
    %v231 = vpack.c.b16 %v215, %v207
    %vm248 = vcmask 261120
    %v250 = vsel %vm248, %v110, 0
    %252 = vmatprep.subr.bf16.mxu0 0
    %253 = vmatpush1.bf16.msra.mxu0 0
    %254 = vmatprep.subr.bf16.mxu0 0
    %255 = vmatpush1.bf16.msra.mxu0 0
    %256 = vmatprep.subr.bf16.mxu0 0
    %257 = vmatpush1.bf16.msra.mxu0 0
    %258 = vmatprep.subr.bf16.mxu0 0
    %259 = vmatpush1.bf16.msra.mxu0 0
    %260 = vmatprep.subr.bf16.mxu0 0
    %261 = vmatpush1.bf16.msra.mxu0 0
    %262 = vmatprep.subr.bf16.mxu0 0
    %263 = vmatpush1.bf16.msra.mxu0 0
    %264 = vmatprep.subr.bf16.mxu0 %v225
    %265 = vmatpush1.bf16.msra.mxu0 %v224
    %266 = vmatprep.subr.bf16.mxu0 %v217
    %267 = vmatpush1.bf16.msra.mxu0 %v216
    %268 = vmatprep.subr.bf16.mxu0 0
    %269 = vmatpush2.bf16.msra.mxu0 0
    %270 = vmatprep.subr.bf16.mxu0 0
    %271 = vmatpush2.bf16.msra.mxu0 0
    %272 = vmatprep.subr.bf16.mxu0 0
    %273 = vmatpush2.bf16.msra.mxu0 0
    %274 = vmatprep.subr.bf16.mxu0 0
    %275 = vmatpush2.bf16.msra.mxu0 0
    %276 = vmatprep.subr.bf16.mxu0 0
    %277 = vmatpush2.bf16.msra.mxu0 0
    %278 = vmatprep.subr.bf16.mxu0 0
    %279 = vmatpush2.bf16.msra.mxu0 0
    %280 = vmatprep.subr.bf16.mxu0 0
    %281 = vmatpush2.bf16.msra.mxu0 0
    %282 = vmatprep.subr.bf16.mxu0 0
    %283 = vmatpush2.bf16.msra.mxu0 0
    %284 = vmatprep.mubr.bf16.mxu0 0
    %285 = vmatmul.mubr.bf16.gmra.mxu0 %v250
    %v286 = vpop.f32.mrf.mxu0
    %v287 = vadd.f32 %v131, %v286
    %v288 = vpop.f32.mrf.mxu0
    %v289 = vadd.f32 %v135, %v288
    %v290 = vpop.f32.mrf.mxu0
    %v291 = vpop.f32.mrf.mxu0
    %292 = vdwg.mxu0
    %293 = vmatprep.subr.bf16.mxu0 0
    %294 = vmatpush1.bf16.msra.mxu0 0
    %295 = vmatprep.subr.bf16.mxu0 0
    %296 = vmatpush1.bf16.msra.mxu0 0
    %297 = vmatprep.subr.bf16.mxu0 0
    %298 = vmatpush1.bf16.msra.mxu0 0
    %299 = vmatprep.subr.bf16.mxu0 0
    %300 = vmatpush1.bf16.msra.mxu0 0
    %301 = vmatprep.subr.bf16.mxu0 0
    %302 = vmatpush1.bf16.msra.mxu0 0
    %303 = vmatprep.subr.bf16.mxu0 0
    %304 = vmatpush1.bf16.msra.mxu0 0
    %305 = vmatprep.subr.bf16.mxu0 %v227
    %306 = vmatpush1.bf16.msra.mxu0 %v226
    %307 = vmatprep.subr.bf16.mxu0 %v219
    %308 = vmatpush1.bf16.msra.mxu0 %v218
    %309 = vmatprep.subr.bf16.mxu0 0
    %310 = vmatpush2.bf16.msra.mxu0 0
    %311 = vmatprep.subr.bf16.mxu0 0
    %312 = vmatpush2.bf16.msra.mxu0 0
    %313 = vmatprep.subr.bf16.mxu0 0
    %314 = vmatpush2.bf16.msra.mxu0 0
    %315 = vmatprep.subr.bf16.mxu0 0
    %316 = vmatpush2.bf16.msra.mxu0 0
    %317 = vmatprep.subr.bf16.mxu0 0
    %318 = vmatpush2.bf16.msra.mxu0 0
    %319 = vmatprep.subr.bf16.mxu0 0
    %320 = vmatpush2.bf16.msra.mxu0 0
    %321 = vmatprep.subr.bf16.mxu0 0
    %322 = vmatpush2.bf16.msra.mxu0 0
    %323 = vmatprep.subr.bf16.mxu0 0
    %324 = vmatpush2.bf16.msra.mxu0 0
    %325 = vmatprep.mubr.bf16.mxu0 0
    %326 = vmatmul.mubr.bf16.gmra.mxu0 %v250
    %v327 = vpop.f32.mrf.mxu0
    %v328 = vadd.f32 %v139, %v327
    %v329 = vpop.f32.mrf.mxu0
    %v330 = vadd.f32 %v143, %v329
    %v331 = vpop.f32.mrf.mxu0
    %v332 = vpop.f32.mrf.mxu0
    %333 = vdwg.mxu0
    %334 = vmatprep.subr.bf16.mxu0 0
    %335 = vmatpush1.bf16.msra.mxu0 0
    %336 = vmatprep.subr.bf16.mxu0 0
    %337 = vmatpush1.bf16.msra.mxu0 0
    %338 = vmatprep.subr.bf16.mxu0 0
    %339 = vmatpush1.bf16.msra.mxu0 0
    %340 = vmatprep.subr.bf16.mxu0 0
    %341 = vmatpush1.bf16.msra.mxu0 0
    %342 = vmatprep.subr.bf16.mxu0 0
    %343 = vmatpush1.bf16.msra.mxu0 0
    %344 = vmatprep.subr.bf16.mxu0 0
    %345 = vmatpush1.bf16.msra.mxu0 0
    %346 = vmatprep.subr.bf16.mxu0 %v229
    %347 = vmatpush1.bf16.msra.mxu0 %v228
    %348 = vmatprep.subr.bf16.mxu0 %v221
    %349 = vmatpush1.bf16.msra.mxu0 %v220
    %350 = vmatprep.subr.bf16.mxu0 0
    %351 = vmatpush2.bf16.msra.mxu0 0
    %352 = vmatprep.subr.bf16.mxu0 0
    %353 = vmatpush2.bf16.msra.mxu0 0
    %354 = vmatprep.subr.bf16.mxu0 0
    %355 = vmatpush2.bf16.msra.mxu0 0
    %356 = vmatprep.subr.bf16.mxu0 0
    %357 = vmatpush2.bf16.msra.mxu0 0
    %358 = vmatprep.subr.bf16.mxu0 0
    %359 = vmatpush2.bf16.msra.mxu0 0
    %360 = vmatprep.subr.bf16.mxu0 0
    %361 = vmatpush2.bf16.msra.mxu0 0
    %362 = vmatprep.subr.bf16.mxu0 0
    %363 = vmatpush2.bf16.msra.mxu0 0
    %364 = vmatprep.subr.bf16.mxu0 0
    %365 = vmatpush2.bf16.msra.mxu0 0
    %366 = vmatprep.mubr.bf16.mxu0 0
    %367 = vmatmul.mubr.bf16.gmra.mxu0 %v250
    %v368 = vpop.f32.mrf.mxu0
    %v369 = vadd.f32 %v147, %v368
    %v370 = vpop.f32.mrf.mxu0
    %v371 = vadd.f32 %v151, %v370
    %v372 = vpop.f32.mrf.mxu0
    %v373 = vpop.f32.mrf.mxu0
    %374 = vdwg.mxu0
    %375 = vmatprep.subr.bf16.mxu0 0
    %376 = vmatpush1.bf16.msra.mxu0 0
    %377 = vmatprep.subr.bf16.mxu0 0
    %378 = vmatpush1.bf16.msra.mxu0 0
    %379 = vmatprep.subr.bf16.mxu0 0
    %380 = vmatpush1.bf16.msra.mxu0 0
    %381 = vmatprep.subr.bf16.mxu0 0
    %382 = vmatpush1.bf16.msra.mxu0 0
    %383 = vmatprep.subr.bf16.mxu0 0
    %384 = vmatpush1.bf16.msra.mxu0 0
    %385 = vmatprep.subr.bf16.mxu0 0
    %386 = vmatpush1.bf16.msra.mxu0 0
    %387 = vmatprep.subr.bf16.mxu0 %v231
    %388 = vmatpush1.bf16.msra.mxu0 %v230
    %389 = vmatprep.subr.bf16.mxu0 %v223
    %390 = vmatpush1.bf16.msra.mxu0 %v222
    %391 = vmatprep.subr.bf16.mxu0 0
    %392 = vmatpush2.bf16.msra.mxu0 0
    %393 = vmatprep.subr.bf16.mxu0 0
    %394 = vmatpush2.bf16.msra.mxu0 0
    %395 = vmatprep.subr.bf16.mxu0 0
    %396 = vmatpush2.bf16.msra.mxu0 0
    %397 = vmatprep.subr.bf16.mxu0 0
    %398 = vmatpush2.bf16.msra.mxu0 0
    %399 = vmatprep.subr.bf16.mxu0 0
    %400 = vmatpush2.bf16.msra.mxu0 0
    %401 = vmatprep.subr.bf16.mxu0 0
    %402 = vmatpush2.bf16.msra.mxu0 0
    %403 = vmatprep.subr.bf16.mxu0 0
    %404 = vmatpush2.bf16.msra.mxu0 0
    %405 = vmatprep.subr.bf16.mxu0 0
    %406 = vmatpush2.bf16.msra.mxu0 0
    %407 = vmatprep.mubr.bf16.mxu0 0
    %408 = vmatmul.mubr.bf16.gmra.mxu0 %v250
    %v409 = vpop.f32.mrf.mxu0
    %v410 = vadd.f32 %v155, %v409
    %v411 = vpop.f32.mrf.mxu0
    %v412 = vadd.f32 %v159, %v411
    %v413 = vpop.f32.mrf.mxu0
    %v414 = vpop.f32.mrf.mxu0
    %415 = vdwg.mxu0
    %v416 = vxor.u32 %v287, 2147483648
    %v417 = vxor.u32 %v289, 2147483648
    %v418 = vxor.u32 %v328, 2147483648
    %v419 = vxor.u32 %v330, 2147483648
    %v420 = vxor.u32 %v369, 2147483648
    %v421 = vxor.u32 %v371, 2147483648
    %v422 = vxor.u32 %v410, 2147483648
    %v423 = vxor.u32 %v412, 2147483648
    %v424 = vmul.f32 %v416, 1.442695
    %v425 = vpow.pop %v424
    %v426 = vmul.f32 %v417, 1.442695
    %v427 = vpow.pop %v426
    %v428 = vmul.f32 %v418, 1.442695
    %v429 = vpow.pop %v428
    %v430 = vmul.f32 %v419, 1.442695
    %v431 = vpow.pop %v430
    %v432 = vmul.f32 %v420, 1.442695
    %v433 = vpow.pop %v432
    %v434 = vmul.f32 %v421, 1.442695
    %v435 = vpow.pop %v434
    %v436 = vmul.f32 %v422, 1.442695
    %v437 = vpow.pop %v436
    %v438 = vmul.f32 %v423, 1.442695
    %v439 = vpow.pop %v438
    %v440 = vadd.f32 %v425, 1.0
    %v441 = vadd.f32 %v427, 1.0
    %v442 = vadd.f32 %v429, 1.0
    %v443 = vadd.f32 %v431, 1.0
    %v444 = vadd.f32 %v433, 1.0
    %v445 = vadd.f32 %v435, 1.0
    %v446 = vadd.f32 %v437, 1.0
    %v447 = vadd.f32 %v439, 1.0
    %v448 = vrcp.pop %v440
    %v449 = vmul.f32 1.0, %v448
    %v450 = vrcp.pop %v441
    %v451 = vmul.f32 1.0, %v450
    %v452 = vrcp.pop %v442
    %v453 = vmul.f32 1.0, %v452
    %v454 = vrcp.pop %v443
    %v455 = vmul.f32 1.0, %v454
    %v456 = vrcp.pop %v444
    %v457 = vmul.f32 1.0, %v456
    %v458 = vrcp.pop %v445
    %v459 = vmul.f32 1.0, %v458
    %v460 = vrcp.pop %v446
    %v461 = vmul.f32 1.0, %v460
    %v462 = vrcp.pop %v447
    %v463 = vmul.f32 1.0, %v462
    %v464 = vld [vmem:[#allocation7] sm:$0xff]
    %v465 = vld [vmem:[#allocation7 + $0x8] sm:$0xff]
    %v466 = vld [vmem:[#allocation7 + $0x10] sm:$0xff]
    %v467 = vld [vmem:[#allocation7 + $0x18] sm:$0xff]
    %v468 = vld [vmem:[#allocation7 + $0x20] sm:$0xff]
    %v469 = vld [vmem:[#allocation7 + $0x28] sm:$0xff]
    %v470 = vld [vmem:[#allocation7 + $0x30] sm:$0xff]
    %v471 = vld [vmem:[#allocation7 + $0x38] sm:$0xff]
    %v472 = vld [vmem:[#allocation7 + $0x40] sm:$0xff]
    %v473 = vld [vmem:[#allocation7 + $0x48] sm:$0xff]
    %v474 = vld [vmem:[#allocation7 + $0x50] sm:$0xff]
    %v475 = vld [vmem:[#allocation7 + $0x58] sm:$0xff]
    %v476 = vld [vmem:[#allocation7 + $0x60] sm:$0xff]
    %v477 = vld [vmem:[#allocation7 + $0x68] sm:$0xff]
    %v478 = vld [vmem:[#allocation7 + $0x70] sm:$0xff]
    %v479 = vld [vmem:[#allocation7 + $0x78] sm:$0xff]
    %v480 = vld [vmem:[#allocation7 + $0x80] sm:$0xff]
    %v481 = vld [vmem:[#allocation7 + $0x88] sm:$0xff]
    %v482 = vld [vmem:[#allocation7 + $0x90] sm:$0xff]
    %v483 = vld [vmem:[#allocation7 + $0x98] sm:$0xff]
    %v484 = vld [vmem:[#allocation7 + $0xa0] sm:$0xff]
    %v485 = vld [vmem:[#allocation7 + $0xa8] sm:$0xff]
    %v486 = vld [vmem:[#allocation7 + $0xb0] sm:$0xff]
    %v487 = vld [vmem:[#allocation7 + $0xb8] sm:$0xff]
    %v488 = vld [vmem:[#allocation7 + $0xc0] sm:$0xff]
    %v489 = vld [vmem:[#allocation7 + $0xc8] sm:$0xff]
    %v490 = vld [vmem:[#allocation7 + $0xd0] sm:$0xff]
    %v491 = vld [vmem:[#allocation7 + $0xd8] sm:$0xff]
    %v492 = vld [vmem:[#allocation7 + $0xe0] sm:$0xff]
    %v493 = vld [vmem:[#allocation7 + $0xe8] sm:$0xff]
    %v494 = vld [vmem:[#allocation7 + $0xf0] sm:$0xff]
    %v495 = vld [vmem:[#allocation7 + $0xf8] sm:$0xff]
    %v496 = vld [vmem:[#allocation7 + $0x100] sm:$0xff]
    %v497 = vld [vmem:[#allocation7 + $0x108] sm:$0xff]
    %v498 = vld [vmem:[#allocation7 + $0x110] sm:$0xff]
    %v499 = vld [vmem:[#allocation7 + $0x118] sm:$0xff]
    %v500 = vld [vmem:[#allocation7 + $0x120] sm:$0xff]
    %v501 = vld [vmem:[#allocation7 + $0x128] sm:$0xff]
    %v502 = vld [vmem:[#allocation7 + $0x130] sm:$0xff]
    %v503 = vld [vmem:[#allocation7 + $0x138] sm:$0xff]
    %v504 = vld [vmem:[#allocation7 + $0x140] sm:$0xff]
    %v505 = vld [vmem:[#allocation7 + $0x148] sm:$0xff]
    %v506 = vld [vmem:[#allocation7 + $0x150] sm:$0xff]
    %v507 = vld [vmem:[#allocation7 + $0x158] sm:$0xff]
    %v508 = vld [vmem:[#allocation7 + $0x160] sm:$0xff]
    %v509 = vld [vmem:[#allocation7 + $0x168] sm:$0xff]
    %v510 = vld [vmem:[#allocation7 + $0x170] sm:$0xff]
    %v511 = vld [vmem:[#allocation7 + $0x178] sm:$0xff]
    %v512 = vld [vmem:[#allocation7 + $0x180] sm:$0xff]
    %v513 = vld [vmem:[#allocation7 + $0x188] sm:$0xff]
    %v514 = vld [vmem:[#allocation7 + $0x190] sm:$0xff]
    %v515 = vld [vmem:[#allocation7 + $0x198] sm:$0xff]
    %v516 = vld [vmem:[#allocation7 + $0x1a0] sm:$0xff]
    %v517 = vld [vmem:[#allocation7 + $0x1a8] sm:$0xff]
    %v518 = vld [vmem:[#allocation7 + $0x1b0] sm:$0xff]
    %v519 = vld [vmem:[#allocation7 + $0x1b8] sm:$0xff]
    %v520 = vld [vmem:[#allocation7 + $0x1c0] sm:$0xff]
    %v521 = vld [vmem:[#allocation7 + $0x1c8] sm:$0xff]
    %v522 = vld [vmem:[#allocation7 + $0x1d0] sm:$0xff]
    %v523 = vld [vmem:[#allocation7 + $0x1d8] sm:$0xff]
    %v524 = vld [vmem:[#allocation7 + $0x1e0] sm:$0xff]
    %v525 = vld [vmem:[#allocation7 + $0x1e8] sm:$0xff]
    %v526 = vld [vmem:[#allocation7 + $0x1f0] sm:$0xff]
    %v527 = vld [vmem:[#allocation7 + $0x1f8] sm:$0xff]
    %v528 = vld [vmem:[#allocation7 + $0x200] sm:$0xff]
    %v529 = vld [vmem:[#allocation7 + $0x208] sm:$0xff]
    %v530 = vld [vmem:[#allocation7 + $0x210] sm:$0xff]
    %v531 = vld [vmem:[#allocation7 + $0x218] sm:$0xff]
    %v532 = vld [vmem:[#allocation7 + $0x220] sm:$0xff]
    %v533 = vld [vmem:[#allocation7 + $0x228] sm:$0xff]
    %v534 = vld [vmem:[#allocation7 + $0x230] sm:$0xff]
    %v535 = vld [vmem:[#allocation7 + $0x238] sm:$0xff]
    %v536 = vld [vmem:[#allocation7 + $0x240] sm:$0xff]
    %v537 = vld [vmem:[#allocation7 + $0x248] sm:$0xff]
    %v538 = vld [vmem:[#allocation7 + $0x250] sm:$0xff]
    %v539 = vld [vmem:[#allocation7 + $0x258] sm:$0xff]
    %v540 = vld [vmem:[#allocation7 + $0x260] sm:$0xff]
    %v541 = vld [vmem:[#allocation7 + $0x268] sm:$0xff]
    %v542 = vld [vmem:[#allocation7 + $0x270] sm:$0xff]
    %v543 = vld [vmem:[#allocation7 + $0x278] sm:$0xff]
    %v544 = vld [vmem:[#allocation7 + $0x280] sm:$0xff]
    %v545 = vld [vmem:[#allocation7 + $0x288] sm:$0xff]
    %v546 = vld [vmem:[#allocation7 + $0x290] sm:$0xff]
    %v547 = vld [vmem:[#allocation7 + $0x298] sm:$0xff]
    %v548 = vld [vmem:[#allocation7 + $0x2a0] sm:$0xff]
    %v549 = vld [vmem:[#allocation7 + $0x2a8] sm:$0xff]
    %v550 = vld [vmem:[#allocation7 + $0x2b0] sm:$0xff]
    %v551 = vld [vmem:[#allocation7 + $0x2b8] sm:$0xff]
    %v552 = vld [vmem:[#allocation7 + $0x2c0] sm:$0xff]
    %v553 = vld [vmem:[#allocation7 + $0x2c8] sm:$0xff]
    %v554 = vld [vmem:[#allocation7 + $0x2d0] sm:$0xff]
    %v555 = vld [vmem:[#allocation7 + $0x2d8] sm:$0xff]
    %v556 = vld [vmem:[#allocation7 + $0x2e0] sm:$0xff]
    %v557 = vld [vmem:[#allocation7 + $0x2e8] sm:$0xff]
    %v558 = vld [vmem:[#allocation7 + $0x2f0] sm:$0xff]
    %v559 = vld [vmem:[#allocation7 + $0x2f8] sm:$0xff]
    %v560 = vld [vmem:[#allocation7 + $0x300] sm:$0xff]
    %v561 = vld [vmem:[#allocation7 + $0x308] sm:$0xff]
    %v562 = vld [vmem:[#allocation7 + $0x310] sm:$0xff]
    %v563 = vld [vmem:[#allocation7 + $0x318] sm:$0xff]
    %v564 = vld [vmem:[#allocation7 + $0x320] sm:$0xff]
    %v565 = vld [vmem:[#allocation7 + $0x328] sm:$0xff]
    %v566 = vld [vmem:[#allocation7 + $0x330] sm:$0xff]
    %v567 = vld [vmem:[#allocation7 + $0x338] sm:$0xff]
    %v568 = vld [vmem:[#allocation7 + $0x340] sm:$0xff]
    %v569 = vld [vmem:[#allocation7 + $0x348] sm:$0xff]
    %v570 = vld [vmem:[#allocation7 + $0x350] sm:$0xff]
    %v571 = vld [vmem:[#allocation7 + $0x358] sm:$0xff]
    %v572 = vld [vmem:[#allocation7 + $0x360] sm:$0xff]
    %v573 = vld [vmem:[#allocation7 + $0x368] sm:$0xff]
    %v574 = vld [vmem:[#allocation7 + $0x370] sm:$0xff]
    %v575 = vld [vmem:[#allocation7 + $0x378] sm:$0xff]
    %v576 = vld [vmem:[#allocation7 + $0x380] sm:$0xff]
    %v577 = vld [vmem:[#allocation7 + $0x388] sm:$0xff]
    %v578 = vld [vmem:[#allocation7 + $0x390] sm:$0xff]
    %v579 = vld [vmem:[#allocation7 + $0x398] sm:$0xff]
    %v580 = vld [vmem:[#allocation7 + $0x3a0] sm:$0xff]
    %v581 = vld [vmem:[#allocation7 + $0x3a8] sm:$0xff]
    %v582 = vld [vmem:[#allocation7 + $0x3b0] sm:$0xff]
    %v583 = vld [vmem:[#allocation7 + $0x3b8] sm:$0xff]
    %v584 = vld [vmem:[#allocation7 + $0x3c0] sm:$0xff]
    %v585 = vld [vmem:[#allocation7 + $0x3c8] sm:$0xff]
    %v586 = vld [vmem:[#allocation7 + $0x3d0] sm:$0xff]
    %v587 = vld [vmem:[#allocation7 + $0x3d8] sm:$0xff]
    %v588 = vld [vmem:[#allocation7 + $0x3e0] sm:$0xff]
    %v589 = vld [vmem:[#allocation7 + $0x3e8] sm:$0xff]
    %v590 = vld [vmem:[#allocation7 + $0x3f0] sm:$0xff]
    %v591 = vld [vmem:[#allocation7 + $0x3f8] sm:$0xff]
    %v592 = vld [vmem:[#allocation7 + $0x400] sm:$0xff]
    %v593 = vld [vmem:[#allocation7 + $0x408] sm:$0xff]
    %v594 = vld [vmem:[#allocation7 + $0x410] sm:$0xff]
    %v595 = vld [vmem:[#allocation7 + $0x418] sm:$0xff]
    %v596 = vld [vmem:[#allocation7 + $0x420] sm:$0xff]
    %v597 = vld [vmem:[#allocation7 + $0x428] sm:$0xff]
    %v598 = vld [vmem:[#allocation7 + $0x430] sm:$0xff]
    %v599 = vld [vmem:[#allocation7 + $0x438] sm:$0xff]
    %v600 = vld [vmem:[#allocation7 + $0x440] sm:$0xff]
    %v601 = vld [vmem:[#allocation7 + $0x448] sm:$0xff]
    %v602 = vld [vmem:[#allocation7 + $0x450] sm:$0xff]
    %v603 = vld [vmem:[#allocation7 + $0x458] sm:$0xff]
    %v604 = vld [vmem:[#allocation7 + $0x460] sm:$0xff]
    %v605 = vld [vmem:[#allocation7 + $0x468] sm:$0xff]
    %v606 = vld [vmem:[#allocation7 + $0x470] sm:$0xff]
    %v607 = vld [vmem:[#allocation7 + $0x478] sm:$0xff]
    %v608 = vld [vmem:[#allocation7 + $0x480] sm:$0xff]
    %v609 = vld [vmem:[#allocation7 + $0x488] sm:$0xff]
    %v610 = vld [vmem:[#allocation7 + $0x490] sm:$0xff]
    %v611 = vld [vmem:[#allocation7 + $0x498] sm:$0xff]
    %v612 = vld [vmem:[#allocation7 + $0x4a0] sm:$0xff]
    %v613 = vld [vmem:[#allocation7 + $0x4a8] sm:$0xff]
    %v614 = vld [vmem:[#allocation7 + $0x4b0] sm:$0xff]
    %v615 = vld [vmem:[#allocation7 + $0x4b8] sm:$0xff]
    %v616 = vld [vmem:[#allocation7 + $0x4c0] sm:$0xff]
    %v617 = vld [vmem:[#allocation7 + $0x4c8] sm:$0xff]
    %v618 = vld [vmem:[#allocation7 + $0x4d0] sm:$0xff]
    %v619 = vld [vmem:[#allocation7 + $0x4d8] sm:$0xff]
    %v620 = vld [vmem:[#allocation7 + $0x4e0] sm:$0xff]
    %v621 = vld [vmem:[#allocation7 + $0x4e8] sm:$0xff]
    %v622 = vld [vmem:[#allocation7 + $0x4f0] sm:$0xff]
    %v623 = vld [vmem:[#allocation7 + $0x4f8] sm:$0xff]
    %v624 = vunpack.c.l.s8.bf16 %v464
    %v625 = vunpack.c.l.s8.bf16 %v465
    %v626 = vunpack.c.l.s8.bf16 %v466
    %v627 = vunpack.c.l.s8.bf16 %v467
    %v628 = vunpack.c.l.s8.bf16 %v468
    %v629 = vunpack.c.h.s8.bf16 %v464
    %v630 = vunpack.c.h.s8.bf16 %v465
    %v631 = vunpack.c.h.s8.bf16 %v466
    %v632 = vunpack.c.h.s8.bf16 %v467
    %v633 = vunpack.c.h.s8.bf16 %v468
    %v634 = vunpack.c.l.s8.bf16 %v469
    %v635 = vunpack.c.l.s8.bf16 %v470
    %v636 = vunpack.c.l.s8.bf16 %v471
    %v637 = vunpack.c.l.s8.bf16 %v472
    %v638 = vunpack.c.l.s8.bf16 %v473
    %v639 = vunpack.c.h.s8.bf16 %v469
    %v640 = vunpack.c.h.s8.bf16 %v470
    %v641 = vunpack.c.h.s8.bf16 %v471
    %v642 = vunpack.c.h.s8.bf16 %v472
    %v643 = vunpack.c.h.s8.bf16 %v473
    %v644 = vunpack.c.l.s8.bf16 %v474
    %v645 = vunpack.c.l.s8.bf16 %v475
    %v646 = vunpack.c.l.s8.bf16 %v476
    %v647 = vunpack.c.l.s8.bf16 %v477
    %v648 = vunpack.c.l.s8.bf16 %v478
    %v649 = vunpack.c.h.s8.bf16 %v474
    %v650 = vunpack.c.h.s8.bf16 %v475
    %v651 = vunpack.c.h.s8.bf16 %v476
    %v652 = vunpack.c.h.s8.bf16 %v477
    %v653 = vunpack.c.h.s8.bf16 %v478
    %v654 = vunpack.c.l.s8.bf16 %v479
    %v655 = vunpack.c.l.s8.bf16 %v480
    %v656 = vunpack.c.l.s8.bf16 %v481
    %v657 = vunpack.c.l.s8.bf16 %v482
    %v658 = vunpack.c.l.s8.bf16 %v483
    %v659 = vunpack.c.h.s8.bf16 %v479
    %v660 = vunpack.c.h.s8.bf16 %v480
    %v661 = vunpack.c.h.s8.bf16 %v481
    %v662 = vunpack.c.h.s8.bf16 %v482
    %v663 = vunpack.c.h.s8.bf16 %v483
    %v664 = vunpack.c.l.s8.bf16 %v484
    %v665 = vunpack.c.l.s8.bf16 %v485
    %v666 = vunpack.c.l.s8.bf16 %v486
    %v667 = vunpack.c.l.s8.bf16 %v487
    %v668 = vunpack.c.l.s8.bf16 %v488
    %v669 = vunpack.c.h.s8.bf16 %v484
    %v670 = vunpack.c.h.s8.bf16 %v485
    %v671 = vunpack.c.h.s8.bf16 %v486
    %v672 = vunpack.c.h.s8.bf16 %v487
    %v673 = vunpack.c.h.s8.bf16 %v488
    %v674 = vunpack.c.l.s8.bf16 %v489
    %v675 = vunpack.c.l.s8.bf16 %v490
    %v676 = vunpack.c.l.s8.bf16 %v491
    %v677 = vunpack.c.l.s8.bf16 %v492
    %v678 = vunpack.c.l.s8.bf16 %v493
    %v679 = vunpack.c.h.s8.bf16 %v489
    %v680 = vunpack.c.h.s8.bf16 %v490
    %v681 = vunpack.c.h.s8.bf16 %v491
    %v682 = vunpack.c.h.s8.bf16 %v492
    %v683 = vunpack.c.h.s8.bf16 %v493
    %v684 = vunpack.c.l.s8.bf16 %v494
    %v685 = vunpack.c.l.s8.bf16 %v495
    %v686 = vunpack.c.l.s8.bf16 %v496
    %v687 = vunpack.c.l.s8.bf16 %v497
    %v688 = vunpack.c.l.s8.bf16 %v498
    %v689 = vunpack.c.h.s8.bf16 %v494
    %v690 = vunpack.c.h.s8.bf16 %v495
    %v691 = vunpack.c.h.s8.bf16 %v496
    %v692 = vunpack.c.h.s8.bf16 %v497
    %v693 = vunpack.c.h.s8.bf16 %v498
    %v694 = vunpack.c.l.s8.bf16 %v499
    %v695 = vunpack.c.l.s8.bf16 %v500
    %v696 = vunpack.c.l.s8.bf16 %v501
    %v697 = vunpack.c.l.s8.bf16 %v502
    %v698 = vunpack.c.l.s8.bf16 %v503
    %v699 = vunpack.c.h.s8.bf16 %v499
    %v700 = vunpack.c.h.s8.bf16 %v500
    %v701 = vunpack.c.h.s8.bf16 %v501
    %v702 = vunpack.c.h.s8.bf16 %v502
    %v703 = vunpack.c.h.s8.bf16 %v503
    %v704 = vunpack.c.l.s8.bf16 %v504
    %v705 = vunpack.c.l.s8.bf16 %v505
    %v706 = vunpack.c.l.s8.bf16 %v506
    %v707 = vunpack.c.l.s8.bf16 %v507
    %v708 = vunpack.c.l.s8.bf16 %v508
    %v709 = vunpack.c.h.s8.bf16 %v504
    %v710 = vunpack.c.h.s8.bf16 %v505
    %v711 = vunpack.c.h.s8.bf16 %v506
    %v712 = vunpack.c.h.s8.bf16 %v507
    %v713 = vunpack.c.h.s8.bf16 %v508
    %v714 = vunpack.c.l.s8.bf16 %v509
    %v715 = vunpack.c.l.s8.bf16 %v510
    %v716 = vunpack.c.l.s8.bf16 %v511
    %v717 = vunpack.c.l.s8.bf16 %v512
    %v718 = vunpack.c.l.s8.bf16 %v513
    %v719 = vunpack.c.h.s8.bf16 %v509
    %v720 = vunpack.c.h.s8.bf16 %v510
    %v721 = vunpack.c.h.s8.bf16 %v511
    %v722 = vunpack.c.h.s8.bf16 %v512
    %v723 = vunpack.c.h.s8.bf16 %v513
    %v724 = vunpack.c.l.s8.bf16 %v514
    %v725 = vunpack.c.l.s8.bf16 %v515
    %v726 = vunpack.c.l.s8.bf16 %v516
    %v727 = vunpack.c.l.s8.bf16 %v517
    %v728 = vunpack.c.l.s8.bf16 %v518
    %v729 = vunpack.c.h.s8.bf16 %v514
    %v730 = vunpack.c.h.s8.bf16 %v515
    %v731 = vunpack.c.h.s8.bf16 %v516
    %v732 = vunpack.c.h.s8.bf16 %v517
    %v733 = vunpack.c.h.s8.bf16 %v518
    %v734 = vunpack.c.l.s8.bf16 %v519
    %v735 = vunpack.c.l.s8.bf16 %v520
    %v736 = vunpack.c.l.s8.bf16 %v521
    %v737 = vunpack.c.l.s8.bf16 %v522
    %v738 = vunpack.c.l.s8.bf16 %v523
    %v739 = vunpack.c.h.s8.bf16 %v519
    %v740 = vunpack.c.h.s8.bf16 %v520
    %v741 = vunpack.c.h.s8.bf16 %v521
    %v742 = vunpack.c.h.s8.bf16 %v522
    %v743 = vunpack.c.h.s8.bf16 %v523
    %v744 = vunpack.c.l.s8.bf16 %v524
    %v745 = vunpack.c.l.s8.bf16 %v525
    %v746 = vunpack.c.l.s8.bf16 %v526
    %v747 = vunpack.c.l.s8.bf16 %v527
    %v748 = vunpack.c.l.s8.bf16 %v528
    %v749 = vunpack.c.h.s8.bf16 %v524
    %v750 = vunpack.c.h.s8.bf16 %v525
    %v751 = vunpack.c.h.s8.bf16 %v526
    %v752 = vunpack.c.h.s8.bf16 %v527
    %v753 = vunpack.c.h.s8.bf16 %v528
    %v754 = vunpack.c.l.s8.bf16 %v529
    %v755 = vunpack.c.l.s8.bf16 %v530
    %v756 = vunpack.c.l.s8.bf16 %v531
    %v757 = vunpack.c.l.s8.bf16 %v532
    %v758 = vunpack.c.l.s8.bf16 %v533
    %v759 = vunpack.c.h.s8.bf16 %v529
    %v760 = vunpack.c.h.s8.bf16 %v530
    %v761 = vunpack.c.h.s8.bf16 %v531
    %v762 = vunpack.c.h.s8.bf16 %v532
    %v763 = vunpack.c.h.s8.bf16 %v533
    %v764 = vunpack.c.l.s8.bf16 %v534
    %v765 = vunpack.c.l.s8.bf16 %v535
    %v766 = vunpack.c.l.s8.bf16 %v536
    %v767 = vunpack.c.l.s8.bf16 %v537
    %v768 = vunpack.c.l.s8.bf16 %v538
    %v769 = vunpack.c.h.s8.bf16 %v534
    %v770 = vunpack.c.h.s8.bf16 %v535
    %v771 = vunpack.c.h.s8.bf16 %v536
    %v772 = vunpack.c.h.s8.bf16 %v537
    %v773 = vunpack.c.h.s8.bf16 %v538
    %v774 = vunpack.c.l.s8.bf16 %v539
    %v775 = vunpack.c.l.s8.bf16 %v540
    %v776 = vunpack.c.l.s8.bf16 %v541
    %v777 = vunpack.c.l.s8.bf16 %v542
    %v778 = vunpack.c.l.s8.bf16 %v543
    %v779 = vunpack.c.h.s8.bf16 %v539
    %v780 = vunpack.c.h.s8.bf16 %v540
    %v781 = vunpack.c.h.s8.bf16 %v541
    %v782 = vunpack.c.h.s8.bf16 %v542
    %v783 = vunpack.c.h.s8.bf16 %v543
    %v784 = vunpack.c.l.s8.bf16 %v544
    %v785 = vunpack.c.l.s8.bf16 %v545
    %v786 = vunpack.c.l.s8.bf16 %v546
    %v787 = vunpack.c.l.s8.bf16 %v547
    %v788 = vunpack.c.l.s8.bf16 %v548
    %v789 = vunpack.c.h.s8.bf16 %v544
    %v790 = vunpack.c.h.s8.bf16 %v545
    %v791 = vunpack.c.h.s8.bf16 %v546
    %v792 = vunpack.c.h.s8.bf16 %v547
    %v793 = vunpack.c.h.s8.bf16 %v548
    %v794 = vunpack.c.l.s8.bf16 %v549
    %v795 = vunpack.c.l.s8.bf16 %v550
    %v796 = vunpack.c.l.s8.bf16 %v551
    %v797 = vunpack.c.l.s8.bf16 %v552
    %v798 = vunpack.c.l.s8.bf16 %v553
    %v799 = vunpack.c.h.s8.bf16 %v549
    %v800 = vunpack.c.h.s8.bf16 %v550
    %v801 = vunpack.c.h.s8.bf16 %v551
    %v802 = vunpack.c.h.s8.bf16 %v552
    %v803 = vunpack.c.h.s8.bf16 %v553
    %v804 = vunpack.c.l.s8.bf16 %v554
    %v805 = vunpack.c.l.s8.bf16 %v555
    %v806 = vunpack.c.l.s8.bf16 %v556
    %v807 = vunpack.c.l.s8.bf16 %v557
    %v808 = vunpack.c.l.s8.bf16 %v558
    %v809 = vunpack.c.h.s8.bf16 %v554
    %v810 = vunpack.c.h.s8.bf16 %v555
    %v811 = vunpack.c.h.s8.bf16 %v556
    %v812 = vunpack.c.h.s8.bf16 %v557
    %v813 = vunpack.c.h.s8.bf16 %v558
    %v814 = vunpack.c.l.s8.bf16 %v559
    %v815 = vunpack.c.l.s8.bf16 %v560
    %v816 = vunpack.c.l.s8.bf16 %v561
    %v817 = vunpack.c.l.s8.bf16 %v562
    %v818 = vunpack.c.l.s8.bf16 %v563
    %v819 = vunpack.c.h.s8.bf16 %v559
    %v820 = vunpack.c.h.s8.bf16 %v560
    %v821 = vunpack.c.h.s8.bf16 %v561
    %v822 = vunpack.c.h.s8.bf16 %v562
    %v823 = vunpack.c.h.s8.bf16 %v563
    %v824 = vunpack.c.l.s8.bf16 %v564
    %v825 = vunpack.c.l.s8.bf16 %v565
    %v826 = vunpack.c.l.s8.bf16 %v566
    %v827 = vunpack.c.l.s8.bf16 %v567
    %v828 = vunpack.c.l.s8.bf16 %v568
    %v829 = vunpack.c.h.s8.bf16 %v564
    %v830 = vunpack.c.h.s8.bf16 %v565
    %v831 = vunpack.c.h.s8.bf16 %v566
    %v832 = vunpack.c.h.s8.bf16 %v567
    %v833 = vunpack.c.h.s8.bf16 %v568
    %v834 = vunpack.c.l.s8.bf16 %v569
    %v835 = vunpack.c.l.s8.bf16 %v570
    %v836 = vunpack.c.l.s8.bf16 %v571
    %v837 = vunpack.c.l.s8.bf16 %v572
    %v838 = vunpack.c.l.s8.bf16 %v573
    %v839 = vunpack.c.h.s8.bf16 %v569
    %v840 = vunpack.c.h.s8.bf16 %v570
    %v841 = vunpack.c.h.s8.bf16 %v571
    %v842 = vunpack.c.h.s8.bf16 %v572
    %v843 = vunpack.c.h.s8.bf16 %v573
    %v844 = vunpack.c.l.s8.bf16 %v574
    %v845 = vunpack.c.l.s8.bf16 %v575
    %v846 = vunpack.c.l.s8.bf16 %v576
    %v847 = vunpack.c.l.s8.bf16 %v577
    %v848 = vunpack.c.l.s8.bf16 %v578
    %v849 = vunpack.c.h.s8.bf16 %v574
    %v850 = vunpack.c.h.s8.bf16 %v575
    %v851 = vunpack.c.h.s8.bf16 %v576
    %v852 = vunpack.c.h.s8.bf16 %v577
    %v853 = vunpack.c.h.s8.bf16 %v578
    %v854 = vunpack.c.l.s8.bf16 %v579
    %v855 = vunpack.c.l.s8.bf16 %v580
    %v856 = vunpack.c.l.s8.bf16 %v581
    %v857 = vunpack.c.l.s8.bf16 %v582
    %v858 = vunpack.c.l.s8.bf16 %v583
    %v859 = vunpack.c.h.s8.bf16 %v579
    %v860 = vunpack.c.h.s8.bf16 %v580
    %v861 = vunpack.c.h.s8.bf16 %v581
    %v862 = vunpack.c.h.s8.bf16 %v582
    %v863 = vunpack.c.h.s8.bf16 %v583
    %v864 = vunpack.c.l.s8.bf16 %v584
    %v865 = vunpack.c.l.s8.bf16 %v585
    %v866 = vunpack.c.l.s8.bf16 %v586
    %v867 = vunpack.c.l.s8.bf16 %v587
    %v868 = vunpack.c.l.s8.bf16 %v588
    %v869 = vunpack.c.h.s8.bf16 %v584
    %v870 = vunpack.c.h.s8.bf16 %v585
    %v871 = vunpack.c.h.s8.bf16 %v586
    %v872 = vunpack.c.h.s8.bf16 %v587
    %v873 = vunpack.c.h.s8.bf16 %v588
    %v874 = vunpack.c.l.s8.bf16 %v589
    %v875 = vunpack.c.l.s8.bf16 %v590
    %v876 = vunpack.c.l.s8.bf16 %v591
    %v877 = vunpack.c.l.s8.bf16 %v592
    %v878 = vunpack.c.l.s8.bf16 %v593
    %v879 = vunpack.c.h.s8.bf16 %v589
    %v880 = vunpack.c.h.s8.bf16 %v590
    %v881 = vunpack.c.h.s8.bf16 %v591
    %v882 = vunpack.c.h.s8.bf16 %v592
    %v883 = vunpack.c.h.s8.bf16 %v593
    %v884 = vunpack.c.l.s8.bf16 %v594
    %v885 = vunpack.c.l.s8.bf16 %v595
    %v886 = vunpack.c.l.s8.bf16 %v596
    %v887 = vunpack.c.l.s8.bf16 %v597
    %v888 = vunpack.c.l.s8.bf16 %v598
    %v889 = vunpack.c.h.s8.bf16 %v594
    %v890 = vunpack.c.h.s8.bf16 %v595
    %v891 = vunpack.c.h.s8.bf16 %v596
    %v892 = vunpack.c.h.s8.bf16 %v597
    %v893 = vunpack.c.h.s8.bf16 %v598
    %v894 = vunpack.c.l.s8.bf16 %v599
    %v895 = vunpack.c.l.s8.bf16 %v600
    %v896 = vunpack.c.l.s8.bf16 %v601
    %v897 = vunpack.c.l.s8.bf16 %v602
    %v898 = vunpack.c.l.s8.bf16 %v603
    %v899 = vunpack.c.h.s8.bf16 %v599
    %v900 = vunpack.c.h.s8.bf16 %v600
    %v901 = vunpack.c.h.s8.bf16 %v601
    %v902 = vunpack.c.h.s8.bf16 %v602
    %v903 = vunpack.c.h.s8.bf16 %v603
    %v904 = vunpack.c.l.s8.bf16 %v604
    %v905 = vunpack.c.l.s8.bf16 %v605
    %v906 = vunpack.c.l.s8.bf16 %v606
    %v907 = vunpack.c.l.s8.bf16 %v607
    %v908 = vunpack.c.l.s8.bf16 %v608
    %v909 = vunpack.c.h.s8.bf16 %v604
    %v910 = vunpack.c.h.s8.bf16 %v605
    %v911 = vunpack.c.h.s8.bf16 %v606
    %v912 = vunpack.c.h.s8.bf16 %v607
    %v913 = vunpack.c.h.s8.bf16 %v608
    %v914 = vunpack.c.l.s8.bf16 %v609
    %v915 = vunpack.c.l.s8.bf16 %v610
    %v916 = vunpack.c.l.s8.bf16 %v611
    %v917 = vunpack.c.l.s8.bf16 %v612
    %v918 = vunpack.c.l.s8.bf16 %v613
    %v919 = vunpack.c.h.s8.bf16 %v609
    %v920 = vunpack.c.h.s8.bf16 %v610
    %v921 = vunpack.c.h.s8.bf16 %v611
    %v922 = vunpack.c.h.s8.bf16 %v612
    %v923 = vunpack.c.h.s8.bf16 %v613
    %v924 = vunpack.c.l.s8.bf16 %v614
    %v925 = vunpack.c.l.s8.bf16 %v615
    %v926 = vunpack.c.l.s8.bf16 %v616
    %v927 = vunpack.c.l.s8.bf16 %v617
    %v928 = vunpack.c.l.s8.bf16 %v618
    %v929 = vunpack.c.h.s8.bf16 %v614
    %v930 = vunpack.c.h.s8.bf16 %v615
    %v931 = vunpack.c.h.s8.bf16 %v616
    %v932 = vunpack.c.h.s8.bf16 %v617
    %v933 = vunpack.c.h.s8.bf16 %v618
    %v934 = vunpack.c.l.s8.bf16 %v619
    %v935 = vunpack.c.l.s8.bf16 %v620
    %v936 = vunpack.c.l.s8.bf16 %v621
    %v937 = vunpack.c.l.s8.bf16 %v622
    %v938 = vunpack.c.l.s8.bf16 %v623
    %v939 = vunpack.c.h.s8.bf16 %v619
    %v940 = vunpack.c.h.s8.bf16 %v620
    %v941 = vunpack.c.h.s8.bf16 %v621
    %v942 = vunpack.c.h.s8.bf16 %v622
    %v943 = vunpack.c.h.s8.bf16 %v623
    %v944 = vpack.c.bf16 %v449, %v449
    %v945 = vpack.c.bf16 %v451, %v451
    %v946 = vpack.c.bf16 %v453, %v453
    %v947 = vpack.c.bf16 %v455, %v455
    %v948 = vpack.c.bf16 %v457, %v457
    %v949 = vpack.c.bf16 %v459, %v459
    %v950 = vpack.c.bf16 %v461, %v461
    %v951 = vpack.c.bf16 %v463, %v463
    %952 = vmatprep.subr.bf16.mxu0 %v660
    %953 = vmatpush1.bf16.msra.mxu0 %v659
    %954 = vmatprep.subr.bf16.mxu0 %v655
    %955 = vmatpush1.bf16.msra.mxu0 %v654
    %956 = vmatprep.subr.bf16.mxu0 %v650
    %957 = vmatpush1.bf16.msra.mxu0 %v649
    %958 = vmatprep.subr.bf16.mxu0 %v645
    %959 = vmatpush1.bf16.msra.mxu0 %v644
    %960 = vmatprep.subr.bf16.mxu0 %v640
    %961 = vmatpush1.bf16.msra.mxu0 %v639
    %962 = vmatprep.subr.bf16.mxu0 %v635
    %963 = vmatpush1.bf16.msra.mxu0 %v634
    %964 = vmatprep.subr.bf16.mxu0 %v630
    %965 = vmatpush1.bf16.msra.mxu0 %v629
    %966 = vmatprep.subr.bf16.mxu0 %v625
    %967 = vmatpush1.bf16.msra.mxu0 %v624
    %968 = vmatprep.subr.bf16.mxu0 %v700
    %969 = vmatpush2.bf16.msra.mxu0 %v699
    %970 = vmatprep.subr.bf16.mxu0 %v695
    %971 = vmatpush2.bf16.msra.mxu0 %v694
    %972 = vmatprep.subr.bf16.mxu0 %v690
    %973 = vmatpush2.bf16.msra.mxu0 %v689
    %974 = vmatprep.subr.bf16.mxu0 %v685
    %975 = vmatpush2.bf16.msra.mxu0 %v684
    %976 = vmatprep.subr.bf16.mxu0 %v680
    %977 = vmatpush2.bf16.msra.mxu0 %v679
    %978 = vmatprep.subr.bf16.mxu0 %v675
    %979 = vmatpush2.bf16.msra.mxu0 %v674
    %980 = vmatprep.subr.bf16.mxu0 %v670
    %981 = vmatpush2.bf16.msra.mxu0 %v669
    %982 = vmatprep.subr.bf16.mxu0 %v665
    %983 = vmatpush2.bf16.msra.mxu0 %v664
    %984 = vmatprep.mubr.bf16.mxu0 %v945
    %985 = vmatmul.mubr.bf16.gmra.mxu0 %v944
    %v986 = vpop.f32.mrf.mxu0
    %v987 = vadd.f32 0.0, %v986
    %v988 = vpop.f32.mrf.mxu0
    %v989 = vadd.f32 0.0, %v988
    %v990 = vpop.f32.mrf.mxu0
    %v991 = vpop.f32.mrf.mxu0
    %992 = vdwg.mxu0
    %993 = vmatprep.subr.bf16.mxu0 %v740
    %994 = vmatpush1.bf16.msra.mxu0 %v739
    %995 = vmatprep.subr.bf16.mxu0 %v735
    %996 = vmatpush1.bf16.msra.mxu0 %v734
    %997 = vmatprep.subr.bf16.mxu0 %v730
    %998 = vmatpush1.bf16.msra.mxu0 %v729
    %999 = vmatprep.subr.bf16.mxu0 %v725
    %1000 = vmatpush1.bf16.msra.mxu0 %v724
    %1001 = vmatprep.subr.bf16.mxu0 %v720
    %1002 = vmatpush1.bf16.msra.mxu0 %v719
    %1003 = vmatprep.subr.bf16.mxu0 %v715
    %1004 = vmatpush1.bf16.msra.mxu0 %v714
    %1005 = vmatprep.subr.bf16.mxu0 %v710
    %1006 = vmatpush1.bf16.msra.mxu0 %v709
    %1007 = vmatprep.subr.bf16.mxu0 %v705
    %1008 = vmatpush1.bf16.msra.mxu0 %v704
    %1009 = vmatprep.subr.bf16.mxu0 %v780
    %1010 = vmatpush2.bf16.msra.mxu0 %v779
    %1011 = vmatprep.subr.bf16.mxu0 %v775
    %1012 = vmatpush2.bf16.msra.mxu0 %v774
    %1013 = vmatprep.subr.bf16.mxu0 %v770
    %1014 = vmatpush2.bf16.msra.mxu0 %v769
    %1015 = vmatprep.subr.bf16.mxu0 %v765
    %1016 = vmatpush2.bf16.msra.mxu0 %v764
    %1017 = vmatprep.subr.bf16.mxu0 %v760
    %1018 = vmatpush2.bf16.msra.mxu0 %v759
    %1019 = vmatprep.subr.bf16.mxu0 %v755
    %1020 = vmatpush2.bf16.msra.mxu0 %v754
    %1021 = vmatprep.subr.bf16.mxu0 %v750
    %1022 = vmatpush2.bf16.msra.mxu0 %v749
    %1023 = vmatprep.subr.bf16.mxu0 %v745
    %1024 = vmatpush2.bf16.msra.mxu0 %v744
    %1025 = vmatprep.mubr.bf16.mxu0 %v947
    %1026 = vmatmul.mubr.bf16.gmra.mxu0 %v946
    %v1027 = vpop.f32.mrf.mxu0
    %v1028 = vadd.f32 %v987, %v1027
    %v1029 = vpop.f32.mrf.mxu0
    %v1030 = vadd.f32 %v989, %v1029
    %v1031 = vpop.f32.mrf.mxu0
    %v1032 = vpop.f32.mrf.mxu0
    %1033 = vdwg.mxu0
    %1034 = vmatprep.subr.bf16.mxu0 %v820
    %1035 = vmatpush1.bf16.msra.mxu0 %v819
    %1036 = vmatprep.subr.bf16.mxu0 %v815
    %1037 = vmatpush1.bf16.msra.mxu0 %v814
    %1038 = vmatprep.subr.bf16.mxu0 %v810
    %1039 = vmatpush1.bf16.msra.mxu0 %v809
    %1040 = vmatprep.subr.bf16.mxu0 %v805
    %1041 = vmatpush1.bf16.msra.mxu0 %v804
    %1042 = vmatprep.subr.bf16.mxu0 %v800
    %1043 = vmatpush1.bf16.msra.mxu0 %v799
    %1044 = vmatprep.subr.bf16.mxu0 %v795
    %1045 = vmatpush1.bf16.msra.mxu0 %v794
    %1046 = vmatprep.subr.bf16.mxu0 %v790
    %1047 = vmatpush1.bf16.msra.mxu0 %v789
    %1048 = vmatprep.subr.bf16.mxu0 %v785
    %1049 = vmatpush1.bf16.msra.mxu0 %v784
    %1050 = vmatprep.subr.bf16.mxu0 %v860
    %1051 = vmatpush2.bf16.msra.mxu0 %v859
    %1052 = vmatprep.subr.bf16.mxu0 %v855
    %1053 = vmatpush2.bf16.msra.mxu0 %v854
    %1054 = vmatprep.subr.bf16.mxu0 %v850
    %1055 = vmatpush2.bf16.msra.mxu0 %v849
    %1056 = vmatprep.subr.bf16.mxu0 %v845
    %1057 = vmatpush2.bf16.msra.mxu0 %v844
    %1058 = vmatprep.subr.bf16.mxu0 %v840
    %1059 = vmatpush2.bf16.msra.mxu0 %v839
    %1060 = vmatprep.subr.bf16.mxu0 %v835
    %1061 = vmatpush2.bf16.msra.mxu0 %v834
    %1062 = vmatprep.subr.bf16.mxu0 %v830
    %1063 = vmatpush2.bf16.msra.mxu0 %v829
    %1064 = vmatprep.subr.bf16.mxu0 %v825
    %1065 = vmatpush2.bf16.msra.mxu0 %v824
    %1066 = vmatprep.mubr.bf16.mxu0 %v949
    %1067 = vmatmul.mubr.bf16.gmra.mxu0 %v948
    %v1068 = vpop.f32.mrf.mxu0
    %v1069 = vadd.f32 %v1028, %v1068
    %v1070 = vpop.f32.mrf.mxu0
    %v1071 = vadd.f32 %v1030, %v1070
    %v1072 = vpop.f32.mrf.mxu0
    %v1073 = vpop.f32.mrf.mxu0
    %1074 = vdwg.mxu0
    %1075 = vmatprep.subr.bf16.mxu0 %v900
    %1076 = vmatpush1.bf16.msra.mxu0 %v899
    %1077 = vmatprep.subr.bf16.mxu0 %v895
    %1078 = vmatpush1.bf16.msra.mxu0 %v894
    %1079 = vmatprep.subr.bf16.mxu0 %v890
    %1080 = vmatpush1.bf16.msra.mxu0 %v889
    %1081 = vmatprep.subr.bf16.mxu0 %v885
    %1082 = vmatpush1.bf16.msra.mxu0 %v884
    %1083 = vmatprep.subr.bf16.mxu0 %v880
    %1084 = vmatpush1.bf16.msra.mxu0 %v879
    %1085 = vmatprep.subr.bf16.mxu0 %v875
    %1086 = vmatpush1.bf16.msra.mxu0 %v874
    %1087 = vmatprep.subr.bf16.mxu0 %v870
    %1088 = vmatpush1.bf16.msra.mxu0 %v869
    %1089 = vmatprep.subr.bf16.mxu0 %v865
    %1090 = vmatpush1.bf16.msra.mxu0 %v864
    %1091 = vmatprep.subr.bf16.mxu0 %v940
    %1092 = vmatpush2.bf16.msra.mxu0 %v939
    %1093 = vmatprep.subr.bf16.mxu0 %v935
    %1094 = vmatpush2.bf16.msra.mxu0 %v934
    %1095 = vmatprep.subr.bf16.mxu0 %v930
    %1096 = vmatpush2.bf16.msra.mxu0 %v929
    %1097 = vmatprep.subr.bf16.mxu0 %v925
    %1098 = vmatpush2.bf16.msra.mxu0 %v924
    %1099 = vmatprep.subr.bf16.mxu0 %v920
    %1100 = vmatpush2.bf16.msra.mxu0 %v919
    %1101 = vmatprep.subr.bf16.mxu0 %v915
    %1102 = vmatpush2.bf16.msra.mxu0 %v914
    %1103 = vmatprep.subr.bf16.mxu0 %v910
    %1104 = vmatpush2.bf16.msra.mxu0 %v909
    %1105 = vmatprep.subr.bf16.mxu0 %v905
    %1106 = vmatpush2.bf16.msra.mxu0 %v904
    %1107 = vmatprep.mubr.bf16.mxu0 %v951
    %1108 = vmatmul.mubr.bf16.gmra.mxu0 %v950
    %v1109 = vpop.f32.mrf.mxu0
    %v1110 = vadd.f32 %v1069, %v1109
    %v1111 = vpop.f32.mrf.mxu0
    %v1112 = vadd.f32 %v1071, %v1111
    %v1113 = vpop.f32.mrf.mxu0
    %v1114 = vpop.f32.mrf.mxu0
    %1115 = vdwg.mxu0
    %1116 = vmatprep.subr.bf16.mxu0 %v662
    %1117 = vmatpush1.bf16.msra.mxu0 %v661
    %1118 = vmatprep.subr.bf16.mxu0 %v657
    %1119 = vmatpush1.bf16.msra.mxu0 %v656
    %1120 = vmatprep.subr.bf16.mxu0 %v652
    %1121 = vmatpush1.bf16.msra.mxu0 %v651
    %1122 = vmatprep.subr.bf16.mxu0 %v647
    %1123 = vmatpush1.bf16.msra.mxu0 %v646
    %1124 = vmatprep.subr.bf16.mxu0 %v642
    %1125 = vmatpush1.bf16.msra.mxu0 %v641
    %1126 = vmatprep.subr.bf16.mxu0 %v637
    %1127 = vmatpush1.bf16.msra.mxu0 %v636
    %1128 = vmatprep.subr.bf16.mxu0 %v632
    %1129 = vmatpush1.bf16.msra.mxu0 %v631
    %1130 = vmatprep.subr.bf16.mxu0 %v627
    %1131 = vmatpush1.bf16.msra.mxu0 %v626
    %1132 = vmatprep.subr.bf16.mxu0 %v702
    %1133 = vmatpush2.bf16.msra.mxu0 %v701
    %1134 = vmatprep.subr.bf16.mxu0 %v697
    %1135 = vmatpush2.bf16.msra.mxu0 %v696
    %1136 = vmatprep.subr.bf16.mxu0 %v692
    %1137 = vmatpush2.bf16.msra.mxu0 %v691
    %1138 = vmatprep.subr.bf16.mxu0 %v687
    %1139 = vmatpush2.bf16.msra.mxu0 %v686
    %1140 = vmatprep.subr.bf16.mxu0 %v682
    %1141 = vmatpush2.bf16.msra.mxu0 %v681
    %1142 = vmatprep.subr.bf16.mxu0 %v677
    %1143 = vmatpush2.bf16.msra.mxu0 %v676
    %1144 = vmatprep.subr.bf16.mxu0 %v672
    %1145 = vmatpush2.bf16.msra.mxu0 %v671
    %1146 = vmatprep.subr.bf16.mxu0 %v667
    %1147 = vmatpush2.bf16.msra.mxu0 %v666
    %1148 = vmatprep.mubr.bf16.mxu0 %v945
    %1149 = vmatmul.mubr.bf16.gmra.mxu0 %v944
    %v1150 = vpop.f32.mrf.mxu0
    %v1151 = vadd.f32 0.0, %v1150
    %v1152 = vpop.f32.mrf.mxu0
    %v1153 = vadd.f32 0.0, %v1152
    %v1154 = vpop.f32.mrf.mxu0
    %v1155 = vpop.f32.mrf.mxu0
    %1156 = vdwg.mxu0
    %1157 = vmatprep.subr.bf16.mxu0 %v742
    %1158 = vmatpush1.bf16.msra.mxu0 %v741
    %1159 = vmatprep.subr.bf16.mxu0 %v737
    %1160 = vmatpush1.bf16.msra.mxu0 %v736
    %1161 = vmatprep.subr.bf16.mxu0 %v732
    %1162 = vmatpush1.bf16.msra.mxu0 %v731
    %1163 = vmatprep.subr.bf16.mxu0 %v727
    %1164 = vmatpush1.bf16.msra.mxu0 %v726
    %1165 = vmatprep.subr.bf16.mxu0 %v722
    %1166 = vmatpush1.bf16.msra.mxu0 %v721
    %1167 = vmatprep.subr.bf16.mxu0 %v717
    %1168 = vmatpush1.bf16.msra.mxu0 %v716
    %1169 = vmatprep.subr.bf16.mxu0 %v712
    %1170 = vmatpush1.bf16.msra.mxu0 %v711
    %1171 = vmatprep.subr.bf16.mxu0 %v707
    %1172 = vmatpush1.bf16.msra.mxu0 %v706
    %1173 = vmatprep.subr.bf16.mxu0 %v782
    %1174 = vmatpush2.bf16.msra.mxu0 %v781
    %1175 = vmatprep.subr.bf16.mxu0 %v777
    %1176 = vmatpush2.bf16.msra.mxu0 %v776
    %1177 = vmatprep.subr.bf16.mxu0 %v772
    %1178 = vmatpush2.bf16.msra.mxu0 %v771
    %1179 = vmatprep.subr.bf16.mxu0 %v767
    %1180 = vmatpush2.bf16.msra.mxu0 %v766
    %1181 = vmatprep.subr.bf16.mxu0 %v762
    %1182 = vmatpush2.bf16.msra.mxu0 %v761
    %1183 = vmatprep.subr.bf16.mxu0 %v757
    %1184 = vmatpush2.bf16.msra.mxu0 %v756
    %1185 = vmatprep.subr.bf16.mxu0 %v752
    %1186 = vmatpush2.bf16.msra.mxu0 %v751
    %1187 = vmatprep.subr.bf16.mxu0 %v747
    %1188 = vmatpush2.bf16.msra.mxu0 %v746
    %1189 = vmatprep.mubr.bf16.mxu0 %v947
    %1190 = vmatmul.mubr.bf16.gmra.mxu0 %v946
    %v1191 = vpop.f32.mrf.mxu0
    %v1192 = vadd.f32 %v1151, %v1191
    %v1193 = vpop.f32.mrf.mxu0
    %v1194 = vadd.f32 %v1153, %v1193
    %v1195 = vpop.f32.mrf.mxu0
    %v1196 = vpop.f32.mrf.mxu0
    %1197 = vdwg.mxu0
    %1198 = vmatprep.subr.bf16.mxu0 %v822
    %1199 = vmatpush1.bf16.msra.mxu0 %v821
    %1200 = vmatprep.subr.bf16.mxu0 %v817
    %1201 = vmatpush1.bf16.msra.mxu0 %v816
    %1202 = vmatprep.subr.bf16.mxu0 %v812
    %1203 = vmatpush1.bf16.msra.mxu0 %v811
    %1204 = vmatprep.subr.bf16.mxu0 %v807
    %1205 = vmatpush1.bf16.msra.mxu0 %v806
    %1206 = vmatprep.subr.bf16.mxu0 %v802
    %1207 = vmatpush1.bf16.msra.mxu0 %v801
    %1208 = vmatprep.subr.bf16.mxu0 %v797
    %1209 = vmatpush1.bf16.msra.mxu0 %v796
    %1210 = vmatprep.subr.bf16.mxu0 %v792
    %1211 = vmatpush1.bf16.msra.mxu0 %v791
    %1212 = vmatprep.subr.bf16.mxu0 %v787
    %1213 = vmatpush1.bf16.msra.mxu0 %v786
    %1214 = vmatprep.subr.bf16.mxu0 %v862
    %1215 = vmatpush2.bf16.msra.mxu0 %v861
    %1216 = vmatprep.subr.bf16.mxu0 %v857
    %1217 = vmatpush2.bf16.msra.mxu0 %v856
    %1218 = vmatprep.subr.bf16.mxu0 %v852
    %1219 = vmatpush2.bf16.msra.mxu0 %v851
    %1220 = vmatprep.subr.bf16.mxu0 %v847
    %1221 = vmatpush2.bf16.msra.mxu0 %v846
    %1222 = vmatprep.subr.bf16.mxu0 %v842
    %1223 = vmatpush2.bf16.msra.mxu0 %v841
    %1224 = vmatprep.subr.bf16.mxu0 %v837
    %1225 = vmatpush2.bf16.msra.mxu0 %v836
    %1226 = vmatprep.subr.bf16.mxu0 %v832
    %1227 = vmatpush2.bf16.msra.mxu0 %v831
    %1228 = vmatprep.subr.bf16.mxu0 %v827
    %1229 = vmatpush2.bf16.msra.mxu0 %v826
    %1230 = vmatprep.mubr.bf16.mxu0 %v949
    %1231 = vmatmul.mubr.bf16.gmra.mxu0 %v948
    %v1232 = vpop.f32.mrf.mxu0
    %v1233 = vadd.f32 %v1192, %v1232
    %v1234 = vpop.f32.mrf.mxu0
    %v1235 = vadd.f32 %v1194, %v1234
    %v1236 = vpop.f32.mrf.mxu0
    %v1237 = vpop.f32.mrf.mxu0
    %1238 = vdwg.mxu0
    %1239 = vmatprep.subr.bf16.mxu0 %v902
    %1240 = vmatpush1.bf16.msra.mxu0 %v901
    %1241 = vmatprep.subr.bf16.mxu0 %v897
    %1242 = vmatpush1.bf16.msra.mxu0 %v896
    %1243 = vmatprep.subr.bf16.mxu0 %v892
    %1244 = vmatpush1.bf16.msra.mxu0 %v891
    %1245 = vmatprep.subr.bf16.mxu0 %v887
    %1246 = vmatpush1.bf16.msra.mxu0 %v886
    %1247 = vmatprep.subr.bf16.mxu0 %v882
    %1248 = vmatpush1.bf16.msra.mxu0 %v881
    %1249 = vmatprep.subr.bf16.mxu0 %v877
    %1250 = vmatpush1.bf16.msra.mxu0 %v876
    %1251 = vmatprep.subr.bf16.mxu0 %v872
    %1252 = vmatpush1.bf16.msra.mxu0 %v871
    %1253 = vmatprep.subr.bf16.mxu0 %v867
    %1254 = vmatpush1.bf16.msra.mxu0 %v866
    %1255 = vmatprep.subr.bf16.mxu0 %v942
    %1256 = vmatpush2.bf16.msra.mxu0 %v941
    %1257 = vmatprep.subr.bf16.mxu0 %v937
    %1258 = vmatpush2.bf16.msra.mxu0 %v936
    %1259 = vmatprep.subr.bf16.mxu0 %v932
    %1260 = vmatpush2.bf16.msra.mxu0 %v931
    %1261 = vmatprep.subr.bf16.mxu0 %v927
    %1262 = vmatpush2.bf16.msra.mxu0 %v926
    %1263 = vmatprep.subr.bf16.mxu0 %v922
    %1264 = vmatpush2.bf16.msra.mxu0 %v921
    %1265 = vmatprep.subr.bf16.mxu0 %v917
    %1266 = vmatpush2.bf16.msra.mxu0 %v916
    %1267 = vmatprep.subr.bf16.mxu0 %v912
    %1268 = vmatpush2.bf16.msra.mxu0 %v911
    %1269 = vmatprep.subr.bf16.mxu0 %v907
    %1270 = vmatpush2.bf16.msra.mxu0 %v906
    %1271 = vmatprep.mubr.bf16.mxu0 %v951
    %1272 = vmatmul.mubr.bf16.gmra.mxu0 %v950
    %v1273 = vpop.f32.mrf.mxu0
    %v1274 = vadd.f32 %v1233, %v1273
    %v1275 = vpop.f32.mrf.mxu0
    %v1276 = vadd.f32 %v1235, %v1275
    %v1277 = vpop.f32.mrf.mxu0
    %v1278 = vpop.f32.mrf.mxu0
    %1279 = vdwg.mxu0
    %1280 = vmatprep.subr.bf16.mxu0 0
    %1281 = vmatpush1.bf16.msra.mxu0 %v663
    %1282 = vmatprep.subr.bf16.mxu0 0
    %1283 = vmatpush1.bf16.msra.mxu0 %v658
    %1284 = vmatprep.subr.bf16.mxu0 0
    %1285 = vmatpush1.bf16.msra.mxu0 %v653
    %1286 = vmatprep.subr.bf16.mxu0 0
    %1287 = vmatpush1.bf16.msra.mxu0 %v648
    %1288 = vmatprep.subr.bf16.mxu0 0
    %1289 = vmatpush1.bf16.msra.mxu0 %v643
    %1290 = vmatprep.subr.bf16.mxu0 0
    %1291 = vmatpush1.bf16.msra.mxu0 %v638
    %1292 = vmatprep.subr.bf16.mxu0 0
    %1293 = vmatpush1.bf16.msra.mxu0 %v633
    %1294 = vmatprep.subr.bf16.mxu0 0
    %1295 = vmatpush1.bf16.msra.mxu0 %v628
    %1296 = vmatprep.subr.bf16.mxu0 0
    %1297 = vmatpush2.bf16.msra.mxu0 %v703
    %1298 = vmatprep.subr.bf16.mxu0 0
    %1299 = vmatpush2.bf16.msra.mxu0 %v698
    %1300 = vmatprep.subr.bf16.mxu0 0
    %1301 = vmatpush2.bf16.msra.mxu0 %v693
    %1302 = vmatprep.subr.bf16.mxu0 0
    %1303 = vmatpush2.bf16.msra.mxu0 %v688
    %1304 = vmatprep.subr.bf16.mxu0 0
    %1305 = vmatpush2.bf16.msra.mxu0 %v683
    %1306 = vmatprep.subr.bf16.mxu0 0
    %1307 = vmatpush2.bf16.msra.mxu0 %v678
    %1308 = vmatprep.subr.bf16.mxu0 0
    %1309 = vmatpush2.bf16.msra.mxu0 %v673
    %1310 = vmatprep.subr.bf16.mxu0 0
    %1311 = vmatpush2.bf16.msra.mxu0 %v668
    %1312 = vmatprep.mubr.bf16.mxu0 %v945
    %1313 = vmatmul.mubr.bf16.gmra.mxu0 %v944
    %v1314 = vpop.f32.mrf.mxu0
    %v1315 = vadd.f32 0.0, %v1314
    %v1316 = vpop.f32.mrf.mxu0
    %v1317 = vpop.f32.mrf.mxu0
    %v1318 = vpop.f32.mrf.mxu0
    %1319 = vdwg.mxu0
    %1320 = vmatprep.subr.bf16.mxu0 0
    %1321 = vmatpush1.bf16.msra.mxu0 %v743
    %1322 = vmatprep.subr.bf16.mxu0 0
    %1323 = vmatpush1.bf16.msra.mxu0 %v738
    %1324 = vmatprep.subr.bf16.mxu0 0
    %1325 = vmatpush1.bf16.msra.mxu0 %v733
    %1326 = vmatprep.subr.bf16.mxu0 0
    %1327 = vmatpush1.bf16.msra.mxu0 %v728
    %1328 = vmatprep.subr.bf16.mxu0 0
    %1329 = vmatpush1.bf16.msra.mxu0 %v723
    %1330 = vmatprep.subr.bf16.mxu0 0
    %1331 = vmatpush1.bf16.msra.mxu0 %v718
    %1332 = vmatprep.subr.bf16.mxu0 0
    %1333 = vmatpush1.bf16.msra.mxu0 %v713
    %1334 = vmatprep.subr.bf16.mxu0 0
    %1335 = vmatpush1.bf16.msra.mxu0 %v708
    %1336 = vmatprep.subr.bf16.mxu0 0
    %1337 = vmatpush2.bf16.msra.mxu0 %v783
    %1338 = vmatprep.subr.bf16.mxu0 0
    %1339 = vmatpush2.bf16.msra.mxu0 %v778
    %1340 = vmatprep.subr.bf16.mxu0 0
    %1341 = vmatpush2.bf16.msra.mxu0 %v773
    %1342 = vmatprep.subr.bf16.mxu0 0
    %1343 = vmatpush2.bf16.msra.mxu0 %v768
    %1344 = vmatprep.subr.bf16.mxu0 0
    %1345 = vmatpush2.bf16.msra.mxu0 %v763
    %1346 = vmatprep.subr.bf16.mxu0 0
    %1347 = vmatpush2.bf16.msra.mxu0 %v758
    %1348 = vmatprep.subr.bf16.mxu0 0
    %1349 = vmatpush2.bf16.msra.mxu0 %v753
    %1350 = vmatprep.subr.bf16.mxu0 0
    %1351 = vmatpush2.bf16.msra.mxu0 %v748
    %1352 = vmatprep.mubr.bf16.mxu0 %v947
    %1353 = vmatmul.mubr.bf16.gmra.mxu0 %v946
    %v1354 = vpop.f32.mrf.mxu0
    %v1355 = vadd.f32 %v1315, %v1354
    %v1356 = vpop.f32.mrf.mxu0
    %v1357 = vpop.f32.mrf.mxu0
    %v1358 = vpop.f32.mrf.mxu0
    %1359 = vdwg.mxu0
    %1360 = vmatprep.subr.bf16.mxu0 0
    %1361 = vmatpush1.bf16.msra.mxu0 %v823
    %1362 = vmatprep.subr.bf16.mxu0 0
    %1363 = vmatpush1.bf16.msra.mxu0 %v818
    %1364 = vmatprep.subr.bf16.mxu0 0
    %1365 = vmatpush1.bf16.msra.mxu0 %v813
    %1366 = vmatprep.subr.bf16.mxu0 0
    %1367 = vmatpush1.bf16.msra.mxu0 %v808
    %1368 = vmatprep.subr.bf16.mxu0 0
    %1369 = vmatpush1.bf16.msra.mxu0 %v803
    %1370 = vmatprep.subr.bf16.mxu0 0
    %1371 = vmatpush1.bf16.msra.mxu0 %v798
    %1372 = vmatprep.subr.bf16.mxu0 0
    %1373 = vmatpush1.bf16.msra.mxu0 %v793
    %1374 = vmatprep.subr.bf16.mxu0 0
    %1375 = vmatpush1.bf16.msra.mxu0 %v788
    %1376 = vmatprep.subr.bf16.mxu0 0
    %1377 = vmatpush2.bf16.msra.mxu0 %v863
    %1378 = vmatprep.subr.bf16.mxu0 0
    %1379 = vmatpush2.bf16.msra.mxu0 %v858
    %1380 = vmatprep.subr.bf16.mxu0 0
    %1381 = vmatpush2.bf16.msra.mxu0 %v853
    %1382 = vmatprep.subr.bf16.mxu0 0
    %1383 = vmatpush2.bf16.msra.mxu0 %v848
    %1384 = vmatprep.subr.bf16.mxu0 0
    %1385 = vmatpush2.bf16.msra.mxu0 %v843
    %1386 = vmatprep.subr.bf16.mxu0 0
    %1387 = vmatpush2.bf16.msra.mxu0 %v838
    %1388 = vmatprep.subr.bf16.mxu0 0
    %1389 = vmatpush2.bf16.msra.mxu0 %v833
    %1390 = vmatprep.subr.bf16.mxu0 0
    %1391 = vmatpush2.bf16.msra.mxu0 %v828
    %1392 = vmatprep.mubr.bf16.mxu0 %v949
    %1393 = vmatmul.mubr.bf16.gmra.mxu0 %v948
    %v1394 = vpop.f32.mrf.mxu0
    %v1395 = vadd.f32 %v1355, %v1394
    %v1396 = vpop.f32.mrf.mxu0
    %v1397 = vpop.f32.mrf.mxu0
    %v1398 = vpop.f32.mrf.mxu0
    %1399 = vdwg.mxu0
    %1400 = vmatprep.subr.bf16.mxu0 0
    %1401 = vmatpush1.bf16.msra.mxu0 %v903
    %1402 = vmatprep.subr.bf16.mxu0 0
    %1403 = vmatpush1.bf16.msra.mxu0 %v898
    %1404 = vmatprep.subr.bf16.mxu0 0
    %1405 = vmatpush1.bf16.msra.mxu0 %v893
    %1406 = vmatprep.subr.bf16.mxu0 0
    %1407 = vmatpush1.bf16.msra.mxu0 %v888
    %1408 = vmatprep.subr.bf16.mxu0 0
    %1409 = vmatpush1.bf16.msra.mxu0 %v883
    %1410 = vmatprep.subr.bf16.mxu0 0
    %1411 = vmatpush1.bf16.msra.mxu0 %v878
    %1412 = vmatprep.subr.bf16.mxu0 0
    %1413 = vmatpush1.bf16.msra.mxu0 %v873
    %1414 = vmatprep.subr.bf16.mxu0 0
    %1415 = vmatpush1.bf16.msra.mxu0 %v868
    %1416 = vmatprep.subr.bf16.mxu0 0
    %1417 = vmatpush2.bf16.msra.mxu0 %v943
    %1418 = vmatprep.subr.bf16.mxu0 0
    %1419 = vmatpush2.bf16.msra.mxu0 %v938
    %1420 = vmatprep.subr.bf16.mxu0 0
    %1421 = vmatpush2.bf16.msra.mxu0 %v933
    %1422 = vmatprep.subr.bf16.mxu0 0
    %1423 = vmatpush2.bf16.msra.mxu0 %v928
    %1424 = vmatprep.subr.bf16.mxu0 0
    %1425 = vmatpush2.bf16.msra.mxu0 %v923
    %1426 = vmatprep.subr.bf16.mxu0 0
    %1427 = vmatpush2.bf16.msra.mxu0 %v918
    %1428 = vmatprep.subr.bf16.mxu0 0
    %1429 = vmatpush2.bf16.msra.mxu0 %v913
    %1430 = vmatprep.subr.bf16.mxu0 0
    %1431 = vmatpush2.bf16.msra.mxu0 %v908
    %1432 = vmatprep.mubr.bf16.mxu0 %v951
    %1433 = vmatmul.mubr.bf16.gmra.mxu0 %v950
    %v1434 = vpop.f32.mrf.mxu0
    %v1435 = vadd.f32 %v1395, %v1434
    %v1436 = vpop.f32.mrf.mxu0
    %v1437 = vpop.f32.mrf.mxu0
    %v1438 = vpop.f32.mrf.mxu0
    %1439 = vdwg.mxu0
    %v1441 = vlaneseq
    %v1442 = vshrl.u32 %v1441, 7
    %v1443 = vsub.s32 0, %v1442
    %v1444 = vrot.slane %v107, %v1443
    %v1445 = vlaneseq
    %v1446 = vshrl.u32 %v1445, 7
    %v1447 = vsub.s32 1, %v1446
    %v1448 = vrot.slane %v107, %v1447
    %v1449 = vlaneseq
    %v1450 = vshrl.u32 %v1449, 7
    %v1451 = vsub.s32 2, %v1450
    %v1452 = vrot.slane %v107, %v1451
    %v1453 = vlaneseq
    %v1454 = vshrl.u32 %v1453, 7
    %v1455 = vsub.s32 3, %v1454
    %v1456 = vrot.slane %v107, %v1455
    %v1457 = vlaneseq
    %v1458 = vshrl.u32 %v1457, 7
    %v1459 = vsub.s32 4, %v1458
    %v1460 = vrot.slane %v107, %v1459
    %v1466 = vmul.f32 %v1110, %v1444
    %v1467 = vmul.f32 %v1112, %v1448
    %v1468 = vmul.f32 %v1274, %v1452
    %v1469 = vmul.f32 %v1276, %v1456
    %v1470 = vmul.f32 %v1435, %v1460
    %v1472 = vlaneseq
    %v1473 = vshrl.u32 %v1472, 7
    %v1474 = vsub.s32 0, %v1473
    %v1475 = vrot.slane %v104, %v1474
    %v1476 = vlaneseq
    %v1477 = vshrl.u32 %v1476, 7
    %v1478 = vsub.s32 1, %v1477
    %v1479 = vrot.slane %v104, %v1478
    %v1480 = vlaneseq
    %v1481 = vshrl.u32 %v1480, 7
    %v1482 = vsub.s32 2, %v1481
    %v1483 = vrot.slane %v104, %v1482
    %v1484 = vlaneseq
    %v1485 = vshrl.u32 %v1484, 7
    %v1486 = vsub.s32 3, %v1485
    %v1487 = vrot.slane %v104, %v1486
    %v1488 = vlaneseq
    %v1489 = vshrl.u32 %v1488, 7
    %v1490 = vsub.s32 4, %v1489
    %v1491 = vrot.slane %v104, %v1490
    %v1497 = vadd.f32 %v1466, %v1475
    %v1498 = vadd.f32 %v1467, %v1479
    %v1499 = vadd.f32 %v1468, %v1483
    %v1500 = vadd.f32 %v1469, %v1487
    %v1501 = vadd.f32 %v1470, %v1491
    %v1502 = vxor.u32 %v1497, 2147483648
    %v1503 = vxor.u32 %v1498, 2147483648
    %v1504 = vxor.u32 %v1499, 2147483648
    %v1505 = vxor.u32 %v1500, 2147483648
    %v1506 = vxor.u32 %v1501, 2147483648
    %v1507 = vmul.f32 %v1502, 1.442695
    %v1508 = vpow.pop %v1507
    %v1509 = vmul.f32 %v1503, 1.442695
    %v1510 = vpow.pop %v1509
    %v1511 = vmul.f32 %v1504, 1.442695
    %v1512 = vpow.pop %v1511
    %v1513 = vmul.f32 %v1505, 1.442695
    %v1514 = vpow.pop %v1513
    %v1515 = vmul.f32 %v1506, 1.442695
    %v1516 = vpow.pop %v1515
    %v1517 = vadd.f32 %v1508, 1.0
    %v1518 = vadd.f32 %v1510, 1.0
    %v1519 = vadd.f32 %v1512, 1.0
    %v1520 = vadd.f32 %v1514, 1.0
    %v1521 = vadd.f32 %v1516, 1.0
    %v1522 = vrcp.pop %v1517
    %v1523 = vmul.f32 1.0, %v1522
    %v1524 = vrcp.pop %v1518
    %v1525 = vmul.f32 1.0, %v1524
    %v1526 = vrcp.pop %v1519
    %v1527 = vmul.f32 1.0, %v1526
    %v1528 = vrcp.pop %v1520
    %v1529 = vmul.f32 1.0, %v1528
    %v1530 = vrcp.pop %v1521
    %v1531 = vmul.f32 1.0, %v1530
    %v1532 = vld [vmem:[#allocation8] sm:$0xff]
    %v1533 = vld [vmem:[#allocation8 + $0x8] sm:$0xff]
    %v1534 = vld [vmem:[#allocation8 + $0x10] sm:$0xff]
    %v1535 = vld [vmem:[#allocation8 + $0x18] sm:$0xff]
    %v1536 = vld [vmem:[#allocation8 + $0x20] sm:$0xff]
    %v1537 = vld [vmem:[#allocation8 + $0x28] sm:$0xff]
    %v1538 = vld [vmem:[#allocation8 + $0x30] sm:$0xff]
    %v1539 = vld [vmem:[#allocation8 + $0x38] sm:$0xff]
    %v1540 = vld [vmem:[#allocation8 + $0x40] sm:$0xff]
    %v1541 = vld [vmem:[#allocation8 + $0x48] sm:$0xff]
    %v1542 = vld [vmem:[#allocation8 + $0x50] sm:$0xff]
    %v1543 = vld [vmem:[#allocation8 + $0x58] sm:$0xff]
    %v1544 = vld [vmem:[#allocation8 + $0x60] sm:$0xff]
    %v1545 = vld [vmem:[#allocation8 + $0x68] sm:$0xff]
    %v1546 = vld [vmem:[#allocation8 + $0x70] sm:$0xff]
    %v1547 = vld [vmem:[#allocation8 + $0x78] sm:$0xff]
    %v1548 = vld [vmem:[#allocation8 + $0x80] sm:$0xff]
    %v1549 = vld [vmem:[#allocation8 + $0x88] sm:$0xff]
    %v1550 = vld [vmem:[#allocation8 + $0x90] sm:$0xff]
    %v1551 = vld [vmem:[#allocation8 + $0x98] sm:$0xff]
    %v1552 = vld [vmem:[#allocation8 + $0xa0] sm:$0xff]
    %v1553 = vld [vmem:[#allocation8 + $0xa8] sm:$0xff]
    %v1554 = vld [vmem:[#allocation8 + $0xb0] sm:$0xff]
    %v1555 = vld [vmem:[#allocation8 + $0xb8] sm:$0xff]
    %v1556 = vld [vmem:[#allocation8 + $0xc0] sm:$0xff]
    %v1557 = vld [vmem:[#allocation8 + $0xc8] sm:$0xff]
    %v1558 = vld [vmem:[#allocation8 + $0xd0] sm:$0xff]
    %v1559 = vld [vmem:[#allocation8 + $0xd8] sm:$0xff]
    %v1560 = vld [vmem:[#allocation8 + $0xe0] sm:$0xff]
    %v1561 = vld [vmem:[#allocation8 + $0xe8] sm:$0xff]
    %v1562 = vld [vmem:[#allocation8 + $0xf0] sm:$0xff]
    %v1563 = vld [vmem:[#allocation8 + $0xf8] sm:$0xff]
    %v1564 = vld [vmem:[#allocation8 + $0x100] sm:$0xff]
    %v1565 = vld [vmem:[#allocation8 + $0x108] sm:$0xff]
    %v1566 = vld [vmem:[#allocation8 + $0x110] sm:$0xff]
    %v1567 = vld [vmem:[#allocation8 + $0x118] sm:$0xff]
    %v1568 = vld [vmem:[#allocation8 + $0x120] sm:$0xff]
    %v1569 = vld [vmem:[#allocation8 + $0x128] sm:$0xff]
    %v1570 = vld [vmem:[#allocation8 + $0x130] sm:$0xff]
    %v1571 = vld [vmem:[#allocation8 + $0x138] sm:$0xff]
    %v1572 = vld [vmem:[#allocation8 + $0x140] sm:$0xff]
    %v1573 = vld [vmem:[#allocation8 + $0x148] sm:$0xff]
    %v1574 = vld [vmem:[#allocation8 + $0x150] sm:$0xff]
    %v1575 = vld [vmem:[#allocation8 + $0x158] sm:$0xff]
    %v1576 = vld [vmem:[#allocation8 + $0x160] sm:$0xff]
    %v1577 = vld [vmem:[#allocation8 + $0x168] sm:$0xff]
    %v1578 = vld [vmem:[#allocation8 + $0x170] sm:$0xff]
    %v1579 = vld [vmem:[#allocation8 + $0x178] sm:$0xff]
    %v1580 = vld [vmem:[#allocation8 + $0x180] sm:$0xff]
    %v1581 = vld [vmem:[#allocation8 + $0x188] sm:$0xff]
    %v1582 = vld [vmem:[#allocation8 + $0x190] sm:$0xff]
    %v1583 = vld [vmem:[#allocation8 + $0x198] sm:$0xff]
    %v1584 = vld [vmem:[#allocation8 + $0x1a0] sm:$0xff]
    %v1585 = vld [vmem:[#allocation8 + $0x1a8] sm:$0xff]
    %v1586 = vld [vmem:[#allocation8 + $0x1b0] sm:$0xff]
    %v1587 = vld [vmem:[#allocation8 + $0x1b8] sm:$0xff]
    %v1588 = vld [vmem:[#allocation8 + $0x1c0] sm:$0xff]
    %v1589 = vld [vmem:[#allocation8 + $0x1c8] sm:$0xff]
    %v1590 = vld [vmem:[#allocation8 + $0x1d0] sm:$0xff]
    %v1591 = vld [vmem:[#allocation8 + $0x1d8] sm:$0xff]
    %v1592 = vld [vmem:[#allocation8 + $0x1e0] sm:$0xff]
    %v1593 = vld [vmem:[#allocation8 + $0x1e8] sm:$0xff]
    %v1594 = vld [vmem:[#allocation8 + $0x1f0] sm:$0xff]
    %v1595 = vld [vmem:[#allocation8 + $0x1f8] sm:$0xff]
    %v1596 = vld [vmem:[#allocation8 + $0x200] sm:$0xff]
    %v1597 = vld [vmem:[#allocation8 + $0x208] sm:$0xff]
    %v1598 = vld [vmem:[#allocation8 + $0x210] sm:$0xff]
    %v1599 = vld [vmem:[#allocation8 + $0x218] sm:$0xff]
    %v1600 = vld [vmem:[#allocation8 + $0x220] sm:$0xff]
    %v1601 = vld [vmem:[#allocation8 + $0x228] sm:$0xff]
    %v1602 = vld [vmem:[#allocation8 + $0x230] sm:$0xff]
    %v1603 = vld [vmem:[#allocation8 + $0x238] sm:$0xff]
    %v1604 = vld [vmem:[#allocation8 + $0x240] sm:$0xff]
    %v1605 = vld [vmem:[#allocation8 + $0x248] sm:$0xff]
    %v1606 = vld [vmem:[#allocation8 + $0x250] sm:$0xff]
    %v1607 = vld [vmem:[#allocation8 + $0x258] sm:$0xff]
    %v1608 = vld [vmem:[#allocation8 + $0x260] sm:$0xff]
    %v1609 = vld [vmem:[#allocation8 + $0x268] sm:$0xff]
    %v1610 = vld [vmem:[#allocation8 + $0x270] sm:$0xff]
    %v1611 = vld [vmem:[#allocation8 + $0x278] sm:$0xff]
    %v1612 = vld [vmem:[#allocation8 + $0x280] sm:$0xff]
    %v1613 = vld [vmem:[#allocation8 + $0x288] sm:$0xff]
    %v1614 = vld [vmem:[#allocation8 + $0x290] sm:$0xff]
    %v1615 = vld [vmem:[#allocation8 + $0x298] sm:$0xff]
    %v1616 = vld [vmem:[#allocation8 + $0x2a0] sm:$0xff]
    %v1617 = vld [vmem:[#allocation8 + $0x2a8] sm:$0xff]
    %v1618 = vld [vmem:[#allocation8 + $0x2b0] sm:$0xff]
    %v1619 = vld [vmem:[#allocation8 + $0x2b8] sm:$0xff]
    %v1620 = vld [vmem:[#allocation8 + $0x2c0] sm:$0xff]
    %v1621 = vld [vmem:[#allocation8 + $0x2c8] sm:$0xff]
    %v1622 = vld [vmem:[#allocation8 + $0x2d0] sm:$0xff]
    %v1623 = vld [vmem:[#allocation8 + $0x2d8] sm:$0xff]
    %v1624 = vld [vmem:[#allocation8 + $0x2e0] sm:$0xff]
    %v1625 = vld [vmem:[#allocation8 + $0x2e8] sm:$0xff]
    %v1626 = vld [vmem:[#allocation8 + $0x2f0] sm:$0xff]
    %v1627 = vld [vmem:[#allocation8 + $0x2f8] sm:$0xff]
    %v1628 = vld [vmem:[#allocation8 + $0x300] sm:$0xff]
    %v1629 = vld [vmem:[#allocation8 + $0x308] sm:$0xff]
    %v1630 = vld [vmem:[#allocation8 + $0x310] sm:$0xff]
    %v1631 = vld [vmem:[#allocation8 + $0x318] sm:$0xff]
    %v1632 = vld [vmem:[#allocation8 + $0x320] sm:$0xff]
    %v1633 = vld [vmem:[#allocation8 + $0x328] sm:$0xff]
    %v1634 = vld [vmem:[#allocation8 + $0x330] sm:$0xff]
    %v1635 = vld [vmem:[#allocation8 + $0x338] sm:$0xff]
    %v1636 = vld [vmem:[#allocation8 + $0x340] sm:$0xff]
    %v1637 = vld [vmem:[#allocation8 + $0x348] sm:$0xff]
    %v1638 = vld [vmem:[#allocation8 + $0x350] sm:$0xff]
    %v1639 = vld [vmem:[#allocation8 + $0x358] sm:$0xff]
    %v1640 = vld [vmem:[#allocation8 + $0x360] sm:$0xff]
    %v1641 = vld [vmem:[#allocation8 + $0x368] sm:$0xff]
    %v1642 = vld [vmem:[#allocation8 + $0x370] sm:$0xff]
    %v1643 = vld [vmem:[#allocation8 + $0x378] sm:$0xff]
    %v1644 = vld [vmem:[#allocation8 + $0x380] sm:$0xff]
    %v1645 = vld [vmem:[#allocation8 + $0x388] sm:$0xff]
    %v1646 = vld [vmem:[#allocation8 + $0x390] sm:$0xff]
    %v1647 = vld [vmem:[#allocation8 + $0x398] sm:$0xff]
    %v1648 = vld [vmem:[#allocation8 + $0x3a0] sm:$0xff]
    %v1649 = vld [vmem:[#allocation8 + $0x3a8] sm:$0xff]
    %v1650 = vld [vmem:[#allocation8 + $0x3b0] sm:$0xff]
    %v1651 = vld [vmem:[#allocation8 + $0x3b8] sm:$0xff]
    %v1652 = vld [vmem:[#allocation8 + $0x3c0] sm:$0xff]
    %v1653 = vld [vmem:[#allocation8 + $0x3c8] sm:$0xff]
    %v1654 = vld [vmem:[#allocation8 + $0x3d0] sm:$0xff]
    %v1655 = vld [vmem:[#allocation8 + $0x3d8] sm:$0xff]
    %v1656 = vld [vmem:[#allocation8 + $0x3e0] sm:$0xff]
    %v1657 = vld [vmem:[#allocation8 + $0x3e8] sm:$0xff]
    %v1658 = vld [vmem:[#allocation8 + $0x3f0] sm:$0xff]
    %v1659 = vld [vmem:[#allocation8 + $0x3f8] sm:$0xff]
    %v1660 = vld [vmem:[#allocation8 + $0x400] sm:$0xff]
    %v1661 = vld [vmem:[#allocation8 + $0x408] sm:$0xff]
    %v1662 = vld [vmem:[#allocation8 + $0x410] sm:$0xff]
    %v1663 = vld [vmem:[#allocation8 + $0x418] sm:$0xff]
    %v1664 = vld [vmem:[#allocation8 + $0x420] sm:$0xff]
    %v1665 = vld [vmem:[#allocation8 + $0x428] sm:$0xff]
    %v1666 = vld [vmem:[#allocation8 + $0x430] sm:$0xff]
    %v1667 = vld [vmem:[#allocation8 + $0x438] sm:$0xff]
    %v1668 = vld [vmem:[#allocation8 + $0x440] sm:$0xff]
    %v1669 = vld [vmem:[#allocation8 + $0x448] sm:$0xff]
    %v1670 = vld [vmem:[#allocation8 + $0x450] sm:$0xff]
    %v1671 = vld [vmem:[#allocation8 + $0x458] sm:$0xff]
    %v1672 = vld [vmem:[#allocation8 + $0x460] sm:$0xff]
    %v1673 = vld [vmem:[#allocation8 + $0x468] sm:$0xff]
    %v1674 = vld [vmem:[#allocation8 + $0x470] sm:$0xff]
    %v1675 = vld [vmem:[#allocation8 + $0x478] sm:$0xff]
    %v1676 = vld [vmem:[#allocation8 + $0x480] sm:$0xff]
    %v1677 = vld [vmem:[#allocation8 + $0x488] sm:$0xff]
    %v1678 = vld [vmem:[#allocation8 + $0x490] sm:$0xff]
    %v1679 = vld [vmem:[#allocation8 + $0x498] sm:$0xff]
    %v1680 = vld [vmem:[#allocation8 + $0x4a0] sm:$0xff]
    %v1681 = vld [vmem:[#allocation8 + $0x4a8] sm:$0xff]
    %v1682 = vld [vmem:[#allocation8 + $0x4b0] sm:$0xff]
    %v1683 = vld [vmem:[#allocation8 + $0x4b8] sm:$0xff]
    %v1684 = vld [vmem:[#allocation8 + $0x4c0] sm:$0xff]
    %v1685 = vld [vmem:[#allocation8 + $0x4c8] sm:$0xff]
    %v1686 = vld [vmem:[#allocation8 + $0x4d0] sm:$0xff]
    %v1687 = vld [vmem:[#allocation8 + $0x4d8] sm:$0xff]
    %v1688 = vld [vmem:[#allocation8 + $0x4e0] sm:$0xff]
    %v1689 = vld [vmem:[#allocation8 + $0x4e8] sm:$0xff]
    %v1690 = vld [vmem:[#allocation8 + $0x4f0] sm:$0xff]
    %v1691 = vld [vmem:[#allocation8 + $0x4f8] sm:$0xff]
    %v1692 = vunpack.c.l.s8.bf16 %v1532
    %v1693 = vunpack.c.l.s8.bf16 %v1533
    %v1694 = vunpack.c.l.s8.bf16 %v1534
    %v1695 = vunpack.c.l.s8.bf16 %v1535
    %v1696 = vunpack.c.l.s8.bf16 %v1536
    %v1697 = vunpack.c.l.s8.bf16 %v1537
    %v1698 = vunpack.c.l.s8.bf16 %v1538
    %v1699 = vunpack.c.l.s8.bf16 %v1539
    %v1700 = vunpack.c.h.s8.bf16 %v1532
    %v1701 = vunpack.c.h.s8.bf16 %v1533
    %v1702 = vunpack.c.h.s8.bf16 %v1534
    %v1703 = vunpack.c.h.s8.bf16 %v1535
    %v1704 = vunpack.c.h.s8.bf16 %v1536
    %v1705 = vunpack.c.h.s8.bf16 %v1537
    %v1706 = vunpack.c.h.s8.bf16 %v1538
    %v1707 = vunpack.c.h.s8.bf16 %v1539
    %v1708 = vunpack.c.l.s8.bf16 %v1540
    %v1709 = vunpack.c.l.s8.bf16 %v1541
    %v1710 = vunpack.c.l.s8.bf16 %v1542
    %v1711 = vunpack.c.l.s8.bf16 %v1543
    %v1712 = vunpack.c.l.s8.bf16 %v1544
    %v1713 = vunpack.c.l.s8.bf16 %v1545
    %v1714 = vunpack.c.l.s8.bf16 %v1546
    %v1715 = vunpack.c.l.s8.bf16 %v1547
    %v1716 = vunpack.c.h.s8.bf16 %v1540
    %v1717 = vunpack.c.h.s8.bf16 %v1541
    %v1718 = vunpack.c.h.s8.bf16 %v1542
    %v1719 = vunpack.c.h.s8.bf16 %v1543
    %v1720 = vunpack.c.h.s8.bf16 %v1544
    %v1721 = vunpack.c.h.s8.bf16 %v1545
    %v1722 = vunpack.c.h.s8.bf16 %v1546
    %v1723 = vunpack.c.h.s8.bf16 %v1547
    %v1724 = vunpack.c.l.s8.bf16 %v1548
    %v1725 = vunpack.c.l.s8.bf16 %v1549
    %v1726 = vunpack.c.l.s8.bf16 %v1550
    %v1727 = vunpack.c.l.s8.bf16 %v1551
    %v1728 = vunpack.c.l.s8.bf16 %v1552
    %v1729 = vunpack.c.l.s8.bf16 %v1553
    %v1730 = vunpack.c.l.s8.bf16 %v1554
    %v1731 = vunpack.c.l.s8.bf16 %v1555
    %v1732 = vunpack.c.h.s8.bf16 %v1548
    %v1733 = vunpack.c.h.s8.bf16 %v1549
    %v1734 = vunpack.c.h.s8.bf16 %v1550
    %v1735 = vunpack.c.h.s8.bf16 %v1551
    %v1736 = vunpack.c.h.s8.bf16 %v1552
    %v1737 = vunpack.c.h.s8.bf16 %v1553
    %v1738 = vunpack.c.h.s8.bf16 %v1554
    %v1739 = vunpack.c.h.s8.bf16 %v1555
    %v1740 = vunpack.c.l.s8.bf16 %v1556
    %v1741 = vunpack.c.l.s8.bf16 %v1557
    %v1742 = vunpack.c.l.s8.bf16 %v1558
    %v1743 = vunpack.c.l.s8.bf16 %v1559
    %v1744 = vunpack.c.l.s8.bf16 %v1560
    %v1745 = vunpack.c.l.s8.bf16 %v1561
    %v1746 = vunpack.c.l.s8.bf16 %v1562
    %v1747 = vunpack.c.l.s8.bf16 %v1563
    %v1748 = vunpack.c.h.s8.bf16 %v1556
    %v1749 = vunpack.c.h.s8.bf16 %v1557
    %v1750 = vunpack.c.h.s8.bf16 %v1558
    %v1751 = vunpack.c.h.s8.bf16 %v1559
    %v1752 = vunpack.c.h.s8.bf16 %v1560
    %v1753 = vunpack.c.h.s8.bf16 %v1561
    %v1754 = vunpack.c.h.s8.bf16 %v1562
    %v1755 = vunpack.c.h.s8.bf16 %v1563
    %v1756 = vunpack.c.l.s8.bf16 %v1564
    %v1757 = vunpack.c.l.s8.bf16 %v1565
    %v1758 = vunpack.c.l.s8.bf16 %v1566
    %v1759 = vunpack.c.l.s8.bf16 %v1567
    %v1760 = vunpack.c.l.s8.bf16 %v1568
    %v1761 = vunpack.c.l.s8.bf16 %v1569
    %v1762 = vunpack.c.l.s8.bf16 %v1570
    %v1763 = vunpack.c.l.s8.bf16 %v1571
    %v1764 = vunpack.c.h.s8.bf16 %v1564
    %v1765 = vunpack.c.h.s8.bf16 %v1565
    %v1766 = vunpack.c.h.s8.bf16 %v1566
    %v1767 = vunpack.c.h.s8.bf16 %v1567
    %v1768 = vunpack.c.h.s8.bf16 %v1568
    %v1769 = vunpack.c.h.s8.bf16 %v1569
    %v1770 = vunpack.c.h.s8.bf16 %v1570
    %v1771 = vunpack.c.h.s8.bf16 %v1571
    %v1772 = vunpack.c.l.s8.bf16 %v1572
    %v1773 = vunpack.c.l.s8.bf16 %v1573
    %v1774 = vunpack.c.l.s8.bf16 %v1574
    %v1775 = vunpack.c.l.s8.bf16 %v1575
    %v1776 = vunpack.c.l.s8.bf16 %v1576
    %v1777 = vunpack.c.l.s8.bf16 %v1577
    %v1778 = vunpack.c.l.s8.bf16 %v1578
    %v1779 = vunpack.c.l.s8.bf16 %v1579
    %v1780 = vunpack.c.h.s8.bf16 %v1572
    %v1781 = vunpack.c.h.s8.bf16 %v1573
    %v1782 = vunpack.c.h.s8.bf16 %v1574
    %v1783 = vunpack.c.h.s8.bf16 %v1575
    %v1784 = vunpack.c.h.s8.bf16 %v1576
    %v1785 = vunpack.c.h.s8.bf16 %v1577
    %v1786 = vunpack.c.h.s8.bf16 %v1578
    %v1787 = vunpack.c.h.s8.bf16 %v1579
    %v1788 = vunpack.c.l.s8.bf16 %v1580
    %v1789 = vunpack.c.l.s8.bf16 %v1581
    %v1790 = vunpack.c.l.s8.bf16 %v1582
    %v1791 = vunpack.c.l.s8.bf16 %v1583
    %v1792 = vunpack.c.l.s8.bf16 %v1584
    %v1793 = vunpack.c.l.s8.bf16 %v1585
    %v1794 = vunpack.c.l.s8.bf16 %v1586
    %v1795 = vunpack.c.l.s8.bf16 %v1587
    %v1796 = vunpack.c.h.s8.bf16 %v1580
    %v1797 = vunpack.c.h.s8.bf16 %v1581
    %v1798 = vunpack.c.h.s8.bf16 %v1582
    %v1799 = vunpack.c.h.s8.bf16 %v1583
    %v1800 = vunpack.c.h.s8.bf16 %v1584
    %v1801 = vunpack.c.h.s8.bf16 %v1585
    %v1802 = vunpack.c.h.s8.bf16 %v1586
    %v1803 = vunpack.c.h.s8.bf16 %v1587
    %v1804 = vunpack.c.l.s8.bf16 %v1588
    %v1805 = vunpack.c.l.s8.bf16 %v1589
    %v1806 = vunpack.c.l.s8.bf16 %v1590
    %v1807 = vunpack.c.l.s8.bf16 %v1591
    %v1808 = vunpack.c.l.s8.bf16 %v1592
    %v1809 = vunpack.c.l.s8.bf16 %v1593
    %v1810 = vunpack.c.l.s8.bf16 %v1594
    %v1811 = vunpack.c.l.s8.bf16 %v1595
    %v1812 = vunpack.c.h.s8.bf16 %v1588
    %v1813 = vunpack.c.h.s8.bf16 %v1589
    %v1814 = vunpack.c.h.s8.bf16 %v1590
    %v1815 = vunpack.c.h.s8.bf16 %v1591
    %v1816 = vunpack.c.h.s8.bf16 %v1592
    %v1817 = vunpack.c.h.s8.bf16 %v1593
    %v1818 = vunpack.c.h.s8.bf16 %v1594
    %v1819 = vunpack.c.h.s8.bf16 %v1595
    %v1820 = vunpack.c.l.s8.bf16 %v1596
    %v1821 = vunpack.c.l.s8.bf16 %v1597
    %v1822 = vunpack.c.l.s8.bf16 %v1598
    %v1823 = vunpack.c.l.s8.bf16 %v1599
    %v1824 = vunpack.c.l.s8.bf16 %v1600
    %v1825 = vunpack.c.l.s8.bf16 %v1601
    %v1826 = vunpack.c.l.s8.bf16 %v1602
    %v1827 = vunpack.c.l.s8.bf16 %v1603
    %v1828 = vunpack.c.h.s8.bf16 %v1596
    %v1829 = vunpack.c.h.s8.bf16 %v1597
    %v1830 = vunpack.c.h.s8.bf16 %v1598
    %v1831 = vunpack.c.h.s8.bf16 %v1599
    %v1832 = vunpack.c.h.s8.bf16 %v1600
    %v1833 = vunpack.c.h.s8.bf16 %v1601
    %v1834 = vunpack.c.h.s8.bf16 %v1602
    %v1835 = vunpack.c.h.s8.bf16 %v1603
    %v1836 = vunpack.c.l.s8.bf16 %v1604
    %v1837 = vunpack.c.l.s8.bf16 %v1605
    %v1838 = vunpack.c.l.s8.bf16 %v1606
    %v1839 = vunpack.c.l.s8.bf16 %v1607
    %v1840 = vunpack.c.l.s8.bf16 %v1608
    %v1841 = vunpack.c.l.s8.bf16 %v1609
    %v1842 = vunpack.c.l.s8.bf16 %v1610
    %v1843 = vunpack.c.l.s8.bf16 %v1611
    %v1844 = vunpack.c.h.s8.bf16 %v1604
    %v1845 = vunpack.c.h.s8.bf16 %v1605
    %v1846 = vunpack.c.h.s8.bf16 %v1606
    %v1847 = vunpack.c.h.s8.bf16 %v1607
    %v1848 = vunpack.c.h.s8.bf16 %v1608
    %v1849 = vunpack.c.h.s8.bf16 %v1609
    %v1850 = vunpack.c.h.s8.bf16 %v1610
    %v1851 = vunpack.c.h.s8.bf16 %v1611
    %v1852 = vunpack.c.l.s8.bf16 %v1612
    %v1853 = vunpack.c.l.s8.bf16 %v1613
    %v1854 = vunpack.c.l.s8.bf16 %v1614
    %v1855 = vunpack.c.l.s8.bf16 %v1615
    %v1856 = vunpack.c.l.s8.bf16 %v1616
    %v1857 = vunpack.c.l.s8.bf16 %v1617
    %v1858 = vunpack.c.l.s8.bf16 %v1618
    %v1859 = vunpack.c.l.s8.bf16 %v1619
    %v1860 = vunpack.c.h.s8.bf16 %v1612
    %v1861 = vunpack.c.h.s8.bf16 %v1613
    %v1862 = vunpack.c.h.s8.bf16 %v1614
    %v1863 = vunpack.c.h.s8.bf16 %v1615
    %v1864 = vunpack.c.h.s8.bf16 %v1616
    %v1865 = vunpack.c.h.s8.bf16 %v1617
    %v1866 = vunpack.c.h.s8.bf16 %v1618
    %v1867 = vunpack.c.h.s8.bf16 %v1619
    %v1868 = vunpack.c.l.s8.bf16 %v1620
    %v1869 = vunpack.c.l.s8.bf16 %v1621
    %v1870 = vunpack.c.l.s8.bf16 %v1622
    %v1871 = vunpack.c.l.s8.bf16 %v1623
    %v1872 = vunpack.c.l.s8.bf16 %v1624
    %v1873 = vunpack.c.l.s8.bf16 %v1625
    %v1874 = vunpack.c.l.s8.bf16 %v1626
    %v1875 = vunpack.c.l.s8.bf16 %v1627
    %v1876 = vunpack.c.h.s8.bf16 %v1620
    %v1877 = vunpack.c.h.s8.bf16 %v1621
    %v1878 = vunpack.c.h.s8.bf16 %v1622
    %v1879 = vunpack.c.h.s8.bf16 %v1623
    %v1880 = vunpack.c.h.s8.bf16 %v1624
    %v1881 = vunpack.c.h.s8.bf16 %v1625
    %v1882 = vunpack.c.h.s8.bf16 %v1626
    %v1883 = vunpack.c.h.s8.bf16 %v1627
    %v1884 = vunpack.c.l.s8.bf16 %v1628
    %v1885 = vunpack.c.l.s8.bf16 %v1629
    %v1886 = vunpack.c.l.s8.bf16 %v1630
    %v1887 = vunpack.c.l.s8.bf16 %v1631
    %v1888 = vunpack.c.l.s8.bf16 %v1632
    %v1889 = vunpack.c.l.s8.bf16 %v1633
    %v1890 = vunpack.c.l.s8.bf16 %v1634
    %v1891 = vunpack.c.l.s8.bf16 %v1635
    %v1892 = vunpack.c.h.s8.bf16 %v1628
    %v1893 = vunpack.c.h.s8.bf16 %v1629
    %v1894 = vunpack.c.h.s8.bf16 %v1630
    %v1895 = vunpack.c.h.s8.bf16 %v1631
    %v1896 = vunpack.c.h.s8.bf16 %v1632
    %v1897 = vunpack.c.h.s8.bf16 %v1633
    %v1898 = vunpack.c.h.s8.bf16 %v1634
    %v1899 = vunpack.c.h.s8.bf16 %v1635
    %v1900 = vunpack.c.l.s8.bf16 %v1636
    %v1901 = vunpack.c.l.s8.bf16 %v1637
    %v1902 = vunpack.c.l.s8.bf16 %v1638
    %v1903 = vunpack.c.l.s8.bf16 %v1639
    %v1904 = vunpack.c.l.s8.bf16 %v1640
    %v1905 = vunpack.c.l.s8.bf16 %v1641
    %v1906 = vunpack.c.l.s8.bf16 %v1642
    %v1907 = vunpack.c.l.s8.bf16 %v1643
    %v1908 = vunpack.c.h.s8.bf16 %v1636
    %v1909 = vunpack.c.h.s8.bf16 %v1637
    %v1910 = vunpack.c.h.s8.bf16 %v1638
    %v1911 = vunpack.c.h.s8.bf16 %v1639
    %v1912 = vunpack.c.h.s8.bf16 %v1640
    %v1913 = vunpack.c.h.s8.bf16 %v1641
    %v1914 = vunpack.c.h.s8.bf16 %v1642
    %v1915 = vunpack.c.h.s8.bf16 %v1643
    %v1916 = vunpack.c.l.s8.bf16 %v1644
    %v1917 = vunpack.c.l.s8.bf16 %v1645
    %v1918 = vunpack.c.l.s8.bf16 %v1646
    %v1919 = vunpack.c.l.s8.bf16 %v1647
    %v1920 = vunpack.c.l.s8.bf16 %v1648
    %v1921 = vunpack.c.l.s8.bf16 %v1649
    %v1922 = vunpack.c.l.s8.bf16 %v1650
    %v1923 = vunpack.c.l.s8.bf16 %v1651
    %v1924 = vunpack.c.h.s8.bf16 %v1644
    %v1925 = vunpack.c.h.s8.bf16 %v1645
    %v1926 = vunpack.c.h.s8.bf16 %v1646
    %v1927 = vunpack.c.h.s8.bf16 %v1647
    %v1928 = vunpack.c.h.s8.bf16 %v1648
    %v1929 = vunpack.c.h.s8.bf16 %v1649
    %v1930 = vunpack.c.h.s8.bf16 %v1650
    %v1931 = vunpack.c.h.s8.bf16 %v1651
    %v1932 = vunpack.c.l.s8.bf16 %v1652
    %v1933 = vunpack.c.l.s8.bf16 %v1653
    %v1934 = vunpack.c.l.s8.bf16 %v1654
    %v1935 = vunpack.c.l.s8.bf16 %v1655
    %v1936 = vunpack.c.l.s8.bf16 %v1656
    %v1937 = vunpack.c.l.s8.bf16 %v1657
    %v1938 = vunpack.c.l.s8.bf16 %v1658
    %v1939 = vunpack.c.l.s8.bf16 %v1659
    %v1940 = vunpack.c.h.s8.bf16 %v1652
    %v1941 = vunpack.c.h.s8.bf16 %v1653
    %v1942 = vunpack.c.h.s8.bf16 %v1654
    %v1943 = vunpack.c.h.s8.bf16 %v1655
    %v1944 = vunpack.c.h.s8.bf16 %v1656
    %v1945 = vunpack.c.h.s8.bf16 %v1657
    %v1946 = vunpack.c.h.s8.bf16 %v1658
    %v1947 = vunpack.c.h.s8.bf16 %v1659
    %v1948 = vunpack.c.l.s8.bf16 %v1660
    %v1949 = vunpack.c.l.s8.bf16 %v1661
    %v1950 = vunpack.c.l.s8.bf16 %v1662
    %v1951 = vunpack.c.l.s8.bf16 %v1663
    %v1952 = vunpack.c.l.s8.bf16 %v1664
    %v1953 = vunpack.c.l.s8.bf16 %v1665
    %v1954 = vunpack.c.l.s8.bf16 %v1666
    %v1955 = vunpack.c.l.s8.bf16 %v1667
    %v1956 = vunpack.c.h.s8.bf16 %v1660
    %v1957 = vunpack.c.h.s8.bf16 %v1661
    %v1958 = vunpack.c.h.s8.bf16 %v1662
    %v1959 = vunpack.c.h.s8.bf16 %v1663
    %v1960 = vunpack.c.h.s8.bf16 %v1664
    %v1961 = vunpack.c.h.s8.bf16 %v1665
    %v1962 = vunpack.c.h.s8.bf16 %v1666
    %v1963 = vunpack.c.h.s8.bf16 %v1667
    %v1964 = vunpack.c.l.s8.bf16 %v1668
    %v1965 = vunpack.c.l.s8.bf16 %v1669
    %v1966 = vunpack.c.l.s8.bf16 %v1670
    %v1967 = vunpack.c.l.s8.bf16 %v1671
    %v1968 = vunpack.c.l.s8.bf16 %v1672
    %v1969 = vunpack.c.l.s8.bf16 %v1673
    %v1970 = vunpack.c.l.s8.bf16 %v1674
    %v1971 = vunpack.c.l.s8.bf16 %v1675
    %v1972 = vunpack.c.h.s8.bf16 %v1668
    %v1973 = vunpack.c.h.s8.bf16 %v1669
    %v1974 = vunpack.c.h.s8.bf16 %v1670
    %v1975 = vunpack.c.h.s8.bf16 %v1671
    %v1976 = vunpack.c.h.s8.bf16 %v1672
    %v1977 = vunpack.c.h.s8.bf16 %v1673
    %v1978 = vunpack.c.h.s8.bf16 %v1674
    %v1979 = vunpack.c.h.s8.bf16 %v1675
    %v1980 = vunpack.c.l.s8.bf16 %v1676
    %v1981 = vunpack.c.l.s8.bf16 %v1677
    %v1982 = vunpack.c.l.s8.bf16 %v1678
    %v1983 = vunpack.c.l.s8.bf16 %v1679
    %v1984 = vunpack.c.l.s8.bf16 %v1680
    %v1985 = vunpack.c.l.s8.bf16 %v1681
    %v1986 = vunpack.c.l.s8.bf16 %v1682
    %v1987 = vunpack.c.l.s8.bf16 %v1683
    %v1988 = vunpack.c.h.s8.bf16 %v1676
    %v1989 = vunpack.c.h.s8.bf16 %v1677
    %v1990 = vunpack.c.h.s8.bf16 %v1678
    %v1991 = vunpack.c.h.s8.bf16 %v1679
    %v1992 = vunpack.c.h.s8.bf16 %v1680
    %v1993 = vunpack.c.h.s8.bf16 %v1681
    %v1994 = vunpack.c.h.s8.bf16 %v1682
    %v1995 = vunpack.c.h.s8.bf16 %v1683
    %v1996 = vunpack.c.l.s8.bf16 %v1684
    %v1997 = vunpack.c.l.s8.bf16 %v1685
    %v1998 = vunpack.c.l.s8.bf16 %v1686
    %v1999 = vunpack.c.l.s8.bf16 %v1687
    %v2000 = vunpack.c.l.s8.bf16 %v1688
    %v2001 = vunpack.c.l.s8.bf16 %v1689
    %v2002 = vunpack.c.l.s8.bf16 %v1690
    %v2003 = vunpack.c.l.s8.bf16 %v1691
    %v2004 = vunpack.c.h.s8.bf16 %v1684
    %v2005 = vunpack.c.h.s8.bf16 %v1685
    %v2006 = vunpack.c.h.s8.bf16 %v1686
    %v2007 = vunpack.c.h.s8.bf16 %v1687
    %v2008 = vunpack.c.h.s8.bf16 %v1688
    %v2009 = vunpack.c.h.s8.bf16 %v1689
    %v2010 = vunpack.c.h.s8.bf16 %v1690
    %v2011 = vunpack.c.h.s8.bf16 %v1691
    %v2012 = vpack.c.bf16 %v1523, %v1523
    %v2013 = vpack.c.bf16 %v1525, %v1525
    %v2014 = vpack.c.bf16 %v1527, %v1527
    %v2015 = vpack.c.bf16 %v1529, %v1529
    %v2016 = vpack.c.bf16 %v1531, %v1531
    %2017 = vmatprep.subr.bf16.mxu0 %v1749
    %2018 = vmatpush1.bf16.msra.mxu0 %v1748
    %2019 = vmatprep.subr.bf16.mxu0 %v1741
    %2020 = vmatpush1.bf16.msra.mxu0 %v1740
    %2021 = vmatprep.subr.bf16.mxu0 %v1733
    %2022 = vmatpush1.bf16.msra.mxu0 %v1732
    %2023 = vmatprep.subr.bf16.mxu0 %v1725
    %2024 = vmatpush1.bf16.msra.mxu0 %v1724
    %2025 = vmatprep.subr.bf16.mxu0 %v1717
    %2026 = vmatpush1.bf16.msra.mxu0 %v1716
    %2027 = vmatprep.subr.bf16.mxu0 %v1709
    %2028 = vmatpush1.bf16.msra.mxu0 %v1708
    %2029 = vmatprep.subr.bf16.mxu0 %v1701
    %2030 = vmatpush1.bf16.msra.mxu0 %v1700
    %2031 = vmatprep.subr.bf16.mxu0 %v1693
    %2032 = vmatpush1.bf16.msra.mxu0 %v1692
    %2033 = vmatprep.subr.bf16.mxu0 %v1813
    %2034 = vmatpush2.bf16.msra.mxu0 %v1812
    %2035 = vmatprep.subr.bf16.mxu0 %v1805
    %2036 = vmatpush2.bf16.msra.mxu0 %v1804
    %2037 = vmatprep.subr.bf16.mxu0 %v1797
    %2038 = vmatpush2.bf16.msra.mxu0 %v1796
    %2039 = vmatprep.subr.bf16.mxu0 %v1789
    %2040 = vmatpush2.bf16.msra.mxu0 %v1788
    %2041 = vmatprep.subr.bf16.mxu0 %v1781
    %2042 = vmatpush2.bf16.msra.mxu0 %v1780
    %2043 = vmatprep.subr.bf16.mxu0 %v1773
    %2044 = vmatpush2.bf16.msra.mxu0 %v1772
    %2045 = vmatprep.subr.bf16.mxu0 %v1765
    %2046 = vmatpush2.bf16.msra.mxu0 %v1764
    %2047 = vmatprep.subr.bf16.mxu0 %v1757
    %2048 = vmatpush2.bf16.msra.mxu0 %v1756
    %2049 = vmatprep.mubr.bf16.mxu0 %v2013
    %2050 = vmatmul.mubr.bf16.gmra.mxu0 %v2012
    %v2051 = vpop.f32.mrf.mxu0
    %v2052 = vadd.f32 0.0, %v2051
    %v2053 = vpop.f32.mrf.mxu0
    %v2054 = vadd.f32 0.0, %v2053
    %v2055 = vpop.f32.mrf.mxu0
    %v2056 = vpop.f32.mrf.mxu0
    %2057 = vdwg.mxu0
    %2058 = vmatprep.subr.bf16.mxu0 %v1877
    %2059 = vmatpush1.bf16.msra.mxu0 %v1876
    %2060 = vmatprep.subr.bf16.mxu0 %v1869
    %2061 = vmatpush1.bf16.msra.mxu0 %v1868
    %2062 = vmatprep.subr.bf16.mxu0 %v1861
    %2063 = vmatpush1.bf16.msra.mxu0 %v1860
    %2064 = vmatprep.subr.bf16.mxu0 %v1853
    %2065 = vmatpush1.bf16.msra.mxu0 %v1852
    %2066 = vmatprep.subr.bf16.mxu0 %v1845
    %2067 = vmatpush1.bf16.msra.mxu0 %v1844
    %2068 = vmatprep.subr.bf16.mxu0 %v1837
    %2069 = vmatpush1.bf16.msra.mxu0 %v1836
    %2070 = vmatprep.subr.bf16.mxu0 %v1829
    %2071 = vmatpush1.bf16.msra.mxu0 %v1828
    %2072 = vmatprep.subr.bf16.mxu0 %v1821
    %2073 = vmatpush1.bf16.msra.mxu0 %v1820
    %2074 = vmatprep.subr.bf16.mxu0 %v1941
    %2075 = vmatpush2.bf16.msra.mxu0 %v1940
    %2076 = vmatprep.subr.bf16.mxu0 %v1933
    %2077 = vmatpush2.bf16.msra.mxu0 %v1932
    %2078 = vmatprep.subr.bf16.mxu0 %v1925
    %2079 = vmatpush2.bf16.msra.mxu0 %v1924
    %2080 = vmatprep.subr.bf16.mxu0 %v1917
    %2081 = vmatpush2.bf16.msra.mxu0 %v1916
    %2082 = vmatprep.subr.bf16.mxu0 %v1909
    %2083 = vmatpush2.bf16.msra.mxu0 %v1908
    %2084 = vmatprep.subr.bf16.mxu0 %v1901
    %2085 = vmatpush2.bf16.msra.mxu0 %v1900
    %2086 = vmatprep.subr.bf16.mxu0 %v1893
    %2087 = vmatpush2.bf16.msra.mxu0 %v1892
    %2088 = vmatprep.subr.bf16.mxu0 %v1885
    %2089 = vmatpush2.bf16.msra.mxu0 %v1884
    %2090 = vmatprep.mubr.bf16.mxu0 %v2015
    %2091 = vmatmul.mubr.bf16.gmra.mxu0 %v2014
    %v2092 = vpop.f32.mrf.mxu0
    %v2093 = vadd.f32 %v2052, %v2092
    %v2094 = vpop.f32.mrf.mxu0
    %v2095 = vadd.f32 %v2054, %v2094
    %v2096 = vpop.f32.mrf.mxu0
    %v2097 = vpop.f32.mrf.mxu0
    %2098 = vdwg.mxu0
    %2099 = vmatprep.subr.bf16.mxu0 %v2005
    %2100 = vmatpush1.bf16.msra.mxu0 %v2004
    %2101 = vmatprep.subr.bf16.mxu0 %v1997
    %2102 = vmatpush1.bf16.msra.mxu0 %v1996
    %2103 = vmatprep.subr.bf16.mxu0 %v1989
    %2104 = vmatpush1.bf16.msra.mxu0 %v1988
    %2105 = vmatprep.subr.bf16.mxu0 %v1981
    %2106 = vmatpush1.bf16.msra.mxu0 %v1980
    %2107 = vmatprep.subr.bf16.mxu0 %v1973
    %2108 = vmatpush1.bf16.msra.mxu0 %v1972
    %2109 = vmatprep.subr.bf16.mxu0 %v1965
    %2110 = vmatpush1.bf16.msra.mxu0 %v1964
    %2111 = vmatprep.subr.bf16.mxu0 %v1957
    %2112 = vmatpush1.bf16.msra.mxu0 %v1956
    %2113 = vmatprep.subr.bf16.mxu0 %v1949
    %2114 = vmatpush1.bf16.msra.mxu0 %v1948
    %2115 = vmatprep.subr.bf16.mxu0 0
    %2116 = vmatpush2.bf16.msra.mxu0 0
    %2117 = vmatprep.subr.bf16.mxu0 0
    %2118 = vmatpush2.bf16.msra.mxu0 0
    %2119 = vmatprep.subr.bf16.mxu0 0
    %2120 = vmatpush2.bf16.msra.mxu0 0
    %2121 = vmatprep.subr.bf16.mxu0 0
    %2122 = vmatpush2.bf16.msra.mxu0 0
    %2123 = vmatprep.subr.bf16.mxu0 0
    %2124 = vmatpush2.bf16.msra.mxu0 0
    %2125 = vmatprep.subr.bf16.mxu0 0
    %2126 = vmatpush2.bf16.msra.mxu0 0
    %2127 = vmatprep.subr.bf16.mxu0 0
    %2128 = vmatpush2.bf16.msra.mxu0 0
    %2129 = vmatprep.subr.bf16.mxu0 0
    %2130 = vmatpush2.bf16.msra.mxu0 0
    %2131 = vmatprep.mubr.bf16.mxu0 0
    %2132 = vmatmul.mubr.bf16.gmra.mxu0 %v2016
    %v2133 = vpop.f32.mrf.mxu0
    %v2134 = vadd.f32 %v2093, %v2133
    %v2135 = vpop.f32.mrf.mxu0
    %v2136 = vadd.f32 %v2095, %v2135
    %v2137 = vpop.f32.mrf.mxu0
    %v2138 = vpop.f32.mrf.mxu0
    %2139 = vdwg.mxu0
    %2140 = vmatprep.subr.bf16.mxu0 %v1751
    %2141 = vmatpush1.bf16.msra.mxu0 %v1750
    %2142 = vmatprep.subr.bf16.mxu0 %v1743
    %2143 = vmatpush1.bf16.msra.mxu0 %v1742
    %2144 = vmatprep.subr.bf16.mxu0 %v1735
    %2145 = vmatpush1.bf16.msra.mxu0 %v1734
    %2146 = vmatprep.subr.bf16.mxu0 %v1727
    %2147 = vmatpush1.bf16.msra.mxu0 %v1726
    %2148 = vmatprep.subr.bf16.mxu0 %v1719
    %2149 = vmatpush1.bf16.msra.mxu0 %v1718
    %2150 = vmatprep.subr.bf16.mxu0 %v1711
    %2151 = vmatpush1.bf16.msra.mxu0 %v1710
    %2152 = vmatprep.subr.bf16.mxu0 %v1703
    %2153 = vmatpush1.bf16.msra.mxu0 %v1702
    %2154 = vmatprep.subr.bf16.mxu0 %v1695
    %2155 = vmatpush1.bf16.msra.mxu0 %v1694
    %2156 = vmatprep.subr.bf16.mxu0 %v1815
    %2157 = vmatpush2.bf16.msra.mxu0 %v1814
    %2158 = vmatprep.subr.bf16.mxu0 %v1807
    %2159 = vmatpush2.bf16.msra.mxu0 %v1806
    %2160 = vmatprep.subr.bf16.mxu0 %v1799
    %2161 = vmatpush2.bf16.msra.mxu0 %v1798
    %2162 = vmatprep.subr.bf16.mxu0 %v1791
    %2163 = vmatpush2.bf16.msra.mxu0 %v1790
    %2164 = vmatprep.subr.bf16.mxu0 %v1783
    %2165 = vmatpush2.bf16.msra.mxu0 %v1782
    %2166 = vmatprep.subr.bf16.mxu0 %v1775
    %2167 = vmatpush2.bf16.msra.mxu0 %v1774
    %2168 = vmatprep.subr.bf16.mxu0 %v1767
    %2169 = vmatpush2.bf16.msra.mxu0 %v1766
    %2170 = vmatprep.subr.bf16.mxu0 %v1759
    %2171 = vmatpush2.bf16.msra.mxu0 %v1758
    %2172 = vmatprep.mubr.bf16.mxu0 %v2013
    %2173 = vmatmul.mubr.bf16.gmra.mxu0 %v2012
    %v2174 = vpop.f32.mrf.mxu0
    %v2175 = vadd.f32 0.0, %v2174
    %v2176 = vpop.f32.mrf.mxu0
    %v2177 = vadd.f32 0.0, %v2176
    %v2178 = vpop.f32.mrf.mxu0
    %v2179 = vpop.f32.mrf.mxu0
    %2180 = vdwg.mxu0
    %2181 = vmatprep.subr.bf16.mxu0 %v1879
    %2182 = vmatpush1.bf16.msra.mxu0 %v1878
    %2183 = vmatprep.subr.bf16.mxu0 %v1871
    %2184 = vmatpush1.bf16.msra.mxu0 %v1870
    %2185 = vmatprep.subr.bf16.mxu0 %v1863
    %2186 = vmatpush1.bf16.msra.mxu0 %v1862
    %2187 = vmatprep.subr.bf16.mxu0 %v1855
    %2188 = vmatpush1.bf16.msra.mxu0 %v1854
    %2189 = vmatprep.subr.bf16.mxu0 %v1847
    %2190 = vmatpush1.bf16.msra.mxu0 %v1846
    %2191 = vmatprep.subr.bf16.mxu0 %v1839
    %2192 = vmatpush1.bf16.msra.mxu0 %v1838
    %2193 = vmatprep.subr.bf16.mxu0 %v1831
    %2194 = vmatpush1.bf16.msra.mxu0 %v1830
    %2195 = vmatprep.subr.bf16.mxu0 %v1823
    %2196 = vmatpush1.bf16.msra.mxu0 %v1822
    %2197 = vmatprep.subr.bf16.mxu0 %v1943
    %2198 = vmatpush2.bf16.msra.mxu0 %v1942
    %2199 = vmatprep.subr.bf16.mxu0 %v1935
    %2200 = vmatpush2.bf16.msra.mxu0 %v1934
    %2201 = vmatprep.subr.bf16.mxu0 %v1927
    %2202 = vmatpush2.bf16.msra.mxu0 %v1926
    %2203 = vmatprep.subr.bf16.mxu0 %v1919
    %2204 = vmatpush2.bf16.msra.mxu0 %v1918
    %2205 = vmatprep.subr.bf16.mxu0 %v1911
    %2206 = vmatpush2.bf16.msra.mxu0 %v1910
    %2207 = vmatprep.subr.bf16.mxu0 %v1903
    %2208 = vmatpush2.bf16.msra.mxu0 %v1902
    %2209 = vmatprep.subr.bf16.mxu0 %v1895
    %2210 = vmatpush2.bf16.msra.mxu0 %v1894
    %2211 = vmatprep.subr.bf16.mxu0 %v1887
    %2212 = vmatpush2.bf16.msra.mxu0 %v1886
    %2213 = vmatprep.mubr.bf16.mxu0 %v2015
    %2214 = vmatmul.mubr.bf16.gmra.mxu0 %v2014
    %v2215 = vpop.f32.mrf.mxu0
    %v2216 = vadd.f32 %v2175, %v2215
    %v2217 = vpop.f32.mrf.mxu0
    %v2218 = vadd.f32 %v2177, %v2217
    %v2219 = vpop.f32.mrf.mxu0
    %v2220 = vpop.f32.mrf.mxu0
    %2221 = vdwg.mxu0
    %2222 = vmatprep.subr.bf16.mxu0 %v2007
    %2223 = vmatpush1.bf16.msra.mxu0 %v2006
    %2224 = vmatprep.subr.bf16.mxu0 %v1999
    %2225 = vmatpush1.bf16.msra.mxu0 %v1998
    %2226 = vmatprep.subr.bf16.mxu0 %v1991
    %2227 = vmatpush1.bf16.msra.mxu0 %v1990
    %2228 = vmatprep.subr.bf16.mxu0 %v1983
    %2229 = vmatpush1.bf16.msra.mxu0 %v1982
    %2230 = vmatprep.subr.bf16.mxu0 %v1975
    %2231 = vmatpush1.bf16.msra.mxu0 %v1974
    %2232 = vmatprep.subr.bf16.mxu0 %v1967
    %2233 = vmatpush1.bf16.msra.mxu0 %v1966
    %2234 = vmatprep.subr.bf16.mxu0 %v1959
    %2235 = vmatpush1.bf16.msra.mxu0 %v1958
    %2236 = vmatprep.subr.bf16.mxu0 %v1951
    %2237 = vmatpush1.bf16.msra.mxu0 %v1950
    %2238 = vmatprep.subr.bf16.mxu0 0
    %2239 = vmatpush2.bf16.msra.mxu0 0
    %2240 = vmatprep.subr.bf16.mxu0 0
    %2241 = vmatpush2.bf16.msra.mxu0 0
    %2242 = vmatprep.subr.bf16.mxu0 0
    %2243 = vmatpush2.bf16.msra.mxu0 0
    %2244 = vmatprep.subr.bf16.mxu0 0
    %2245 = vmatpush2.bf16.msra.mxu0 0
    %2246 = vmatprep.subr.bf16.mxu0 0
    %2247 = vmatpush2.bf16.msra.mxu0 0
    %2248 = vmatprep.subr.bf16.mxu0 0
    %2249 = vmatpush2.bf16.msra.mxu0 0
    %2250 = vmatprep.subr.bf16.mxu0 0
    %2251 = vmatpush2.bf16.msra.mxu0 0
    %2252 = vmatprep.subr.bf16.mxu0 0
    %2253 = vmatpush2.bf16.msra.mxu0 0
    %2254 = vmatprep.mubr.bf16.mxu0 0
    %2255 = vmatmul.mubr.bf16.gmra.mxu0 %v2016
    %v2256 = vpop.f32.mrf.mxu0
    %v2257 = vadd.f32 %v2216, %v2256
    %v2258 = vpop.f32.mrf.mxu0
    %v2259 = vadd.f32 %v2218, %v2258
    %v2260 = vpop.f32.mrf.mxu0
    %v2261 = vpop.f32.mrf.mxu0
    %2262 = vdwg.mxu0
    %2263 = vmatprep.subr.bf16.mxu0 %v1753
    %2264 = vmatpush1.bf16.msra.mxu0 %v1752
    %2265 = vmatprep.subr.bf16.mxu0 %v1745
    %2266 = vmatpush1.bf16.msra.mxu0 %v1744
    %2267 = vmatprep.subr.bf16.mxu0 %v1737
    %2268 = vmatpush1.bf16.msra.mxu0 %v1736
    %2269 = vmatprep.subr.bf16.mxu0 %v1729
    %2270 = vmatpush1.bf16.msra.mxu0 %v1728
    %2271 = vmatprep.subr.bf16.mxu0 %v1721
    %2272 = vmatpush1.bf16.msra.mxu0 %v1720
    %2273 = vmatprep.subr.bf16.mxu0 %v1713
    %2274 = vmatpush1.bf16.msra.mxu0 %v1712
    %2275 = vmatprep.subr.bf16.mxu0 %v1705
    %2276 = vmatpush1.bf16.msra.mxu0 %v1704
    %2277 = vmatprep.subr.bf16.mxu0 %v1697
    %2278 = vmatpush1.bf16.msra.mxu0 %v1696
    %2279 = vmatprep.subr.bf16.mxu0 %v1817
    %2280 = vmatpush2.bf16.msra.mxu0 %v1816
    %2281 = vmatprep.subr.bf16.mxu0 %v1809
    %2282 = vmatpush2.bf16.msra.mxu0 %v1808
    %2283 = vmatprep.subr.bf16.mxu0 %v1801
    %2284 = vmatpush2.bf16.msra.mxu0 %v1800
    %2285 = vmatprep.subr.bf16.mxu0 %v1793
    %2286 = vmatpush2.bf16.msra.mxu0 %v1792
    %2287 = vmatprep.subr.bf16.mxu0 %v1785
    %2288 = vmatpush2.bf16.msra.mxu0 %v1784
    %2289 = vmatprep.subr.bf16.mxu0 %v1777
    %2290 = vmatpush2.bf16.msra.mxu0 %v1776
    %2291 = vmatprep.subr.bf16.mxu0 %v1769
    %2292 = vmatpush2.bf16.msra.mxu0 %v1768
    %2293 = vmatprep.subr.bf16.mxu0 %v1761
    %2294 = vmatpush2.bf16.msra.mxu0 %v1760
    %2295 = vmatprep.mubr.bf16.mxu0 %v2013
    %2296 = vmatmul.mubr.bf16.gmra.mxu0 %v2012
    %v2297 = vpop.f32.mrf.mxu0
    %v2298 = vadd.f32 0.0, %v2297
    %v2299 = vpop.f32.mrf.mxu0
    %v2300 = vadd.f32 0.0, %v2299
    %v2301 = vpop.f32.mrf.mxu0
    %v2302 = vpop.f32.mrf.mxu0
    %2303 = vdwg.mxu0
    %2304 = vmatprep.subr.bf16.mxu0 %v1881
    %2305 = vmatpush1.bf16.msra.mxu0 %v1880
    %2306 = vmatprep.subr.bf16.mxu0 %v1873
    %2307 = vmatpush1.bf16.msra.mxu0 %v1872
    %2308 = vmatprep.subr.bf16.mxu0 %v1865
    %2309 = vmatpush1.bf16.msra.mxu0 %v1864
    %2310 = vmatprep.subr.bf16.mxu0 %v1857
    %2311 = vmatpush1.bf16.msra.mxu0 %v1856
    %2312 = vmatprep.subr.bf16.mxu0 %v1849
    %2313 = vmatpush1.bf16.msra.mxu0 %v1848
    %2314 = vmatprep.subr.bf16.mxu0 %v1841
    %2315 = vmatpush1.bf16.msra.mxu0 %v1840
    %2316 = vmatprep.subr.bf16.mxu0 %v1833
    %2317 = vmatpush1.bf16.msra.mxu0 %v1832
    %2318 = vmatprep.subr.bf16.mxu0 %v1825
    %2319 = vmatpush1.bf16.msra.mxu0 %v1824
    %2320 = vmatprep.subr.bf16.mxu0 %v1945
    %2321 = vmatpush2.bf16.msra.mxu0 %v1944
    %2322 = vmatprep.subr.bf16.mxu0 %v1937
    %2323 = vmatpush2.bf16.msra.mxu0 %v1936
    %2324 = vmatprep.subr.bf16.mxu0 %v1929
    %2325 = vmatpush2.bf16.msra.mxu0 %v1928
    %2326 = vmatprep.subr.bf16.mxu0 %v1921
    %2327 = vmatpush2.bf16.msra.mxu0 %v1920
    %2328 = vmatprep.subr.bf16.mxu0 %v1913
    %2329 = vmatpush2.bf16.msra.mxu0 %v1912
    %2330 = vmatprep.subr.bf16.mxu0 %v1905
    %2331 = vmatpush2.bf16.msra.mxu0 %v1904
    %2332 = vmatprep.subr.bf16.mxu0 %v1897
    %2333 = vmatpush2.bf16.msra.mxu0 %v1896
    %2334 = vmatprep.subr.bf16.mxu0 %v1889
    %2335 = vmatpush2.bf16.msra.mxu0 %v1888
    %2336 = vmatprep.mubr.bf16.mxu0 %v2015
    %2337 = vmatmul.mubr.bf16.gmra.mxu0 %v2014
    %v2338 = vpop.f32.mrf.mxu0
    %v2339 = vadd.f32 %v2298, %v2338
    %v2340 = vpop.f32.mrf.mxu0
    %v2341 = vadd.f32 %v2300, %v2340
    %v2342 = vpop.f32.mrf.mxu0
    %v2343 = vpop.f32.mrf.mxu0
    %2344 = vdwg.mxu0
    %2345 = vmatprep.subr.bf16.mxu0 %v2009
    %2346 = vmatpush1.bf16.msra.mxu0 %v2008
    %2347 = vmatprep.subr.bf16.mxu0 %v2001
    %2348 = vmatpush1.bf16.msra.mxu0 %v2000
    %2349 = vmatprep.subr.bf16.mxu0 %v1993
    %2350 = vmatpush1.bf16.msra.mxu0 %v1992
    %2351 = vmatprep.subr.bf16.mxu0 %v1985
    %2352 = vmatpush1.bf16.msra.mxu0 %v1984
    %2353 = vmatprep.subr.bf16.mxu0 %v1977
    %2354 = vmatpush1.bf16.msra.mxu0 %v1976
    %2355 = vmatprep.subr.bf16.mxu0 %v1969
    %2356 = vmatpush1.bf16.msra.mxu0 %v1968
    %2357 = vmatprep.subr.bf16.mxu0 %v1961
    %2358 = vmatpush1.bf16.msra.mxu0 %v1960
    %2359 = vmatprep.subr.bf16.mxu0 %v1953
    %2360 = vmatpush1.bf16.msra.mxu0 %v1952
    %2361 = vmatprep.subr.bf16.mxu0 0
    %2362 = vmatpush2.bf16.msra.mxu0 0
    %2363 = vmatprep.subr.bf16.mxu0 0
    %2364 = vmatpush2.bf16.msra.mxu0 0
    %2365 = vmatprep.subr.bf16.mxu0 0
    %2366 = vmatpush2.bf16.msra.mxu0 0
    %2367 = vmatprep.subr.bf16.mxu0 0
    %2368 = vmatpush2.bf16.msra.mxu0 0
    %2369 = vmatprep.subr.bf16.mxu0 0
    %2370 = vmatpush2.bf16.msra.mxu0 0
    %2371 = vmatprep.subr.bf16.mxu0 0
    %2372 = vmatpush2.bf16.msra.mxu0 0
    %2373 = vmatprep.subr.bf16.mxu0 0
    %2374 = vmatpush2.bf16.msra.mxu0 0
    %2375 = vmatprep.subr.bf16.mxu0 0
    %2376 = vmatpush2.bf16.msra.mxu0 0
    %2377 = vmatprep.mubr.bf16.mxu0 0
    %2378 = vmatmul.mubr.bf16.gmra.mxu0 %v2016
    %v2379 = vpop.f32.mrf.mxu0
    %v2380 = vadd.f32 %v2339, %v2379
    %v2381 = vpop.f32.mrf.mxu0
    %v2382 = vadd.f32 %v2341, %v2381
    %v2383 = vpop.f32.mrf.mxu0
    %v2384 = vpop.f32.mrf.mxu0
    %2385 = vdwg.mxu0
    %2386 = vmatprep.subr.bf16.mxu0 %v1755
    %2387 = vmatpush1.bf16.msra.mxu0 %v1754
    %2388 = vmatprep.subr.bf16.mxu0 %v1747
    %2389 = vmatpush1.bf16.msra.mxu0 %v1746
    %2390 = vmatprep.subr.bf16.mxu0 %v1739
    %2391 = vmatpush1.bf16.msra.mxu0 %v1738
    %2392 = vmatprep.subr.bf16.mxu0 %v1731
    %2393 = vmatpush1.bf16.msra.mxu0 %v1730
    %2394 = vmatprep.subr.bf16.mxu0 %v1723
    %2395 = vmatpush1.bf16.msra.mxu0 %v1722
    %2396 = vmatprep.subr.bf16.mxu0 %v1715
    %2397 = vmatpush1.bf16.msra.mxu0 %v1714
    %2398 = vmatprep.subr.bf16.mxu0 %v1707
    %2399 = vmatpush1.bf16.msra.mxu0 %v1706
    %2400 = vmatprep.subr.bf16.mxu0 %v1699
    %2401 = vmatpush1.bf16.msra.mxu0 %v1698
    %2402 = vmatprep.subr.bf16.mxu0 %v1819
    %2403 = vmatpush2.bf16.msra.mxu0 %v1818
    %2404 = vmatprep.subr.bf16.mxu0 %v1811
    %2405 = vmatpush2.bf16.msra.mxu0 %v1810
    %2406 = vmatprep.subr.bf16.mxu0 %v1803
    %2407 = vmatpush2.bf16.msra.mxu0 %v1802
    %2408 = vmatprep.subr.bf16.mxu0 %v1795
    %2409 = vmatpush2.bf16.msra.mxu0 %v1794
    %2410 = vmatprep.subr.bf16.mxu0 %v1787
    %2411 = vmatpush2.bf16.msra.mxu0 %v1786
    %2412 = vmatprep.subr.bf16.mxu0 %v1779
    %2413 = vmatpush2.bf16.msra.mxu0 %v1778
    %2414 = vmatprep.subr.bf16.mxu0 %v1771
    %2415 = vmatpush2.bf16.msra.mxu0 %v1770
    %2416 = vmatprep.subr.bf16.mxu0 %v1763
    %2417 = vmatpush2.bf16.msra.mxu0 %v1762
    %2418 = vmatprep.mubr.bf16.mxu0 %v2013
    %2419 = vmatmul.mubr.bf16.gmra.mxu0 %v2012
    %v2420 = vpop.f32.mrf.mxu0
    %v2421 = vadd.f32 0.0, %v2420
    %v2422 = vpop.f32.mrf.mxu0
    %v2423 = vadd.f32 0.0, %v2422
    %v2424 = vpop.f32.mrf.mxu0
    %v2425 = vpop.f32.mrf.mxu0
    %2426 = vdwg.mxu0
    %2427 = vmatprep.subr.bf16.mxu0 %v1883
    %2428 = vmatpush1.bf16.msra.mxu0 %v1882
    %2429 = vmatprep.subr.bf16.mxu0 %v1875
    %2430 = vmatpush1.bf16.msra.mxu0 %v1874
    %2431 = vmatprep.subr.bf16.mxu0 %v1867
    %2432 = vmatpush1.bf16.msra.mxu0 %v1866
    %2433 = vmatprep.subr.bf16.mxu0 %v1859
    %2434 = vmatpush1.bf16.msra.mxu0 %v1858
    %2435 = vmatprep.subr.bf16.mxu0 %v1851
    %2436 = vmatpush1.bf16.msra.mxu0 %v1850
    %2437 = vmatprep.subr.bf16.mxu0 %v1843
    %2438 = vmatpush1.bf16.msra.mxu0 %v1842
    %2439 = vmatprep.subr.bf16.mxu0 %v1835
    %2440 = vmatpush1.bf16.msra.mxu0 %v1834
    %2441 = vmatprep.subr.bf16.mxu0 %v1827
    %2442 = vmatpush1.bf16.msra.mxu0 %v1826
    %2443 = vmatprep.subr.bf16.mxu0 %v1947
    %2444 = vmatpush2.bf16.msra.mxu0 %v1946
    %2445 = vmatprep.subr.bf16.mxu0 %v1939
    %2446 = vmatpush2.bf16.msra.mxu0 %v1938
    %2447 = vmatprep.subr.bf16.mxu0 %v1931
    %2448 = vmatpush2.bf16.msra.mxu0 %v1930
    %2449 = vmatprep.subr.bf16.mxu0 %v1923
    %2450 = vmatpush2.bf16.msra.mxu0 %v1922
    %2451 = vmatprep.subr.bf16.mxu0 %v1915
    %2452 = vmatpush2.bf16.msra.mxu0 %v1914
    %2453 = vmatprep.subr.bf16.mxu0 %v1907
    %2454 = vmatpush2.bf16.msra.mxu0 %v1906
    %2455 = vmatprep.subr.bf16.mxu0 %v1899
    %2456 = vmatpush2.bf16.msra.mxu0 %v1898
    %2457 = vmatprep.subr.bf16.mxu0 %v1891
    %2458 = vmatpush2.bf16.msra.mxu0 %v1890
    %2459 = vmatprep.mubr.bf16.mxu0 %v2015
    %2460 = vmatmul.mubr.bf16.gmra.mxu0 %v2014
    %v2461 = vpop.f32.mrf.mxu0
    %v2462 = vadd.f32 %v2421, %v2461
    %v2463 = vpop.f32.mrf.mxu0
    %v2464 = vadd.f32 %v2423, %v2463
    %v2465 = vpop.f32.mrf.mxu0
    %v2466 = vpop.f32.mrf.mxu0
    %2467 = vdwg.mxu0
    %2468 = vmatprep.subr.bf16.mxu0 %v2011
    %2469 = vmatpush1.bf16.msra.mxu0 %v2010
    %2470 = vmatprep.subr.bf16.mxu0 %v2003
    %2471 = vmatpush1.bf16.msra.mxu0 %v2002
    %2472 = vmatprep.subr.bf16.mxu0 %v1995
    %2473 = vmatpush1.bf16.msra.mxu0 %v1994
    %2474 = vmatprep.subr.bf16.mxu0 %v1987
    %2475 = vmatpush1.bf16.msra.mxu0 %v1986
    %2476 = vmatprep.subr.bf16.mxu0 %v1979
    %2477 = vmatpush1.bf16.msra.mxu0 %v1978
    %2478 = vmatprep.subr.bf16.mxu0 %v1971
    %2479 = vmatpush1.bf16.msra.mxu0 %v1970
    %2480 = vmatprep.subr.bf16.mxu0 %v1963
    %2481 = vmatpush1.bf16.msra.mxu0 %v1962
    %2482 = vmatprep.subr.bf16.mxu0 %v1955
    %2483 = vmatpush1.bf16.msra.mxu0 %v1954
    %2484 = vmatprep.subr.bf16.mxu0 0
    %2485 = vmatpush2.bf16.msra.mxu0 0
    %2486 = vmatprep.subr.bf16.mxu0 0
    %2487 = vmatpush2.bf16.msra.mxu0 0
    %2488 = vmatprep.subr.bf16.mxu0 0
    %2489 = vmatpush2.bf16.msra.mxu0 0
    %2490 = vmatprep.subr.bf16.mxu0 0
    %2491 = vmatpush2.bf16.msra.mxu0 0
    %2492 = vmatprep.subr.bf16.mxu0 0
    %2493 = vmatpush2.bf16.msra.mxu0 0
    %2494 = vmatprep.subr.bf16.mxu0 0
    %2495 = vmatpush2.bf16.msra.mxu0 0
    %2496 = vmatprep.subr.bf16.mxu0 0
    %2497 = vmatpush2.bf16.msra.mxu0 0
    %2498 = vmatprep.subr.bf16.mxu0 0
    %2499 = vmatpush2.bf16.msra.mxu0 0
    %2500 = vmatprep.mubr.bf16.mxu0 0
    %2501 = vmatmul.mubr.bf16.gmra.mxu0 %v2016
    %v2502 = vpop.f32.mrf.mxu0
    %v2503 = vadd.f32 %v2462, %v2502
    %v2504 = vpop.f32.mrf.mxu0
    %v2505 = vadd.f32 %v2464, %v2504
    %v2506 = vpop.f32.mrf.mxu0
    %v2507 = vpop.f32.mrf.mxu0
    %2508 = vdwg.mxu0
    %v2510 = vlaneseq
    %v2511 = vshrl.u32 %v2510, 7
    %v2512 = vsub.s32 0, %v2511
    %v2513 = vrot.slane %v108, %v2512
    %v2514 = vlaneseq
    %v2515 = vshrl.u32 %v2514, 7
    %v2516 = vsub.s32 1, %v2515
    %v2517 = vrot.slane %v108, %v2516
    %v2518 = vlaneseq
    %v2519 = vshrl.u32 %v2518, 7
    %v2520 = vsub.s32 2, %v2519
    %v2521 = vrot.slane %v108, %v2520
    %v2522 = vlaneseq
    %v2523 = vshrl.u32 %v2522, 7
    %v2524 = vsub.s32 3, %v2523
    %v2525 = vrot.slane %v108, %v2524
    %v2526 = vlaneseq
    %v2527 = vshrl.u32 %v2526, 7
    %v2528 = vsub.s32 4, %v2527
    %v2529 = vrot.slane %v108, %v2528
    %v2530 = vlaneseq
    %v2531 = vshrl.u32 %v2530, 7
    %v2532 = vsub.s32 5, %v2531
    %v2533 = vrot.slane %v108, %v2532
    %v2534 = vlaneseq
    %v2535 = vshrl.u32 %v2534, 7
    %v2536 = vsub.s32 6, %v2535
    %v2537 = vrot.slane %v108, %v2536
    %v2538 = vlaneseq
    %v2539 = vshrl.u32 %v2538, 7
    %v2540 = vsub.s32 7, %v2539
    %v2541 = vrot.slane %v108, %v2540
    %v2550 = vmul.f32 %v2134, %v2513
    %v2551 = vmul.f32 %v2136, %v2517
    %v2552 = vmul.f32 %v2257, %v2521
    %v2553 = vmul.f32 %v2259, %v2525
    %v2554 = vmul.f32 %v2380, %v2529
    %v2555 = vmul.f32 %v2382, %v2533
    %v2556 = vmul.f32 %v2503, %v2537
    %v2557 = vmul.f32 %v2505, %v2541
    %v2559 = vlaneseq
    %v2560 = vshrl.u32 %v2559, 7
    %v2561 = vsub.s32 0, %v2560
    %v2562 = vrot.slane %v105, %v2561
    %v2563 = vlaneseq
    %v2564 = vshrl.u32 %v2563, 7
    %v2565 = vsub.s32 1, %v2564
    %v2566 = vrot.slane %v105, %v2565
    %v2567 = vlaneseq
    %v2568 = vshrl.u32 %v2567, 7
    %v2569 = vsub.s32 2, %v2568
    %v2570 = vrot.slane %v105, %v2569
    %v2571 = vlaneseq
    %v2572 = vshrl.u32 %v2571, 7
    %v2573 = vsub.s32 3, %v2572
    %v2574 = vrot.slane %v105, %v2573
    %v2575 = vlaneseq
    %v2576 = vshrl.u32 %v2575, 7
    %v2577 = vsub.s32 4, %v2576
    %v2578 = vrot.slane %v105, %v2577
    %v2579 = vlaneseq
    %v2580 = vshrl.u32 %v2579, 7
    %v2581 = vsub.s32 5, %v2580
    %v2582 = vrot.slane %v105, %v2581
    %v2583 = vlaneseq
    %v2584 = vshrl.u32 %v2583, 7
    %v2585 = vsub.s32 6, %v2584
    %v2586 = vrot.slane %v105, %v2585
    %v2587 = vlaneseq
    %v2588 = vshrl.u32 %v2587, 7
    %v2589 = vsub.s32 7, %v2588
    %v2590 = vrot.slane %v105, %v2589
    %v2599 = vadd.f32 %v2550, %v2562
    %v2600 = vadd.f32 %v2551, %v2566
    %v2601 = vadd.f32 %v2552, %v2570
    %v2602 = vadd.f32 %v2553, %v2574
    %v2603 = vadd.f32 %v2554, %v2578
    %v2604 = vadd.f32 %v2555, %v2582
    %v2605 = vadd.f32 %v2556, %v2586
    %v2606 = vadd.f32 %v2557, %v2590
    %v2607 = vxor.u32 %v2599, 2147483648
    %v2608 = vxor.u32 %v2600, 2147483648
    %v2609 = vxor.u32 %v2601, 2147483648
    %v2610 = vxor.u32 %v2602, 2147483648
    %v2611 = vxor.u32 %v2603, 2147483648
    %v2612 = vxor.u32 %v2604, 2147483648
    %v2613 = vxor.u32 %v2605, 2147483648
    %v2614 = vxor.u32 %v2606, 2147483648
    %v2615 = vmul.f32 %v2607, 1.442695
    %v2616 = vpow.pop %v2615
    %v2617 = vmul.f32 %v2608, 1.442695
    %v2618 = vpow.pop %v2617
    %v2619 = vmul.f32 %v2609, 1.442695
    %v2620 = vpow.pop %v2619
    %v2621 = vmul.f32 %v2610, 1.442695
    %v2622 = vpow.pop %v2621
    %v2623 = vmul.f32 %v2611, 1.442695
    %v2624 = vpow.pop %v2623
    %v2625 = vmul.f32 %v2612, 1.442695
    %v2626 = vpow.pop %v2625
    %v2627 = vmul.f32 %v2613, 1.442695
    %v2628 = vpow.pop %v2627
    %v2629 = vmul.f32 %v2614, 1.442695
    %v2630 = vpow.pop %v2629
    %v2631 = vadd.f32 %v2616, 1.0
    %v2632 = vadd.f32 %v2618, 1.0
    %v2633 = vadd.f32 %v2620, 1.0
    %v2634 = vadd.f32 %v2622, 1.0
    %v2635 = vadd.f32 %v2624, 1.0
    %v2636 = vadd.f32 %v2626, 1.0
    %v2637 = vadd.f32 %v2628, 1.0
    %v2638 = vadd.f32 %v2630, 1.0
    %v2639 = vrcp.pop %v2631
    %v2640 = vmul.f32 1.0, %v2639
    %v2641 = vrcp.pop %v2632
    %v2642 = vmul.f32 1.0, %v2641
    %v2643 = vrcp.pop %v2633
    %v2644 = vmul.f32 1.0, %v2643
    %v2645 = vrcp.pop %v2634
    %v2646 = vmul.f32 1.0, %v2645
    %v2647 = vrcp.pop %v2635
    %v2648 = vmul.f32 1.0, %v2647
    %v2649 = vrcp.pop %v2636
    %v2650 = vmul.f32 1.0, %v2649
    %v2651 = vrcp.pop %v2637
    %v2652 = vmul.f32 1.0, %v2651
    %v2653 = vrcp.pop %v2638
    %v2654 = vmul.f32 1.0, %v2653
    %v2655 = vpack.c.bf16 %v2640, %v2640
    %v2656 = vpack.c.bf16 %v2642, %v2642
    %v2657 = vpack.c.bf16 %v2644, %v2644
    %v2658 = vpack.c.bf16 %v2646, %v2646
    %v2659 = vpack.c.bf16 %v2648, %v2648
    %v2660 = vpack.c.bf16 %v2650, %v2650
    %v2661 = vpack.c.bf16 %v2652, %v2652
    %v2662 = vpack.c.bf16 %v2654, %v2654
    %v2663 = vld [vmem:[#allocation10] sm:$0xf]
    %v2664 = vld [vmem:[#allocation10 + $0x4] sm:$0xf]
    %v2665 = vld [vmem:[#allocation10 + $0x8] sm:$0xf]
    %v2666 = vld [vmem:[#allocation10 + $0xc] sm:$0xf]
    %v2667 = vld [vmem:[#allocation10 + $0x10] sm:$0xf]
    %v2668 = vld [vmem:[#allocation10 + $0x14] sm:$0xf]
    %v2669 = vld [vmem:[#allocation10 + $0x18] sm:$0xf]
    %v2670 = vld [vmem:[#allocation10 + $0x1c] sm:$0xf]
    %v2671 = vld [vmem:[#allocation10 + $0x20] sm:$0xf]
    %v2672 = vld [vmem:[#allocation10 + $0x24] sm:$0xf]
    %v2673 = vld [vmem:[#allocation10 + $0x28] sm:$0xf]
    %v2674 = vld [vmem:[#allocation10 + $0x2c] sm:$0xf]
    %v2675 = vld [vmem:[#allocation10 + $0x30] sm:$0xf]
    %v2676 = vld [vmem:[#allocation10 + $0x34] sm:$0xf]
    %v2677 = vld [vmem:[#allocation10 + $0x38] sm:$0xf]
    %v2678 = vld [vmem:[#allocation10 + $0x3c] sm:$0xf]
    %v2679 = vld [vmem:[#allocation10 + $0x40] sm:$0xf]
    %v2680 = vld [vmem:[#allocation10 + $0x44] sm:$0xf]
    %v2681 = vld [vmem:[#allocation10 + $0x48] sm:$0xf]
    %v2682 = vld [vmem:[#allocation10 + $0x4c] sm:$0xf]
    %v2683 = vld [vmem:[#allocation10 + $0x50] sm:$0xf]
    %v2684 = vld [vmem:[#allocation10 + $0x54] sm:$0xf]
    %v2685 = vld [vmem:[#allocation10 + $0x58] sm:$0xf]
    %v2686 = vld [vmem:[#allocation10 + $0x5c] sm:$0xf]
    %v2687 = vld [vmem:[#allocation10 + $0x60] sm:$0xf]
    %v2688 = vld [vmem:[#allocation10 + $0x64] sm:$0xf]
    %v2689 = vld [vmem:[#allocation10 + $0x68] sm:$0xf]
    %v2690 = vld [vmem:[#allocation10 + $0x6c] sm:$0xf]
    %v2691 = vld [vmem:[#allocation10 + $0x70] sm:$0xf]
    %v2692 = vld [vmem:[#allocation10 + $0x74] sm:$0xf]
    %v2693 = vld [vmem:[#allocation10 + $0x78] sm:$0xf]
    %v2694 = vld [vmem:[#allocation10 + $0x7c] sm:$0xf]
    %v2695 = vld [vmem:[#allocation10 + $0x80] sm:$0xf]
    %v2696 = vld [vmem:[#allocation10 + $0x84] sm:$0xf]
    %v2697 = vld [vmem:[#allocation10 + $0x88] sm:$0xf]
    %v2698 = vld [vmem:[#allocation10 + $0x8c] sm:$0xf]
    %v2699 = vld [vmem:[#allocation10 + $0x90] sm:$0xf]
    %v2700 = vld [vmem:[#allocation10 + $0x94] sm:$0xf]
    %v2701 = vld [vmem:[#allocation10 + $0x98] sm:$0xf]
    %v2702 = vld [vmem:[#allocation10 + $0x9c] sm:$0xf]
    %v2703 = vld [vmem:[#allocation10 + $0xa0] sm:$0xf]
    %v2704 = vld [vmem:[#allocation10 + $0xa4] sm:$0xf]
    %v2705 = vld [vmem:[#allocation10 + $0xa8] sm:$0xf]
    %v2706 = vld [vmem:[#allocation10 + $0xac] sm:$0xf]
    %v2707 = vld [vmem:[#allocation10 + $0xb0] sm:$0xf]
    %v2708 = vld [vmem:[#allocation10 + $0xb4] sm:$0xf]
    %v2709 = vld [vmem:[#allocation10 + $0xb8] sm:$0xf]
    %v2710 = vld [vmem:[#allocation10 + $0xbc] sm:$0xf]
    %v2711 = vld [vmem:[#allocation10 + $0xc0] sm:$0xf]
    %v2712 = vld [vmem:[#allocation10 + $0xc4] sm:$0xf]
    %v2713 = vld [vmem:[#allocation10 + $0xc8] sm:$0xf]
    %v2714 = vld [vmem:[#allocation10 + $0xcc] sm:$0xf]
    %v2715 = vld [vmem:[#allocation10 + $0xd0] sm:$0xf]
    %v2716 = vld [vmem:[#allocation10 + $0xd4] sm:$0xf]
    %v2717 = vld [vmem:[#allocation10 + $0xd8] sm:$0xf]
    %v2718 = vld [vmem:[#allocation10 + $0xdc] sm:$0xf]
    %v2719 = vld [vmem:[#allocation10 + $0xe0] sm:$0xf]
    %v2720 = vld [vmem:[#allocation10 + $0xe4] sm:$0xf]
    %v2721 = vld [vmem:[#allocation10 + $0xe8] sm:$0xf]
    %v2722 = vld [vmem:[#allocation10 + $0xec] sm:$0xf]
    %v2723 = vld [vmem:[#allocation10 + $0xf0] sm:$0xf]
    %v2724 = vld [vmem:[#allocation10 + $0xf4] sm:$0xf]
    %v2725 = vld [vmem:[#allocation10 + $0xf8] sm:$0xf]
    %v2726 = vld [vmem:[#allocation10 + $0xfc] sm:$0xf]
    %v2727 = vld [vmem:[#allocation10 + $0x100] sm:$0xf]
    %v2728 = vld [vmem:[#allocation10 + $0x104] sm:$0xf]
    %v2729 = vld [vmem:[#allocation10 + $0x108] sm:$0xf]
    %v2730 = vld [vmem:[#allocation10 + $0x10c] sm:$0xf]
    %v2731 = vld [vmem:[#allocation10 + $0x110] sm:$0xf]
    %v2732 = vld [vmem:[#allocation10 + $0x114] sm:$0xf]
    %v2733 = vld [vmem:[#allocation10 + $0x118] sm:$0xf]
    %v2734 = vld [vmem:[#allocation10 + $0x11c] sm:$0xf]
    %v2735 = vld [vmem:[#allocation10 + $0x120] sm:$0xf]
    %v2736 = vld [vmem:[#allocation10 + $0x124] sm:$0xf]
    %v2737 = vld [vmem:[#allocation10 + $0x128] sm:$0xf]
    %v2738 = vld [vmem:[#allocation10 + $0x12c] sm:$0xf]
    %v2739 = vld [vmem:[#allocation10 + $0x130] sm:$0xf]
    %v2740 = vld [vmem:[#allocation10 + $0x134] sm:$0xf]
    %v2741 = vld [vmem:[#allocation10 + $0x138] sm:$0xf]
    %v2742 = vld [vmem:[#allocation10 + $0x13c] sm:$0xf]
    %v2743 = vld [vmem:[#allocation10 + $0x140] sm:$0xf]
    %v2744 = vld [vmem:[#allocation10 + $0x144] sm:$0xf]
    %v2745 = vld [vmem:[#allocation10 + $0x148] sm:$0xf]
    %v2746 = vld [vmem:[#allocation10 + $0x14c] sm:$0xf]
    %v2747 = vld [vmem:[#allocation10 + $0x150] sm:$0xf]
    %v2748 = vld [vmem:[#allocation10 + $0x154] sm:$0xf]
    %v2749 = vld [vmem:[#allocation10 + $0x158] sm:$0xf]
    %v2750 = vld [vmem:[#allocation10 + $0x15c] sm:$0xf]
    %v2751 = vld [vmem:[#allocation10 + $0x160] sm:$0xf]
    %v2752 = vld [vmem:[#allocation10 + $0x164] sm:$0xf]
    %v2753 = vld [vmem:[#allocation10 + $0x168] sm:$0xf]
    %v2754 = vld [vmem:[#allocation10 + $0x16c] sm:$0xf]
    %v2755 = vld [vmem:[#allocation10 + $0x170] sm:$0xf]
    %v2756 = vld [vmem:[#allocation10 + $0x174] sm:$0xf]
    %v2757 = vld [vmem:[#allocation10 + $0x178] sm:$0xf]
    %v2758 = vld [vmem:[#allocation10 + $0x17c] sm:$0xf]
    %v2759 = vld [vmem:[#allocation10 + $0x180] sm:$0xf]
    %v2760 = vld [vmem:[#allocation10 + $0x184] sm:$0xf]
    %v2761 = vld [vmem:[#allocation10 + $0x188] sm:$0xf]
    %v2762 = vld [vmem:[#allocation10 + $0x18c] sm:$0xf]
    %v2763 = vld [vmem:[#allocation10 + $0x190] sm:$0xf]
    %v2764 = vld [vmem:[#allocation10 + $0x194] sm:$0xf]
    %v2765 = vld [vmem:[#allocation10 + $0x198] sm:$0xf]
    %v2766 = vld [vmem:[#allocation10 + $0x19c] sm:$0xf]
    %v2767 = vld [vmem:[#allocation10 + $0x1a0] sm:$0xf]
    %v2768 = vld [vmem:[#allocation10 + $0x1a4] sm:$0xf]
    %v2769 = vld [vmem:[#allocation10 + $0x1a8] sm:$0xf]
    %v2770 = vld [vmem:[#allocation10 + $0x1ac] sm:$0xf]
    %v2771 = vld [vmem:[#allocation10 + $0x1b0] sm:$0xf]
    %v2772 = vld [vmem:[#allocation10 + $0x1b4] sm:$0xf]
    %v2773 = vld [vmem:[#allocation10 + $0x1b8] sm:$0xf]
    %v2774 = vld [vmem:[#allocation10 + $0x1bc] sm:$0xf]
    %v2775 = vld [vmem:[#allocation10 + $0x1c0] sm:$0xf]
    %v2776 = vld [vmem:[#allocation10 + $0x1c4] sm:$0xf]
    %v2777 = vld [vmem:[#allocation10 + $0x1c8] sm:$0xf]
    %v2778 = vld [vmem:[#allocation10 + $0x1cc] sm:$0xf]
    %v2779 = vld [vmem:[#allocation10 + $0x1d0] sm:$0xf]
    %v2780 = vld [vmem:[#allocation10 + $0x1d4] sm:$0xf]
    %v2781 = vld [vmem:[#allocation10 + $0x1d8] sm:$0xf]
    %v2782 = vld [vmem:[#allocation10 + $0x1dc] sm:$0xf]
    %v2783 = vld [vmem:[#allocation10 + $0x1e0] sm:$0xf]
    %v2784 = vld [vmem:[#allocation10 + $0x1e4] sm:$0xf]
    %v2785 = vld [vmem:[#allocation10 + $0x1e8] sm:$0xf]
    %v2786 = vld [vmem:[#allocation10 + $0x1ec] sm:$0xf]
    %v2787 = vld [vmem:[#allocation10 + $0x1f0] sm:$0xf]
    %v2788 = vld [vmem:[#allocation10 + $0x1f4] sm:$0xf]
    %v2789 = vld [vmem:[#allocation10 + $0x1f8] sm:$0xf]
    %v2790 = vld [vmem:[#allocation10 + $0x1fc] sm:$0xf]
    %v2792 = vlaneseq
    %v2793 = vshrl.u32 %v2792, 7
    %v2794 = vsub.s32 0, %v2793
    %v2795 = vrot.slane %v106, %v2794
    %v2925 = vunpack.c.l.b16 %v2663
    %v2926 = vunpack.c.l.b16 %v2664
    %v2927 = vunpack.c.l.b16 %v2665
    %v2928 = vunpack.c.l.b16 %v2666
    %v2929 = vunpack.c.l.b16 %v2667
    %v2930 = vunpack.c.l.b16 %v2668
    %v2931 = vunpack.c.l.b16 %v2669
    %v2932 = vunpack.c.l.b16 %v2670
    %v2933 = vunpack.c.l.b16 %v2671
    %v2934 = vunpack.c.l.b16 %v2672
    %v2935 = vunpack.c.l.b16 %v2673
    %v2936 = vunpack.c.l.b16 %v2674
    %v2937 = vunpack.c.l.b16 %v2675
    %v2938 = vunpack.c.l.b16 %v2676
    %v2939 = vunpack.c.l.b16 %v2677
    %v2940 = vunpack.c.l.b16 %v2678
    %v2941 = vunpack.c.l.b16 %v2679
    %v2942 = vunpack.c.l.b16 %v2680
    %v2943 = vunpack.c.l.b16 %v2681
    %v2944 = vunpack.c.l.b16 %v2682
    %v2945 = vunpack.c.l.b16 %v2683
    %v2946 = vunpack.c.l.b16 %v2684
    %v2947 = vunpack.c.l.b16 %v2685
    %v2948 = vunpack.c.l.b16 %v2686
    %v2949 = vunpack.c.l.b16 %v2687
    %v2950 = vunpack.c.l.b16 %v2688
    %v2951 = vunpack.c.l.b16 %v2689
    %v2952 = vunpack.c.l.b16 %v2690
    %v2953 = vunpack.c.l.b16 %v2691
    %v2954 = vunpack.c.l.b16 %v2692
    %v2955 = vunpack.c.l.b16 %v2693
    %v2956 = vunpack.c.l.b16 %v2694
    %v2957 = vunpack.c.l.b16 %v2695
    %v2958 = vunpack.c.l.b16 %v2696
    %v2959 = vunpack.c.l.b16 %v2697
    %v2960 = vunpack.c.l.b16 %v2698
    %v2961 = vunpack.c.l.b16 %v2699
    %v2962 = vunpack.c.l.b16 %v2700
    %v2963 = vunpack.c.l.b16 %v2701
    %v2964 = vunpack.c.l.b16 %v2702
    %v2965 = vunpack.c.l.b16 %v2703
    %v2966 = vunpack.c.l.b16 %v2704
    %v2967 = vunpack.c.l.b16 %v2705
    %v2968 = vunpack.c.l.b16 %v2706
    %v2969 = vunpack.c.l.b16 %v2707
    %v2970 = vunpack.c.l.b16 %v2708
    %v2971 = vunpack.c.l.b16 %v2709
    %v2972 = vunpack.c.l.b16 %v2710
    %v2973 = vunpack.c.l.b16 %v2711
    %v2974 = vunpack.c.l.b16 %v2712
    %v2975 = vunpack.c.l.b16 %v2713
    %v2976 = vunpack.c.l.b16 %v2714
    %v2977 = vunpack.c.l.b16 %v2715
    %v2978 = vunpack.c.l.b16 %v2716
    %v2979 = vunpack.c.l.b16 %v2717
    %v2980 = vunpack.c.l.b16 %v2718
    %v2981 = vunpack.c.l.b16 %v2719
    %v2982 = vunpack.c.l.b16 %v2720
    %v2983 = vunpack.c.l.b16 %v2721
    %v2984 = vunpack.c.l.b16 %v2722
    %v2985 = vunpack.c.l.b16 %v2723
    %v2986 = vunpack.c.l.b16 %v2724
    %v2987 = vunpack.c.l.b16 %v2725
    %v2988 = vunpack.c.l.b16 %v2726
    %v2989 = vunpack.c.l.b16 %v2727
    %v2990 = vunpack.c.l.b16 %v2728
    %v2991 = vunpack.c.l.b16 %v2729
    %v2992 = vunpack.c.l.b16 %v2730
    %v2993 = vunpack.c.l.b16 %v2731
    %v2994 = vunpack.c.l.b16 %v2732
    %v2995 = vunpack.c.l.b16 %v2733
    %v2996 = vunpack.c.l.b16 %v2734
    %v2997 = vunpack.c.l.b16 %v2735
    %v2998 = vunpack.c.l.b16 %v2736
    %v2999 = vunpack.c.l.b16 %v2737
    %v3000 = vunpack.c.l.b16 %v2738
    %v3001 = vunpack.c.l.b16 %v2739
    %v3002 = vunpack.c.l.b16 %v2740
    %v3003 = vunpack.c.l.b16 %v2741
    %v3004 = vunpack.c.l.b16 %v2742
    %v3005 = vunpack.c.l.b16 %v2743
    %v3006 = vunpack.c.l.b16 %v2744
    %v3007 = vunpack.c.l.b16 %v2745
    %v3008 = vunpack.c.l.b16 %v2746
    %v3009 = vunpack.c.l.b16 %v2747
    %v3010 = vunpack.c.l.b16 %v2748
    %v3011 = vunpack.c.l.b16 %v2749
    %v3012 = vunpack.c.l.b16 %v2750
    %v3013 = vunpack.c.l.b16 %v2751
    %v3014 = vunpack.c.l.b16 %v2752
    %v3015 = vunpack.c.l.b16 %v2753
    %v3016 = vunpack.c.l.b16 %v2754
    %v3017 = vunpack.c.l.b16 %v2755
    %v3018 = vunpack.c.l.b16 %v2756
    %v3019 = vunpack.c.l.b16 %v2757
    %v3020 = vunpack.c.l.b16 %v2758
    %v3021 = vunpack.c.l.b16 %v2759
    %v3022 = vunpack.c.l.b16 %v2760
    %v3023 = vunpack.c.l.b16 %v2761
    %v3024 = vunpack.c.l.b16 %v2762
    %v3025 = vunpack.c.l.b16 %v2763
    %v3026 = vunpack.c.l.b16 %v2764
    %v3027 = vunpack.c.l.b16 %v2765
    %v3028 = vunpack.c.l.b16 %v2766
    %v3029 = vunpack.c.l.b16 %v2767
    %v3030 = vunpack.c.l.b16 %v2768
    %v3031 = vunpack.c.l.b16 %v2769
    %v3032 = vunpack.c.l.b16 %v2770
    %v3033 = vunpack.c.l.b16 %v2771
    %v3034 = vunpack.c.l.b16 %v2772
    %v3035 = vunpack.c.l.b16 %v2773
    %v3036 = vunpack.c.l.b16 %v2774
    %v3037 = vunpack.c.l.b16 %v2775
    %v3038 = vunpack.c.l.b16 %v2776
    %v3039 = vunpack.c.l.b16 %v2777
    %v3040 = vunpack.c.l.b16 %v2778
    %v3041 = vunpack.c.l.b16 %v2779
    %v3042 = vunpack.c.l.b16 %v2780
    %v3043 = vunpack.c.l.b16 %v2781
    %v3044 = vunpack.c.l.b16 %v2782
    %v3045 = vunpack.c.l.b16 %v2783
    %v3046 = vunpack.c.l.b16 %v2784
    %v3047 = vunpack.c.l.b16 %v2785
    %v3048 = vunpack.c.l.b16 %v2786
    %v3049 = vunpack.c.l.b16 %v2787
    %v3050 = vunpack.c.l.b16 %v2788
    %v3051 = vunpack.c.l.b16 %v2789
    %v3052 = vunpack.c.l.b16 %v2790
    %v3053 = vpack.c.b16 %v2926, %v2925
    %v3054 = vpack.c.b16 %v2928, %v2927
    %v3055 = vpack.c.b16 %v2930, %v2929
    %v3056 = vpack.c.b16 %v2932, %v2931
    %v3057 = vpack.c.b16 %v2934, %v2933
    %v3058 = vpack.c.b16 %v2936, %v2935
    %v3059 = vpack.c.b16 %v2938, %v2937
    %v3060 = vpack.c.b16 %v2940, %v2939
    %v3061 = vpack.c.b16 %v2942, %v2941
    %v3062 = vpack.c.b16 %v2944, %v2943
    %v3063 = vpack.c.b16 %v2946, %v2945
    %v3064 = vpack.c.b16 %v2948, %v2947
    %v3065 = vpack.c.b16 %v2950, %v2949
    %v3066 = vpack.c.b16 %v2952, %v2951
    %v3067 = vpack.c.b16 %v2954, %v2953
    %v3068 = vpack.c.b16 %v2956, %v2955
    %v3069 = vpack.c.b16 %v2958, %v2957
    %v3070 = vpack.c.b16 %v2960, %v2959
    %v3071 = vpack.c.b16 %v2962, %v2961
    %v3072 = vpack.c.b16 %v2964, %v2963
    %v3073 = vpack.c.b16 %v2966, %v2965
    %v3074 = vpack.c.b16 %v2968, %v2967
    %v3075 = vpack.c.b16 %v2970, %v2969
    %v3076 = vpack.c.b16 %v2972, %v2971
    %v3077 = vpack.c.b16 %v2974, %v2973
    %v3078 = vpack.c.b16 %v2976, %v2975
    %v3079 = vpack.c.b16 %v2978, %v2977
    %v3080 = vpack.c.b16 %v2980, %v2979
    %v3081 = vpack.c.b16 %v2982, %v2981
    %v3082 = vpack.c.b16 %v2984, %v2983
    %v3083 = vpack.c.b16 %v2986, %v2985
    %v3084 = vpack.c.b16 %v2988, %v2987
    %v3085 = vpack.c.b16 %v2990, %v2989
    %v3086 = vpack.c.b16 %v2992, %v2991
    %v3087 = vpack.c.b16 %v2994, %v2993
    %v3088 = vpack.c.b16 %v2996, %v2995
    %v3089 = vpack.c.b16 %v2998, %v2997
    %v3090 = vpack.c.b16 %v3000, %v2999
    %v3091 = vpack.c.b16 %v3002, %v3001
    %v3092 = vpack.c.b16 %v3004, %v3003
    %v3093 = vpack.c.b16 %v3006, %v3005
    %v3094 = vpack.c.b16 %v3008, %v3007
    %v3095 = vpack.c.b16 %v3010, %v3009
    %v3096 = vpack.c.b16 %v3012, %v3011
    %v3097 = vpack.c.b16 %v3014, %v3013
    %v3098 = vpack.c.b16 %v3016, %v3015
    %v3099 = vpack.c.b16 %v3018, %v3017
    %v3100 = vpack.c.b16 %v3020, %v3019
    %v3101 = vpack.c.b16 %v3022, %v3021
    %v3102 = vpack.c.b16 %v3024, %v3023
    %v3103 = vpack.c.b16 %v3026, %v3025
    %v3104 = vpack.c.b16 %v3028, %v3027
    %v3105 = vpack.c.b16 %v3030, %v3029
    %v3106 = vpack.c.b16 %v3032, %v3031
    %v3107 = vpack.c.b16 %v3034, %v3033
    %v3108 = vpack.c.b16 %v3036, %v3035
    %v3109 = vpack.c.b16 %v3038, %v3037
    %v3110 = vpack.c.b16 %v3040, %v3039
    %v3111 = vpack.c.b16 %v3042, %v3041
    %v3112 = vpack.c.b16 %v3044, %v3043
    %v3113 = vpack.c.b16 %v3046, %v3045
    %v3114 = vpack.c.b16 %v3048, %v3047
    %v3115 = vpack.c.b16 %v3050, %v3049
    %v3116 = vpack.c.b16 %v3052, %v3051
    %3181 = vmatprep.subr.bf16.mxu0 0
    %3182 = vmatpush1.bf16.msra.mxu0 %v3060
    %3183 = vmatprep.subr.bf16.mxu0 0
    %3184 = vmatpush1.bf16.msra.mxu0 %v3059
    %3185 = vmatprep.subr.bf16.mxu0 0
    %3186 = vmatpush1.bf16.msra.mxu0 %v3058
    %3187 = vmatprep.subr.bf16.mxu0 0
    %3188 = vmatpush1.bf16.msra.mxu0 %v3057
    %3189 = vmatprep.subr.bf16.mxu0 0
    %3190 = vmatpush1.bf16.msra.mxu0 %v3056
    %3191 = vmatprep.subr.bf16.mxu0 0
    %3192 = vmatpush1.bf16.msra.mxu0 %v3055
    %3193 = vmatprep.subr.bf16.mxu0 0
    %3194 = vmatpush1.bf16.msra.mxu0 %v3054
    %3195 = vmatprep.subr.bf16.mxu0 0
    %3196 = vmatpush1.bf16.msra.mxu0 %v3053
    %3197 = vmatprep.subr.bf16.mxu0 0
    %3198 = vmatpush2.bf16.msra.mxu0 %v3068
    %3199 = vmatprep.subr.bf16.mxu0 0
    %3200 = vmatpush2.bf16.msra.mxu0 %v3067
    %3201 = vmatprep.subr.bf16.mxu0 0
    %3202 = vmatpush2.bf16.msra.mxu0 %v3066
    %3203 = vmatprep.subr.bf16.mxu0 0
    %3204 = vmatpush2.bf16.msra.mxu0 %v3065
    %3205 = vmatprep.subr.bf16.mxu0 0
    %3206 = vmatpush2.bf16.msra.mxu0 %v3064
    %3207 = vmatprep.subr.bf16.mxu0 0
    %3208 = vmatpush2.bf16.msra.mxu0 %v3063
    %3209 = vmatprep.subr.bf16.mxu0 0
    %3210 = vmatpush2.bf16.msra.mxu0 %v3062
    %3211 = vmatprep.subr.bf16.mxu0 0
    %3212 = vmatpush2.bf16.msra.mxu0 %v3061
    %3213 = vmatprep.mubr.bf16.mxu0 %v2656
    %3214 = vmatmul.mubr.bf16.gmra.mxu0 %v2655
    %v3215 = vpop.f32.mrf.mxu0
    %v3216 = vadd.f32 %v2795, %v3215
    %v3217 = vpop.f32.mrf.mxu0
    %v3218 = vpop.f32.mrf.mxu0
    %v3219 = vpop.f32.mrf.mxu0
    %3220 = vdwg.mxu0
    %3221 = vmatprep.subr.bf16.mxu0 0
    %3222 = vmatpush1.bf16.msra.mxu0 %v3076
    %3223 = vmatprep.subr.bf16.mxu0 0
    %3224 = vmatpush1.bf16.msra.mxu0 %v3075
    %3225 = vmatprep.subr.bf16.mxu0 0
    %3226 = vmatpush1.bf16.msra.mxu0 %v3074
    %3227 = vmatprep.subr.bf16.mxu0 0
    %3228 = vmatpush1.bf16.msra.mxu0 %v3073
    %3229 = vmatprep.subr.bf16.mxu0 0
    %3230 = vmatpush1.bf16.msra.mxu0 %v3072
    %3231 = vmatprep.subr.bf16.mxu0 0
    %3232 = vmatpush1.bf16.msra.mxu0 %v3071
    %3233 = vmatprep.subr.bf16.mxu0 0
    %3234 = vmatpush1.bf16.msra.mxu0 %v3070
    %3235 = vmatprep.subr.bf16.mxu0 0
    %3236 = vmatpush1.bf16.msra.mxu0 %v3069
    %3237 = vmatprep.subr.bf16.mxu0 0
    %3238 = vmatpush2.bf16.msra.mxu0 %v3084
    %3239 = vmatprep.subr.bf16.mxu0 0
    %3240 = vmatpush2.bf16.msra.mxu0 %v3083
    %3241 = vmatprep.subr.bf16.mxu0 0
    %3242 = vmatpush2.bf16.msra.mxu0 %v3082
    %3243 = vmatprep.subr.bf16.mxu0 0
    %3244 = vmatpush2.bf16.msra.mxu0 %v3081
    %3245 = vmatprep.subr.bf16.mxu0 0
    %3246 = vmatpush2.bf16.msra.mxu0 %v3080
    %3247 = vmatprep.subr.bf16.mxu0 0
    %3248 = vmatpush2.bf16.msra.mxu0 %v3079
    %3249 = vmatprep.subr.bf16.mxu0 0
    %3250 = vmatpush2.bf16.msra.mxu0 %v3078
    %3251 = vmatprep.subr.bf16.mxu0 0
    %3252 = vmatpush2.bf16.msra.mxu0 %v3077
    %3253 = vmatprep.mubr.bf16.mxu0 %v2658
    %3254 = vmatmul.mubr.bf16.gmra.mxu0 %v2657
    %v3255 = vpop.f32.mrf.mxu0
    %v3256 = vadd.f32 %v3216, %v3255
    %v3257 = vpop.f32.mrf.mxu0
    %v3258 = vpop.f32.mrf.mxu0
    %v3259 = vpop.f32.mrf.mxu0
    %3260 = vdwg.mxu0
    %3261 = vmatprep.subr.bf16.mxu0 0
    %3262 = vmatpush1.bf16.msra.mxu0 %v3092
    %3263 = vmatprep.subr.bf16.mxu0 0
    %3264 = vmatpush1.bf16.msra.mxu0 %v3091
    %3265 = vmatprep.subr.bf16.mxu0 0
    %3266 = vmatpush1.bf16.msra.mxu0 %v3090
    %3267 = vmatprep.subr.bf16.mxu0 0
    %3268 = vmatpush1.bf16.msra.mxu0 %v3089
    %3269 = vmatprep.subr.bf16.mxu0 0
    %3270 = vmatpush1.bf16.msra.mxu0 %v3088
    %3271 = vmatprep.subr.bf16.mxu0 0
    %3272 = vmatpush1.bf16.msra.mxu0 %v3087
    %3273 = vmatprep.subr.bf16.mxu0 0
    %3274 = vmatpush1.bf16.msra.mxu0 %v3086
    %3275 = vmatprep.subr.bf16.mxu0 0
    %3276 = vmatpush1.bf16.msra.mxu0 %v3085
    %3277 = vmatprep.subr.bf16.mxu0 0
    %3278 = vmatpush2.bf16.msra.mxu0 %v3100
    %3279 = vmatprep.subr.bf16.mxu0 0
    %3280 = vmatpush2.bf16.msra.mxu0 %v3099
    %3281 = vmatprep.subr.bf16.mxu0 0
    %3282 = vmatpush2.bf16.msra.mxu0 %v3098
    %3283 = vmatprep.subr.bf16.mxu0 0
    %3284 = vmatpush2.bf16.msra.mxu0 %v3097
    %3285 = vmatprep.subr.bf16.mxu0 0
    %3286 = vmatpush2.bf16.msra.mxu0 %v3096
    %3287 = vmatprep.subr.bf16.mxu0 0
    %3288 = vmatpush2.bf16.msra.mxu0 %v3095
    %3289 = vmatprep.subr.bf16.mxu0 0
    %3290 = vmatpush2.bf16.msra.mxu0 %v3094
    %3291 = vmatprep.subr.bf16.mxu0 0
    %3292 = vmatpush2.bf16.msra.mxu0 %v3093
    %3293 = vmatprep.mubr.bf16.mxu0 %v2660
    %3294 = vmatmul.mubr.bf16.gmra.mxu0 %v2659
    %v3295 = vpop.f32.mrf.mxu0
    %v3296 = vadd.f32 %v3256, %v3295
    %v3297 = vpop.f32.mrf.mxu0
    %v3298 = vpop.f32.mrf.mxu0
    %v3299 = vpop.f32.mrf.mxu0
    %3300 = vdwg.mxu0
    %3301 = vmatprep.subr.bf16.mxu0 0
    %3302 = vmatpush1.bf16.msra.mxu0 %v3108
    %3303 = vmatprep.subr.bf16.mxu0 0
    %3304 = vmatpush1.bf16.msra.mxu0 %v3107
    %3305 = vmatprep.subr.bf16.mxu0 0
    %3306 = vmatpush1.bf16.msra.mxu0 %v3106
    %3307 = vmatprep.subr.bf16.mxu0 0
    %3308 = vmatpush1.bf16.msra.mxu0 %v3105
    %3309 = vmatprep.subr.bf16.mxu0 0
    %3310 = vmatpush1.bf16.msra.mxu0 %v3104
    %3311 = vmatprep.subr.bf16.mxu0 0
    %3312 = vmatpush1.bf16.msra.mxu0 %v3103
    %3313 = vmatprep.subr.bf16.mxu0 0
    %3314 = vmatpush1.bf16.msra.mxu0 %v3102
    %3315 = vmatprep.subr.bf16.mxu0 0
    %3316 = vmatpush1.bf16.msra.mxu0 %v3101
    %3317 = vmatprep.subr.bf16.mxu0 0
    %3318 = vmatpush2.bf16.msra.mxu0 %v3116
    %3319 = vmatprep.subr.bf16.mxu0 0
    %3320 = vmatpush2.bf16.msra.mxu0 %v3115
    %3321 = vmatprep.subr.bf16.mxu0 0
    %3322 = vmatpush2.bf16.msra.mxu0 %v3114
    %3323 = vmatprep.subr.bf16.mxu0 0
    %3324 = vmatpush2.bf16.msra.mxu0 %v3113
    %3325 = vmatprep.subr.bf16.mxu0 0
    %3326 = vmatpush2.bf16.msra.mxu0 %v3112
    %3327 = vmatprep.subr.bf16.mxu0 0
    %3328 = vmatpush2.bf16.msra.mxu0 %v3111
    %3329 = vmatprep.subr.bf16.mxu0 0
    %3330 = vmatpush2.bf16.msra.mxu0 %v3110
    %3331 = vmatprep.subr.bf16.mxu0 0
    %3332 = vmatpush2.bf16.msra.mxu0 %v3109
    %3333 = vmatprep.mubr.bf16.mxu0 %v2662
    %3334 = vmatmul.mubr.bf16.gmra.mxu0 %v2661
    %v3335 = vpop.f32.mrf.mxu0
    %v3336 = vadd.f32 %v3296, %v3335
    %v3337 = vpop.f32.mrf.mxu0
    %v3338 = vpop.f32.mrf.mxu0
    %v3339 = vpop.f32.mrf.mxu0
    %3340 = vdwg.mxu0
    %3341 = vst [vmem:[#allocation13] sm:$0xff] %v3336
    // Predicated region
    $region50: #{tpu_custom_call.1} parent=1 // pred_check
      _
    $region51: #{tpu_custom_call.1} parent=1 // pred_check_branch
      %3343 = sbr.rel (0) target = $region53
    $region52: #{tpu_custom_call.1} parent=1 // pred_region
      %s3345 = ssub.s32 128, 128
      %3346 = vsyncadd [#allocation4], %s3345
      %s3348 = sshll.u32 [#allocation13], 4
      %s3349 = int_to_ptr.vmem [resolvable:$true] %s3348
      %3351 = dma.vmem_to_hbm [thread:$0]  %s3349, 128, %s6, [#allocation4]
    $region53: #{tpu_custom_call.1} parent=1 // pred_fallthru
      _
    // Predicated region
    $region54: #{tpu_custom_call.1} parent=1 // pred_check
      _
    $region55: #{tpu_custom_call.1} parent=1 // pred_check_branch
      %3353 = sbr.rel (0) target = $region57
    $region56: #{tpu_custom_call.1} parent=1 // pred_region
      %3354 = dma.done [#allocation4], 128
    $region57: #{tpu_custom_call.1} parent=1 // pred_fallthru
      _
    %3355 = vsyncpa [#allocation3], 1
    %3356 = vsyncpa [#allocation6], 1
    %3357 = vsyncpa [#allocation9], 1
    %3358 = vsyncpa [#allocation12], 1
    %3359 = vsyncpa [#allocation4], 1

</llo_original>
